<compile_context>
chip_gen: v5e
topology: v5e:2x2
jax: 0.10.0
libtpu: 0.0.40
codegen_flags: <defaults>
</compile_context>

<pallas_src>
import functools
import math

import jax
import jax.numpy as jnp
from jax import lax
from jax.experimental import pallas as pl
from jax.experimental.pallas import tpu as pltpu

# ----------------------------- model config (small, synthetic) ---------------
B = 2            # batch
IN_CHANS = 3     # image channels
IMG = 16         # image height / width
PATCH = 4        # patch size  -> 16 patches
EMBED_DIM = 32   # transformer.embed_dim
NUM_HEADS = 4
MLP_RATIO = 4
NB_CLASSES = 10
N_SAB = 2        # blocks[:local_up_to_layer]  (self-attention blocks)
N_TAB = 1        # blocks[local_up_to_layer:]  (task-attention / ClassAttention blocks)
N_TASKS = 1      # len(task_tokens); nb_classes_per_task = [NB_CLASSES]

HEAD_DIV = False          # DyTox default: head_div=False
HEAD_DIV_MODE = ["tr", "ft"]
IN_FINETUNING = False

HEAD_DIM = EMBED_DIM // NUM_HEADS
N_PATCHES = (IMG // PATCH) ** 2
CPP = IN_CHANS * PATCH * PATCH
HIDDEN = MLP_RATIO * EMBED_DIM

SAB_KEYS = ("n1_g", "n1_b", "qkv_w", "qkv_b", "proj_w", "proj_b",
            "n2_g", "n2_b", "fc1_w", "fc1_b", "fc2_w", "fc2_b")
TAB_KEYS = ("n1_g", "n1_b", "q_w", "q_b", "k_w", "k_b", "v_w", "v_b",
            "proj_w", "proj_b", "n2_g", "n2_b", "fc1_w", "fc1_b", "fc2_w", "fc2_b")


def eval_training_finetuning(mode, in_ft):
    if "tr" in mode and "ft" in mode:
        return True
    if "tr" in mode and (not in_ft):
        return True
    if "ft" in mode and in_ft:
        return True
    return False


# ----------------------------- in-kernel math helpers -------------------------
def _gelu(x):
    # TODO(synk): PyTorch nn.GELU defaults to exact erf; tanh approximation used here.
    c = math.sqrt(2.0 / math.pi)
    return 0.5 * x * (1.0 + jnp.tanh(c * (x + 0.044715 * x * x * x)))


def _ln(x, g_ref, b_ref, eps=1e-5):
    """Row-wise LayerNorm in f32; gain/bias refs are (1, D)."""
    mu = jnp.mean(x, axis=-1, keepdims=True)
    var = jnp.mean((x - mu) ** 2, axis=-1, keepdims=True)
    return (x - mu) * lax.rsqrt(var + eps) * g_ref[...] + b_ref[...]


def _mm(a, w_ref, b_ref=None):
    """a @ W (+ b).  bf16 MXU inputs, f32 accumulation."""
    y = lax.dot_general(a.astype(jnp.bfloat16), w_ref[...].astype(jnp.bfloat16),
                        (((1,), (0,)), ((), ())),
                        preferred_element_type=jnp.float32)
    if b_ref is not None:
        y = y + b_ref[...]
    return y


def _mm_v(a, b):
    """value @ value, contracting (last of a, first of b)."""
    return lax.dot_general(a.astype(jnp.bfloat16), b.astype(jnp.bfloat16),
                           (((1,), (0,)), ((), ())),
                           preferred_element_type=jnp.float32)


def _qkT(q, k):
    """q @ k^T without materializing the transpose (contract over head_dim)."""
    return lax.dot_general(q.astype(jnp.bfloat16), k.astype(jnp.bfloat16),
                           (((1,), (1,)), ((), ())),
                           preferred_element_type=jnp.float32)


def _softmax(s):
    s = s - jnp.max(s, axis=-1, keepdims=True)
    p = jnp.exp(s)
    return p * pl.reciprocal(jnp.sum(p, axis=-1, keepdims=True), approx=True)


def _attn_proj(q, k, v, proj_w_ref, proj_b_ref, scale):
    """Multi-head softmax attention + output projection.

    Heads are static lane slices; the head-concat is folded into the projection:
      concat_h(o_h) @ W == sum_h o_h @ W[h*dh:(h+1)*dh, :]
    """
    out = None
    for h in range(NUM_HEADS):
        lo = h * HEAD_DIM
        qh, kh, vh = q[:, lo:lo + HEAD_DIM], k[:, lo:lo + HEAD_DIM], v[:, lo:lo + HEAD_DIM]
        p = _softmax(_qkT(qh, kh) * scale)
        o_h = _mm_v(p, vh)                                    # (rows, dh)
        c = _mm_v(o_h, proj_w_ref[pl.ds(lo, HEAD_DIM), :])    # (rows, D)
        out = c if out is None else out + c
    return out + proj_b_ref[...]


def _class_attn_proj(q, k_c, k_x, v_c, v_x, proj_w_ref, proj_b_ref, scale):
    """ClassAttention over the sequence [cls; x] without materializing the concat."""
    out = None
    for h in range(NUM_HEADS):
        lo = h * HEAD_DIM
        qh = q[:, lo:lo + HEAD_DIM]                           # (1, dh)
        s_c = _qkT(qh, k_c[:, lo:lo + HEAD_DIM]) * scale      # (1, 1)
        s_x = _qkT(qh, k_x[:, lo:lo + HEAD_DIM]) * scale      # (1, N)
        m = jnp.maximum(jnp.max(s_x, axis=-1, keepdims=True), s_c)
        p_c = jnp.exp(s_c - m)
        p_x = jnp.exp(s_x - m)
        inv = pl.reciprocal(p_c + jnp.sum(p_x, axis=-1, keepdims=True), approx=True)
        o_h = (p_c * v_c[:, lo:lo + HEAD_DIM] + _mm_v(p_x, v_x[:, lo:lo + HEAD_DIM])) * inv
        c = _mm_v(o_h, proj_w_ref[pl.ds(lo, HEAD_DIM), :])    # (1, D)
        out = c if out is None else out + c
    return out + proj_b_ref[...]


def _sab(x, prm):
    """Pre-norm self-attention transformer block on one sample's tokens (N, D)."""
    (n1_g, n1_b, qkv_w, qkv_b, proj_w, proj_b,
     n2_g, n2_b, fc1_w, fc1_b, fc2_w, fc2_b) = prm
    D = EMBED_DIM
    y = _ln(x, n1_g, n1_b)
    qkv = _mm(y, qkv_w, qkv_b)                                # (N, 3D)
    q, k, v = qkv[:, :D], qkv[:, D:2 * D], qkv[:, 2 * D:3 * D]
    x = x + _attn_proj(q, k, v, proj_w, proj_b, HEAD_DIM ** -0.5)
    y2 = _ln(x, n2_g, n2_b)
    return x + _mm(_gelu(_mm(y2, fc1_w, fc1_b)), fc2_w, fc2_b)


def _tab(cls, x, prm):
    """TAB = Block with ClassAttention (CaiT-style): only the task token is updated."""
    (n1_g, n1_b, q_w, q_b, k_w, k_b, v_w, v_b,
     proj_w, proj_b, n2_g, n2_b, fc1_w, fc1_b, fc2_w, fc2_b) = prm
    y_c = _ln(cls, n1_g, n1_b)                                # (1, D)
    y_x = _ln(x, n1_g, n1_b)                                  # (N, D)
    q = _mm(y_c, q_w, q_b)                                    # query from task token only
    k_c, k_x = _mm(y_c, k_w, k_b), _mm(y_x, k_w, k_b)
    v_c, v_x = _mm(y_c, v_w, v_b), _mm(y_x, v_w, v_b)
    cls = cls + _class_attn_proj(q, k_c, k_x, v_c, v_x, proj_w, proj_b, HEAD_DIM ** -0.5)
    y2 = _ln(cls, n2_g, n2_b)
    return cls + _mm(_gelu(_mm(y2, fc1_w, fc1_b)), fc2_w, fc2_b)


# ----------------------------- fused whole-forward kernel ---------------------
def _dytox_kernel(*refs):
    n_in = 4 + N_TASKS + 12 * N_SAB + 16 * N_TAB + 4
    logits_ref, tok_ref = refs[n_in], refs[n_in + 1]

    patches_ref, patch_w, patch_b, pos = refs[:4]
    idx = 4
    task_tok_refs = refs[idx:idx + N_TASKS]
    idx += N_TASKS
    sab_prms = [refs[idx + 12 * i: idx + 12 * (i + 1)] for i in range(N_SAB)]
    idx += 12 * N_SAB
    tab_prms = [refs[idx + 16 * i: idx + 16 * (i + 1)] for i in range(N_TAB)]
    idx += 16 * N_TAB
    hn_g, hn_b, head_w, head_b = refs[idx:idx + 4]

    # --- forward_features (one image per grid step) ---
    # patch_embed matmul (im2col done in the wrapper) + pos_embed; pos_drop = identity.
    x = _mm(patches_ref[0], patch_w, patch_b) + pos[...]      # (N, D)
    for prm in sab_prms:
        x = _sab(x, prm)

    tokens = []
    for t in range(N_TASKS):
        tt = task_tok_refs[t][...]                            # (1, D)
        for prm in tab_prms:
            tt = _tab(tt, x, prm)
        tokens.append(tt)

    # --- forward_classifier (individual_classifier == '', head_div == False) ---
    cat = tokens[0] if N_TASKS == 1 else jnp.concatenate(tokens, axis=-1)
    logits = _mm(_ln(cat, hn_g, hn_b), head_w, head_b)        # (1, total_classes)

    logits_ref[0] = logits.astype(logits_ref.dtype)
    if N_TASKS == 1:
        tok_ref[0] = tokens[0].astype(tok_ref.dtype)
    else:
        for t in range(N_TASKS):
            tok_ref[0, pl.ds(t, 1), :] = tokens[t].astype(tok_ref.dtype)


# ----------------------------- DyTox forward (wrapper) ------------------------
def dytox_forward(x, params):
    Bx = x.shape[0]
    Hp = Wp = IMG // PATCH
    N = N_PATCHES

    # Conv2d(C, D, kernel=p, stride=p) == im2col (plain-JAX glue) + in-kernel matmul.
    xp = x.reshape(Bx, IN_CHANS, Hp, PATCH, Wp, PATCH)
    xp = xp.transpose(0, 2, 4, 1, 3, 5).reshape(Bx, N, CPP)

    flat = [xp, params["patch_w"], params["patch_b"], params["pos_embed"]]
    flat += list(params["task_tokens"])
    for blk in params["sabs"]:
        flat += [blk[k] for k in SAB_KEYS]
    for blk in params["tabs"]:
        flat += [blk[k] for k in TAB_KEYS]
    flat += [params["head_norm_g"], params["head_norm_b"],
             params["head_w"], params["head_b"]]

    in_specs = [pl.BlockSpec((1, N, CPP), lambda b: (b, 0, 0))]
    for a in flat[1:]:
        # full-array VMEM-resident block, same block for every grid step
        in_specs.append(pl.BlockSpec(a.shape, lambda b, _nd=a.ndim: (0,) * _nd))

    total_classes = params["head_w"].shape[1]
    out_shapes = (
        jax.ShapeDtypeStruct((Bx, 1, total_classes), jnp.float32),
        jax.ShapeDtypeStruct((Bx, N_TASKS, EMBED_DIM), jnp.float32),
    )
    out_specs = (
        pl.BlockSpec((1, 1, total_classes), lambda b: (b, 0, 0)),
        pl.BlockSpec((1, N_TASKS, EMBED_DIM), lambda b: (b, 0, 0)),
    )

    logits3, toks3 = pl.pallas_call(
        _dytox_kernel,
        out_shape=out_shapes,
        grid=(Bx,),
        in_specs=in_specs,
        out_specs=out_specs,
        compiler_params=pltpu.CompilerParams(
            dimension_semantics=("parallel",)),      # v7x: one sample per TensorCore
    )(*flat)

    logits = logits3.reshape(Bx, total_classes)
    tokens = [toks3[:, t, :] for t in range(N_TASKS)]

    logits_div = None
    if HEAD_DIV and eval_training_finetuning(HEAD_DIV_MODE, IN_FINETUNING):
        # TODO(synk): head_div is a separate ContinualClassifier; not instantiated
        # in this config (head_div=False is the DyTox default used here).
        pass

    return {"logits": logits, "div": logits_div, "tokens": tokens}


# ----------------------------- deterministic synthetic parameters -------------
def init_params(key):
    D = EMBED_DIM
    hid = HIDDEN
    it = iter(jax.random.split(key, 128))
    nrm = lambda shape: 0.02 * jax.random.normal(next(it), shape, dtype=jnp.float32)
    ones = lambda *s: jnp.ones(s, jnp.float32)
    zeros = lambda *s: jnp.zeros(s, jnp.float32)

    def sab():
        return dict(
            n1_g=ones(1, D), n1_b=zeros(1, D),
            qkv_w=nrm((D, 3 * D)), qkv_b=zeros(1, 3 * D),
            proj_w=nrm((D, D)), proj_b=zeros(1, D),
            n2_g=ones(1, D), n2_b=zeros(1, D),
            fc1_w=nrm((D, hid)), fc1_b=zeros(1, hid),
            fc2_w=nrm((hid, D)), fc2_b=zeros(1, D),
        )

    def tab():
        return dict(
            n1_g=ones(1, D), n1_b=zeros(1, D),
            q_w=nrm((D, D)), q_b=zeros(1, D),
            k_w=nrm((D, D)), k_b=zeros(1, D),
            v_w=nrm((D, D)), v_b=zeros(1, D),
            proj_w=nrm((D, D)), proj_b=zeros(1, D),
            n2_g=ones(1, D), n2_b=zeros(1, D),
            fc1_w=nrm((D, hid)), fc1_b=zeros(1, hid),
            fc2_w=nrm((hid, D)), fc2_b=zeros(1, D),
        )

    return dict(
        patch_w=nrm((CPP, D)),
        patch_b=zeros(1, D),
        pos_embed=nrm((N_PATCHES, D)),
        task_tokens=[nrm((1, D)) for _ in range(N_TASKS)],
        sabs=[sab() for _ in range(N_SAB)],
        tabs=[tab() for _ in range(N_TAB)],
        head_norm_g=ones(1, D * N_TASKS),
        head_norm_b=zeros(1, D * N_TASKS),
        head_w=nrm((D * N_TASKS, NB_CLASSES)),
        head_b=zeros(1, NB_CLASSES),
    )


# ----------------------------- main -------------------------------------------
if __name__ == "__main__":
    key = jax.random.PRNGKey(0)
    kx, kp = jax.random.split(key)
    x = jax.random.normal(kx, (B, IN_CHANS, IMG, IMG), dtype=jnp.float32)
    params = init_params(kp)

    fwd = jax.jit(dytox_forward)
    out = fwd(x, params)
    jax.block_until_ready(out["logits"])

    assert out["logits"].shape == (B, NB_CLASSES)
    assert out["div"] is None
    assert out["tokens"][0].shape == (B, EMBED_DIM)
    print("KERNEL_OK")
</pallas_src>

<mosaic_0001>
module attributes {stable_mosaic.version = 11 : i64} {
  func.func @_dytox_kernel(%arg0: i32, %arg1: memref<1x16x48xf32, #tpu.memory_space<vmem>>, %arg2: memref<48x32xf32, #tpu.memory_space<vmem>>, %arg3: memref<1x32xf32, #tpu.memory_space<vmem>>, %arg4: memref<16x32xf32, #tpu.memory_space<vmem>>, %arg5: memref<1x32xf32, #tpu.memory_space<vmem>>, %arg6: memref<1x32xf32, #tpu.memory_space<vmem>>, %arg7: memref<1x32xf32, #tpu.memory_space<vmem>>, %arg8: memref<32x96xf32, #tpu.memory_space<vmem>>, %arg9: memref<1x96xf32, #tpu.memory_space<vmem>>, %arg10: memref<32x32xf32, #tpu.memory_space<vmem>>, %arg11: memref<1x32xf32, #tpu.memory_space<vmem>>, %arg12: memref<1x32xf32, #tpu.memory_space<vmem>>, %arg13: memref<1x32xf32, #tpu.memory_space<vmem>>, %arg14: memref<32x128xf32, #tpu.memory_space<vmem>>, %arg15: memref<1x128xf32, #tpu.memory_space<vmem>>, %arg16: memref<128x32xf32, #tpu.memory_space<vmem>>, %arg17: memref<1x32xf32, #tpu.memory_space<vmem>>, %arg18: memref<1x32xf32, #tpu.memory_space<vmem>>, %arg19: memref<1x32xf32, #tpu.memory_space<vmem>>, %arg20: memref<32x96xf32, #tpu.memory_space<vmem>>, %arg21: memref<1x96xf32, #tpu.memory_space<vmem>>, %arg22: memref<32x32xf32, #tpu.memory_space<vmem>>, %arg23: memref<1x32xf32, #tpu.memory_space<vmem>>, %arg24: memref<1x32xf32, #tpu.memory_space<vmem>>, %arg25: memref<1x32xf32, #tpu.memory_space<vmem>>, %arg26: memref<32x128xf32, #tpu.memory_space<vmem>>, %arg27: memref<1x128xf32, #tpu.memory_space<vmem>>, %arg28: memref<128x32xf32, #tpu.memory_space<vmem>>, %arg29: memref<1x32xf32, #tpu.memory_space<vmem>>, %arg30: memref<1x32xf32, #tpu.memory_space<vmem>>, %arg31: memref<1x32xf32, #tpu.memory_space<vmem>>, %arg32: memref<32x32xf32, #tpu.memory_space<vmem>>, %arg33: memref<1x32xf32, #tpu.memory_space<vmem>>, %arg34: memref<32x32xf32, #tpu.memory_space<vmem>>, %arg35: memref<1x32xf32, #tpu.memory_space<vmem>>, %arg36: memref<32x32xf32, #tpu.memory_space<vmem>>, %arg37: memref<1x32xf32, #tpu.memory_space<vmem>>, %arg38: memref<32x32xf32, #tpu.memory_space<vmem>>, %arg39: memref<1x32xf32, #tpu.memory_space<vmem>>, %arg40: memref<1x32xf32, #tpu.memory_space<vmem>>, %arg41: memref<1x32xf32, #tpu.memory_space<vmem>>, %arg42: memref<32x128xf32, #tpu.memory_space<vmem>>, %arg43: memref<1x128xf32, #tpu.memory_space<vmem>>, %arg44: memref<128x32xf32, #tpu.memory_space<vmem>>, %arg45: memref<1x32xf32, #tpu.memory_space<vmem>>, %arg46: memref<1x32xf32, #tpu.memory_space<vmem>>, %arg47: memref<1x32xf32, #tpu.memory_space<vmem>>, %arg48: memref<32x10xf32, #tpu.memory_space<vmem>>, %arg49: memref<1x10xf32, #tpu.memory_space<vmem>>, %arg50: memref<1x1x10xf32, #tpu.memory_space<vmem>>, %arg51: memref<1x1x32xf32, #tpu.memory_space<vmem>>) attributes {dimension_semantics = [#tpu.dimension_semantics<parallel>], iteration_bounds = array<i64: 2>, scalar_prefetch = 0 : i64, scratch_operands = 0 : i64, tpu.core_type = #tpu.core_type<tc>, window_params = [{transform_indices = @transform_0, window_bounds = array<i64: 1, 16, 48>}, {pipeline_mode = #tpu.pipeline_mode<synchronous>, transform_indices = @transform_1, window_bounds = array<i64: 48, 32>}, {pipeline_mode = #tpu.pipeline_mode<synchronous>, transform_indices = @transform_2, window_bounds = array<i64: 1, 32>}, {pipeline_mode = #tpu.pipeline_mode<synchronous>, transform_indices = @transform_3, window_bounds = array<i64: 16, 32>}, {pipeline_mode = #tpu.pipeline_mode<synchronous>, transform_indices = @transform_4, window_bounds = array<i64: 1, 32>}, {pipeline_mode = #tpu.pipeline_mode<synchronous>, transform_indices = @transform_5, window_bounds = array<i64: 1, 32>}, {pipeline_mode = #tpu.pipeline_mode<synchronous>, transform_indices = @transform_6, window_bounds = array<i64: 1, 32>}, {pipeline_mode = #tpu.pipeline_mode<synchronous>, transform_indices = @transform_7, window_bounds = array<i64: 32, 96>}, {pipeline_mode = #tpu.pipeline_mode<synchronous>, transform_indices = @transform_8, window_bounds = array<i64: 1, 96>}, {pipeline_mode = #tpu.pipeline_mode<synchronous>, transform_indices = @transform_9, window_bounds = array<i64: 32, 32>}, {pipeline_mode = #tpu.pipeline_mode<synchronous>, transform_indices = @transform_10, window_bounds = array<i64: 1, 32>}, {pipeline_mode = #tpu.pipeline_mode<synchronous>, transform_indices = @transform_11, window_bounds = array<i64: 1, 32>}, {pipeline_mode = #tpu.pipeline_mode<synchronous>, transform_indices = @transform_12, window_bounds = array<i64: 1, 32>}, {pipeline_mode = #tpu.pipeline_mode<synchronous>, transform_indices = @transform_13, window_bounds = array<i64: 32, 128>}, {pipeline_mode = #tpu.pipeline_mode<synchronous>, transform_indices = @transform_14, window_bounds = array<i64: 1, 128>}, {pipeline_mode = #tpu.pipeline_mode<synchronous>, transform_indices = @transform_15, window_bounds = array<i64: 128, 32>}, {pipeline_mode = #tpu.pipeline_mode<synchronous>, transform_indices = @transform_16, window_bounds = array<i64: 1, 32>}, {pipeline_mode = #tpu.pipeline_mode<synchronous>, transform_indices = @transform_17, window_bounds = array<i64: 1, 32>}, {pipeline_mode = #tpu.pipeline_mode<synchronous>, transform_indices = @transform_18, window_bounds = array<i64: 1, 32>}, {pipeline_mode = #tpu.pipeline_mode<synchronous>, transform_indices = @transform_19, window_bounds = array<i64: 32, 96>}, {pipeline_mode = #tpu.pipeline_mode<synchronous>, transform_indices = @transform_20, window_bounds = array<i64: 1, 96>}, {pipeline_mode = #tpu.pipeline_mode<synchronous>, transform_indices = @transform_21, window_bounds = array<i64: 32, 32>}, {pipeline_mode = #tpu.pipeline_mode<synchronous>, transform_indices = @transform_22, window_bounds = array<i64: 1, 32>}, {pipeline_mode = #tpu.pipeline_mode<synchronous>, transform_indices = @transform_23, window_bounds = array<i64: 1, 32>}, {pipeline_mode = #tpu.pipeline_mode<synchronous>, transform_indices = @transform_24, window_bounds = array<i64: 1, 32>}, {pipeline_mode = #tpu.pipeline_mode<synchronous>, transform_indices = @transform_25, window_bounds = array<i64: 32, 128>}, {pipeline_mode = #tpu.pipeline_mode<synchronous>, transform_indices = @transform_26, window_bounds = array<i64: 1, 128>}, {pipeline_mode = #tpu.pipeline_mode<synchronous>, transform_indices = @transform_27, window_bounds = array<i64: 128, 32>}, {pipeline_mode = #tpu.pipeline_mode<synchronous>, transform_indices = @transform_28, window_bounds = array<i64: 1, 32>}, {pipeline_mode = #tpu.pipeline_mode<synchronous>, transform_indices = @transform_29, window_bounds = array<i64: 1, 32>}, {pipeline_mode = #tpu.pipeline_mode<synchronous>, transform_indices = @transform_30, window_bounds = array<i64: 1, 32>}, {pipeline_mode = #tpu.pipeline_mode<synchronous>, transform_indices = @transform_31, window_bounds = array<i64: 32, 32>}, {pipeline_mode = #tpu.pipeline_mode<synchronous>, transform_indices = @transform_32, window_bounds = array<i64: 1, 32>}, {pipeline_mode = #tpu.pipeline_mode<synchronous>, transform_indices = @transform_33, window_bounds = array<i64: 32, 32>}, {pipeline_mode = #tpu.pipeline_mode<synchronous>, transform_indices = @transform_34, window_bounds = array<i64: 1, 32>}, {pipeline_mode = #tpu.pipeline_mode<synchronous>, transform_indices = @transform_35, window_bounds = array<i64: 32, 32>}, {pipeline_mode = #tpu.pipeline_mode<synchronous>, transform_indices = @transform_36, window_bounds = array<i64: 1, 32>}, {pipeline_mode = #tpu.pipeline_mode<synchronous>, transform_indices = @transform_37, window_bounds = array<i64: 32, 32>}, {pipeline_mode = #tpu.pipeline_mode<synchronous>, transform_indices = @transform_38, window_bounds = array<i64: 1, 32>}, {pipeline_mode = #tpu.pipeline_mode<synchronous>, transform_indices = @transform_39, window_bounds = array<i64: 1, 32>}, {pipeline_mode = #tpu.pipeline_mode<synchronous>, transform_indices = @transform_40, window_bounds = array<i64: 1, 32>}, {pipeline_mode = #tpu.pipeline_mode<synchronous>, transform_indices = @transform_41, window_bounds = array<i64: 32, 128>}, {pipeline_mode = #tpu.pipeline_mode<synchronous>, transform_indices = @transform_42, window_bounds = array<i64: 1, 128>}, {pipeline_mode = #tpu.pipeline_mode<synchronous>, transform_indices = @transform_43, window_bounds = array<i64: 128, 32>}, {pipeline_mode = #tpu.pipeline_mode<synchronous>, transform_indices = @transform_44, window_bounds = array<i64: 1, 32>}, {pipeline_mode = #tpu.pipeline_mode<synchronous>, transform_indices = @transform_45, window_bounds = array<i64: 1, 32>}, {pipeline_mode = #tpu.pipeline_mode<synchronous>, transform_indices = @transform_46, window_bounds = array<i64: 1, 32>}, {pipeline_mode = #tpu.pipeline_mode<synchronous>, transform_indices = @transform_47, window_bounds = array<i64: 32, 10>}, {pipeline_mode = #tpu.pipeline_mode<synchronous>, transform_indices = @transform_48, window_bounds = array<i64: 1, 10>}, {transform_indices = @transform_49, window_bounds = array<i64: 1, 1, 10>}, {transform_indices = @transform_50, window_bounds = array<i64: 1, 1, 32>}]} {
    %c0 = arith.constant 0 : index
    %c0_0 = arith.constant 0 : index
    %c0_1 = arith.constant 0 : index
    %0 = vector.load %arg1[%c0, %c0_0, %c0_1] : memref<1x16x48xf32, #tpu.memory_space<vmem>>, vector<1x16x48xf32>
    %1 = vector.shape_cast %0 : vector<1x16x48xf32> to vector<16x48xf32>
    %2 = arith.truncf %1 : vector<16x48xf32> to vector<16x48xbf16>
    %c0_2 = arith.constant 0 : index
    %c0_3 = arith.constant 0 : index
    %3 = vector.load %arg2[%c0_2, %c0_3] : memref<48x32xf32, #tpu.memory_space<vmem>>, vector<48x32xf32>
    %4 = arith.truncf %3 : vector<48x32xf32> to vector<48x32xbf16>
    %cst = arith.constant dense<0.000000e+00> : vector<16x32xf32>
    %5 = tpu.matmul %2, %4, %cst {dimension_numbers = #tpu.dot_dimension_numbers<[1], [0], [0], [1], [0, 0, 1, 1], [], []>} : vector<16x48xbf16>, vector<48x32xbf16>, vector<16x32xf32> -> vector<16x32xf32>
    %c0_4 = arith.constant 0 : index
    %c0_5 = arith.constant 0 : index
    %6 = vector.load %arg3[%c0_4, %c0_5] : memref<1x32xf32, #tpu.memory_space<vmem>>, vector<1x32xf32>
    %7 = vector.broadcast %6 : vector<1x32xf32> to vector<16x32xf32>
    %8 = arith.addf %5, %7 : vector<16x32xf32>
    %c0_6 = arith.constant 0 : index
    %c0_7 = arith.constant 0 : index
    %9 = vector.load %arg4[%c0_6, %c0_7] : memref<16x32xf32, #tpu.memory_space<vmem>>, vector<16x32xf32>
    %10 = arith.addf %8, %9 : vector<16x32xf32>
    %cst_8 = arith.constant dense<0.000000e+00> : vector<16xf32>
    %11 = vector.multi_reduction <add>, %10, %cst_8 [1] : vector<16x32xf32> to vector<16xf32>
    %12 = vector.shape_cast %11 : vector<16xf32> to vector<16x1xf32>
    %cst_9 = arith.constant 3.200000e+01 : f32
    %13 = vector.broadcast %cst_9 : f32 to vector<16x1xf32>
    %14 = arith.divf %12, %13 : vector<16x1xf32>
    %15 = vector.broadcast %14 : vector<16x1xf32> to vector<16x32xf32>
    %16 = arith.subf %10, %15 : vector<16x32xf32>
    %17 = arith.mulf %16, %16 : vector<16x32xf32>
    %cst_10 = arith.constant dense<0.000000e+00> : vector<16xf32>
    %18 = vector.multi_reduction <add>, %17, %cst_10 [1] : vector<16x32xf32> to vector<16xf32>
    %19 = vector.shape_cast %18 : vector<16xf32> to vector<16x1xf32>
    %cst_11 = arith.constant 3.200000e+01 : f32
    %20 = vector.broadcast %cst_11 : f32 to vector<16x1xf32>
    %21 = arith.divf %19, %20 : vector<16x1xf32>
    %22 = vector.broadcast %14 : vector<16x1xf32> to vector<16x32xf32>
    %23 = arith.subf %10, %22 : vector<16x32xf32>
    %cst_12 = arith.constant 9.99999974E-6 : f32
    %24 = vector.broadcast %cst_12 : f32 to vector<16x1xf32>
    %25 = arith.addf %21, %24 : vector<16x1xf32>
    %26 = math.rsqrt %25 : vector<16x1xf32>
    %27 = vector.broadcast %26 : vector<16x1xf32> to vector<16x32xf32>
    %28 = arith.mulf %23, %27 : vector<16x32xf32>
    %c0_13 = arith.constant 0 : index
    %c0_14 = arith.constant 0 : index
    %29 = vector.load %arg6[%c0_13, %c0_14] : memref<1x32xf32, #tpu.memory_space<vmem>>, vector<1x32xf32>
    %30 = vector.broadcast %29 : vector<1x32xf32> to vector<16x32xf32>
    %31 = arith.mulf %28, %30 : vector<16x32xf32>
    %c0_15 = arith.constant 0 : index
    %c0_16 = arith.constant 0 : index
    %32 = vector.load %arg7[%c0_15, %c0_16] : memref<1x32xf32, #tpu.memory_space<vmem>>, vector<1x32xf32>
    %33 = vector.broadcast %32 : vector<1x32xf32> to vector<16x32xf32>
    %34 = arith.addf %31, %33 : vector<16x32xf32>
    %35 = arith.truncf %34 : vector<16x32xf32> to vector<16x32xbf16>
    %c0_17 = arith.constant 0 : index
    %c0_18 = arith.constant 0 : index
    %36 = vector.load %arg8[%c0_17, %c0_18] : memref<32x96xf32, #tpu.memory_space<vmem>>, vector<32x96xf32>
    %37 = arith.truncf %36 : vector<32x96xf32> to vector<32x96xbf16>
    %cst_19 = arith.constant dense<0.000000e+00> : vector<16x96xf32>
    %38 = tpu.matmul %35, %37, %cst_19 {dimension_numbers = #tpu.dot_dimension_numbers<[1], [0], [0], [1], [0, 0, 1, 1], [], []>} : vector<16x32xbf16>, vector<32x96xbf16>, vector<16x96xf32> -> vector<16x96xf32>
    %c0_20 = arith.constant 0 : index
    %c0_21 = arith.constant 0 : index
    %39 = vector.load %arg9[%c0_20, %c0_21] : memref<1x96xf32, #tpu.memory_space<vmem>>, vector<1x96xf32>
    %40 = vector.broadcast %39 : vector<1x96xf32> to vector<16x96xf32>
    %41 = arith.addf %38, %40 : vector<16x96xf32>
    %42 = vector.extract_strided_slice %41 {offsets = [0, 0], sizes = [16, 32], strides = [1, 1]} : vector<16x96xf32> to vector<16x32xf32>
    %43 = vector.extract_strided_slice %41 {offsets = [0, 32], sizes = [16, 32], strides = [1, 1]} : vector<16x96xf32> to vector<16x32xf32>
    %44 = vector.extract_strided_slice %41 {offsets = [0, 64], sizes = [16, 32], strides = [1, 1]} : vector<16x96xf32> to vector<16x32xf32>
    %45 = vector.extract_strided_slice %42 {offsets = [0, 0], sizes = [16, 8], strides = [1, 1]} : vector<16x32xf32> to vector<16x8xf32>
    %46 = vector.extract_strided_slice %43 {offsets = [0, 0], sizes = [16, 8], strides = [1, 1]} : vector<16x32xf32> to vector<16x8xf32>
    %47 = vector.extract_strided_slice %44 {offsets = [0, 0], sizes = [16, 8], strides = [1, 1]} : vector<16x32xf32> to vector<16x8xf32>
    %48 = arith.truncf %45 : vector<16x8xf32> to vector<16x8xbf16>
    %49 = arith.truncf %46 : vector<16x8xf32> to vector<16x8xbf16>
    %cst_22 = arith.constant dense<0.000000e+00> : vector<16x16xf32>
    %50 = tpu.matmul %48, %49, %cst_22 {dimension_numbers = #tpu.dot_dimension_numbers<[1], [1], [0], [0], [0, 0, 1, 0], [], []>} : vector<16x8xbf16>, vector<16x8xbf16>, vector<16x16xf32> -> vector<16x16xf32>
    %cst_23 = arith.constant 0.353553385 : f32
    %51 = vector.broadcast %cst_23 : f32 to vector<16x16xf32>
    %52 = arith.mulf %50, %51 : vector<16x16xf32>
    %cst_24 = arith.constant dense<0xFF800000> : vector<16xf32>
    %53 = vector.multi_reduction <maximumf>, %52, %cst_24 [1] : vector<16x16xf32> to vector<16xf32>
    %54 = vector.shape_cast %53 : vector<16xf32> to vector<16x1xf32>
    %55 = vector.broadcast %54 : vector<16x1xf32> to vector<16x16xf32>
    %56 = arith.subf %52, %55 : vector<16x16xf32>
    %57 = math.exp %56 : vector<16x16xf32>
    %cst_25 = arith.constant dense<0.000000e+00> : vector<16xf32>
    %58 = vector.multi_reduction <add>, %57, %cst_25 [1] : vector<16x16xf32> to vector<16xf32>
    %59 = vector.shape_cast %58 : vector<16xf32> to vector<16x1xf32>
    %60 = tpu.reciprocal %59 {approx = true} : vector<16x1xf32> -> vector<16x1xf32>
    %61 = vector.broadcast %60 : vector<16x1xf32> to vector<16x16xf32>
    %62 = arith.mulf %57, %61 : vector<16x16xf32>
    %63 = arith.truncf %62 : vector<16x16xf32> to vector<16x16xbf16>
    %64 = arith.truncf %47 : vector<16x8xf32> to vector<16x8xbf16>
    %cst_26 = arith.constant dense<0.000000e+00> : vector<16x8xf32>
    %65 = tpu.matmul %63, %64, %cst_26 {dimension_numbers = #tpu.dot_dimension_numbers<[1], [0], [0], [1], [0, 0, 1, 1], [], []>} : vector<16x16xbf16>, vector<16x8xbf16>, vector<16x8xf32> -> vector<16x8xf32>
    %c0_27 = arith.constant 0 : index
    %c0_28 = arith.constant 0 : index
    %66 = vector.load %arg10[%c0_27, %c0_28] : memref<32x32xf32, #tpu.memory_space<vmem>>, vector<8x32xf32>
    %67 = arith.truncf %65 : vector<16x8xf32> to vector<16x8xbf16>
    %68 = arith.truncf %66 : vector<8x32xf32> to vector<8x32xbf16>
    %cst_29 = arith.constant dense<0.000000e+00> : vector<16x32xf32>
    %69 = tpu.matmul %67, %68, %cst_29 {dimension_numbers = #tpu.dot_dimension_numbers<[1], [0], [0], [1], [0, 0, 1, 1], [], []>} : vector<16x8xbf16>, vector<8x32xbf16>, vector<16x32xf32> -> vector<16x32xf32>
    %70 = vector.extract_strided_slice %42 {offsets = [0, 8], sizes = [16, 8], strides = [1, 1]} : vector<16x32xf32> to vector<16x8xf32>
    %71 = vector.extract_strided_slice %43 {offsets = [0, 8], sizes = [16, 8], strides = [1, 1]} : vector<16x32xf32> to vector<16x8xf32>
    %72 = vector.extract_strided_slice %44 {offsets = [0, 8], sizes = [16, 8], strides = [1, 1]} : vector<16x32xf32> to vector<16x8xf32>
    %73 = arith.truncf %70 : vector<16x8xf32> to vector<16x8xbf16>
    %74 = arith.truncf %71 : vector<16x8xf32> to vector<16x8xbf16>
    %cst_30 = arith.constant dense<0.000000e+00> : vector<16x16xf32>
    %75 = tpu.matmul %73, %74, %cst_30 {dimension_numbers = #tpu.dot_dimension_numbers<[1], [1], [0], [0], [0, 0, 1, 0], [], []>} : vector<16x8xbf16>, vector<16x8xbf16>, vector<16x16xf32> -> vector<16x16xf32>
    %cst_31 = arith.constant 0.353553385 : f32
    %76 = vector.broadcast %cst_31 : f32 to vector<16x16xf32>
    %77 = arith.mulf %75, %76 : vector<16x16xf32>
    %cst_32 = arith.constant dense<0xFF800000> : vector<16xf32>
    %78 = vector.multi_reduction <maximumf>, %77, %cst_32 [1] : vector<16x16xf32> to vector<16xf32>
    %79 = vector.shape_cast %78 : vector<16xf32> to vector<16x1xf32>
    %80 = vector.broadcast %79 : vector<16x1xf32> to vector<16x16xf32>
    %81 = arith.subf %77, %80 : vector<16x16xf32>
    %82 = math.exp %81 : vector<16x16xf32>
    %cst_33 = arith.constant dense<0.000000e+00> : vector<16xf32>
    %83 = vector.multi_reduction <add>, %82, %cst_33 [1] : vector<16x16xf32> to vector<16xf32>
    %84 = vector.shape_cast %83 : vector<16xf32> to vector<16x1xf32>
    %85 = tpu.reciprocal %84 {approx = true} : vector<16x1xf32> -> vector<16x1xf32>
    %86 = vector.broadcast %85 : vector<16x1xf32> to vector<16x16xf32>
    %87 = arith.mulf %82, %86 : vector<16x16xf32>
    %88 = arith.truncf %87 : vector<16x16xf32> to vector<16x16xbf16>
    %89 = arith.truncf %72 : vector<16x8xf32> to vector<16x8xbf16>
    %cst_34 = arith.constant dense<0.000000e+00> : vector<16x8xf32>
    %90 = tpu.matmul %88, %89, %cst_34 {dimension_numbers = #tpu.dot_dimension_numbers<[1], [0], [0], [1], [0, 0, 1, 1], [], []>} : vector<16x16xbf16>, vector<16x8xbf16>, vector<16x8xf32> -> vector<16x8xf32>
    %c8 = arith.constant 8 : index
    %c0_35 = arith.constant 0 : index
    %91 = vector.load %arg10[%c8, %c0_35] : memref<32x32xf32, #tpu.memory_space<vmem>>, vector<8x32xf32>
    %92 = arith.truncf %90 : vector<16x8xf32> to vector<16x8xbf16>
    %93 = arith.truncf %91 : vector<8x32xf32> to vector<8x32xbf16>
    %cst_36 = arith.constant dense<0.000000e+00> : vector<16x32xf32>
    %94 = tpu.matmul %92, %93, %cst_36 {dimension_numbers = #tpu.dot_dimension_numbers<[1], [0], [0], [1], [0, 0, 1, 1], [], []>} : vector<16x8xbf16>, vector<8x32xbf16>, vector<16x32xf32> -> vector<16x32xf32>
    %95 = arith.addf %69, %94 : vector<16x32xf32>
    %96 = vector.extract_strided_slice %42 {offsets = [0, 16], sizes = [16, 8], strides = [1, 1]} : vector<16x32xf32> to vector<16x8xf32>
    %97 = vector.extract_strided_slice %43 {offsets = [0, 16], sizes = [16, 8], strides = [1, 1]} : vector<16x32xf32> to vector<16x8xf32>
    %98 = vector.extract_strided_slice %44 {offsets = [0, 16], sizes = [16, 8], strides = [1, 1]} : vector<16x32xf32> to vector<16x8xf32>
    %99 = arith.truncf %96 : vector<16x8xf32> to vector<16x8xbf16>
    %100 = arith.truncf %97 : vector<16x8xf32> to vector<16x8xbf16>
    %cst_37 = arith.constant dense<0.000000e+00> : vector<16x16xf32>
    %101 = tpu.matmul %99, %100, %cst_37 {dimension_numbers = #tpu.dot_dimension_numbers<[1], [1], [0], [0], [0, 0, 1, 0], [], []>} : vector<16x8xbf16>, vector<16x8xbf16>, vector<16x16xf32> -> vector<16x16xf32>
    %cst_38 = arith.constant 0.353553385 : f32
    %102 = vector.broadcast %cst_38 : f32 to vector<16x16xf32>
    %103 = arith.mulf %101, %102 : vector<16x16xf32>
    %cst_39 = arith.constant dense<0xFF800000> : vector<16xf32>
    %104 = vector.multi_reduction <maximumf>, %103, %cst_39 [1] : vector<16x16xf32> to vector<16xf32>
    %105 = vector.shape_cast %104 : vector<16xf32> to vector<16x1xf32>
    %106 = vector.broadcast %105 : vector<16x1xf32> to vector<16x16xf32>
    %107 = arith.subf %103, %106 : vector<16x16xf32>
    %108 = math.exp %107 : vector<16x16xf32>
    %cst_40 = arith.constant dense<0.000000e+00> : vector<16xf32>
    %109 = vector.multi_reduction <add>, %108, %cst_40 [1] : vector<16x16xf32> to vector<16xf32>
    %110 = vector.shape_cast %109 : vector<16xf32> to vector<16x1xf32>
    %111 = tpu.reciprocal %110 {approx = true} : vector<16x1xf32> -> vector<16x1xf32>
    %112 = vector.broadcast %111 : vector<16x1xf32> to vector<16x16xf32>
    %113 = arith.mulf %108, %112 : vector<16x16xf32>
    %114 = arith.truncf %113 : vector<16x16xf32> to vector<16x16xbf16>
    %115 = arith.truncf %98 : vector<16x8xf32> to vector<16x8xbf16>
    %cst_41 = arith.constant dense<0.000000e+00> : vector<16x8xf32>
    %116 = tpu.matmul %114, %115, %cst_41 {dimension_numbers = #tpu.dot_dimension_numbers<[1], [0], [0], [1], [0, 0, 1, 1], [], []>} : vector<16x16xbf16>, vector<16x8xbf16>, vector<16x8xf32> -> vector<16x8xf32>
    %c16 = arith.constant 16 : index
    %c0_42 = arith.constant 0 : index
    %117 = vector.load %arg10[%c16, %c0_42] : memref<32x32xf32, #tpu.memory_space<vmem>>, vector<8x32xf32>
    %118 = arith.truncf %116 : vector<16x8xf32> to vector<16x8xbf16>
    %119 = arith.truncf %117 : vector<8x32xf32> to vector<8x32xbf16>
    %cst_43 = arith.constant dense<0.000000e+00> : vector<16x32xf32>
    %120 = tpu.matmul %118, %119, %cst_43 {dimension_numbers = #tpu.dot_dimension_numbers<[1], [0], [0], [1], [0, 0, 1, 1], [], []>} : vector<16x8xbf16>, vector<8x32xbf16>, vector<16x32xf32> -> vector<16x32xf32>
    %121 = arith.addf %95, %120 : vector<16x32xf32>
    %122 = vector.extract_strided_slice %42 {offsets = [0, 24], sizes = [16, 8], strides = [1, 1]} : vector<16x32xf32> to vector<16x8xf32>
    %123 = vector.extract_strided_slice %43 {offsets = [0, 24], sizes = [16, 8], strides = [1, 1]} : vector<16x32xf32> to vector<16x8xf32>
    %124 = vector.extract_strided_slice %44 {offsets = [0, 24], sizes = [16, 8], strides = [1, 1]} : vector<16x32xf32> to vector<16x8xf32>
    %125 = arith.truncf %122 : vector<16x8xf32> to vector<16x8xbf16>
    %126 = arith.truncf %123 : vector<16x8xf32> to vector<16x8xbf16>
    %cst_44 = arith.constant dense<0.000000e+00> : vector<16x16xf32>
    %127 = tpu.matmul %125, %126, %cst_44 {dimension_numbers = #tpu.dot_dimension_numbers<[1], [1], [0], [0], [0, 0, 1, 0], [], []>} : vector<16x8xbf16>, vector<16x8xbf16>, vector<16x16xf32> -> vector<16x16xf32>
    %cst_45 = arith.constant 0.353553385 : f32
    %128 = vector.broadcast %cst_45 : f32 to vector<16x16xf32>
    %129 = arith.mulf %127, %128 : vector<16x16xf32>
    %cst_46 = arith.constant dense<0xFF800000> : vector<16xf32>
    %130 = vector.multi_reduction <maximumf>, %129, %cst_46 [1] : vector<16x16xf32> to vector<16xf32>
    %131 = vector.shape_cast %130 : vector<16xf32> to vector<16x1xf32>
    %132 = vector.broadcast %131 : vector<16x1xf32> to vector<16x16xf32>
    %133 = arith.subf %129, %132 : vector<16x16xf32>
    %134 = math.exp %133 : vector<16x16xf32>
    %cst_47 = arith.constant dense<0.000000e+00> : vector<16xf32>
    %135 = vector.multi_reduction <add>, %134, %cst_47 [1] : vector<16x16xf32> to vector<16xf32>
    %136 = vector.shape_cast %135 : vector<16xf32> to vector<16x1xf32>
    %137 = tpu.reciprocal %136 {approx = true} : vector<16x1xf32> -> vector<16x1xf32>
    %138 = vector.broadcast %137 : vector<16x1xf32> to vector<16x16xf32>
    %139 = arith.mulf %134, %138 : vector<16x16xf32>
    %140 = arith.truncf %139 : vector<16x16xf32> to vector<16x16xbf16>
    %141 = arith.truncf %124 : vector<16x8xf32> to vector<16x8xbf16>
    %cst_48 = arith.constant dense<0.000000e+00> : vector<16x8xf32>
    %142 = tpu.matmul %140, %141, %cst_48 {dimension_numbers = #tpu.dot_dimension_numbers<[1], [0], [0], [1], [0, 0, 1, 1], [], []>} : vector<16x16xbf16>, vector<16x8xbf16>, vector<16x8xf32> -> vector<16x8xf32>
    %c24 = arith.constant 24 : index
    %c0_49 = arith.constant 0 : index
    %143 = vector.load %arg10[%c24, %c0_49] : memref<32x32xf32, #tpu.memory_space<vmem>>, vector<8x32xf32>
    %144 = arith.truncf %142 : vector<16x8xf32> to vector<16x8xbf16>
    %145 = arith.truncf %143 : vector<8x32xf32> to vector<8x32xbf16>
    %cst_50 = arith.constant dense<0.000000e+00> : vector<16x32xf32>
    %146 = tpu.matmul %144, %145, %cst_50 {dimension_numbers = #tpu.dot_dimension_numbers<[1], [0], [0], [1], [0, 0, 1, 1], [], []>} : vector<16x8xbf16>, vector<8x32xbf16>, vector<16x32xf32> -> vector<16x32xf32>
    %147 = arith.addf %121, %146 : vector<16x32xf32>
    %c0_51 = arith.constant 0 : index
    %c0_52 = arith.constant 0 : index
    %148 = vector.load %arg11[%c0_51, %c0_52] : memref<1x32xf32, #tpu.memory_space<vmem>>, vector<1x32xf32>
    %149 = vector.broadcast %148 : vector<1x32xf32> to vector<16x32xf32>
    %150 = arith.addf %147, %149 : vector<16x32xf32>
    %151 = arith.addf %10, %150 : vector<16x32xf32>
    %cst_53 = arith.constant dense<0.000000e+00> : vector<16xf32>
    %152 = vector.multi_reduction <add>, %151, %cst_53 [1] : vector<16x32xf32> to vector<16xf32>
    %153 = vector.shape_cast %152 : vector<16xf32> to vector<16x1xf32>
    %cst_54 = arith.constant 3.200000e+01 : f32
    %154 = vector.broadcast %cst_54 : f32 to vector<16x1xf32>
    %155 = arith.divf %153, %154 : vector<16x1xf32>
    %156 = vector.broadcast %155 : vector<16x1xf32> to vector<16x32xf32>
    %157 = arith.subf %151, %156 : vector<16x32xf32>
    %158 = arith.mulf %157, %157 : vector<16x32xf32>
    %cst_55 = arith.constant dense<0.000000e+00> : vector<16xf32>
    %159 = vector.multi_reduction <add>, %158, %cst_55 [1] : vector<16x32xf32> to vector<16xf32>
    %160 = vector.shape_cast %159 : vector<16xf32> to vector<16x1xf32>
    %cst_56 = arith.constant 3.200000e+01 : f32
    %161 = vector.broadcast %cst_56 : f32 to vector<16x1xf32>
    %162 = arith.divf %160, %161 : vector<16x1xf32>
    %163 = vector.broadcast %155 : vector<16x1xf32> to vector<16x32xf32>
    %164 = arith.subf %151, %163 : vector<16x32xf32>
    %cst_57 = arith.constant 9.99999974E-6 : f32
    %165 = vector.broadcast %cst_57 : f32 to vector<16x1xf32>
    %166 = arith.addf %162, %165 : vector<16x1xf32>
    %167 = math.rsqrt %166 : vector<16x1xf32>
    %168 = vector.broadcast %167 : vector<16x1xf32> to vector<16x32xf32>
    %169 = arith.mulf %164, %168 : vector<16x32xf32>
    %c0_58 = arith.constant 0 : index
    %c0_59 = arith.constant 0 : index
    %170 = vector.load %arg12[%c0_58, %c0_59] : memref<1x32xf32, #tpu.memory_space<vmem>>, vector<1x32xf32>
    %171 = vector.broadcast %170 : vector<1x32xf32> to vector<16x32xf32>
    %172 = arith.mulf %169, %171 : vector<16x32xf32>
    %c0_60 = arith.constant 0 : index
    %c0_61 = arith.constant 0 : index
    %173 = vector.load %arg13[%c0_60, %c0_61] : memref<1x32xf32, #tpu.memory_space<vmem>>, vector<1x32xf32>
    %174 = vector.broadcast %173 : vector<1x32xf32> to vector<16x32xf32>
    %175 = arith.addf %172, %174 : vector<16x32xf32>
    %176 = arith.truncf %175 : vector<16x32xf32> to vector<16x32xbf16>
    %c0_62 = arith.constant 0 : index
    %c0_63 = arith.constant 0 : index
    %177 = vector.load %arg14[%c0_62, %c0_63] : memref<32x128xf32, #tpu.memory_space<vmem>>, vector<32x128xf32>
    %178 = arith.truncf %177 : vector<32x128xf32> to vector<32x128xbf16>
    %cst_64 = arith.constant dense<0.000000e+00> : vector<16x128xf32>
    %179 = tpu.matmul %176, %178, %cst_64 {dimension_numbers = #tpu.dot_dimension_numbers<[1], [0], [0], [1], [0, 0, 1, 1], [], []>} : vector<16x32xbf16>, vector<32x128xbf16>, vector<16x128xf32> -> vector<16x128xf32>
    %c0_65 = arith.constant 0 : index
    %c0_66 = arith.constant 0 : index
    %180 = vector.load %arg15[%c0_65, %c0_66] : memref<1x128xf32, #tpu.memory_space<vmem>>, vector<1x128xf32>
    %181 = vector.broadcast %180 : vector<1x128xf32> to vector<16x128xf32>
    %182 = arith.addf %179, %181 : vector<16x128xf32>
    %cst_67 = arith.constant 5.000000e-01 : f32
    %183 = vector.broadcast %cst_67 : f32 to vector<16x128xf32>
    %184 = arith.mulf %183, %182 : vector<16x128xf32>
    %cst_68 = arith.constant 4.471500e-02 : f32
    %185 = vector.broadcast %cst_68 : f32 to vector<16x128xf32>
    %186 = arith.mulf %185, %182 : vector<16x128xf32>
    %187 = arith.mulf %186, %182 : vector<16x128xf32>
    %188 = arith.mulf %187, %182 : vector<16x128xf32>
    %189 = arith.addf %182, %188 : vector<16x128xf32>
    %cst_69 = arith.constant 0.797884583 : f32
    %190 = vector.broadcast %cst_69 : f32 to vector<16x128xf32>
    %191 = arith.mulf %190, %189 : vector<16x128xf32>
    %192 = math.tanh %191 : vector<16x128xf32>
    %cst_70 = arith.constant 1.000000e+00 : f32
    %193 = vector.broadcast %cst_70 : f32 to vector<16x128xf32>
    %194 = arith.addf %193, %192 : vector<16x128xf32>
    %195 = arith.mulf %184, %194 : vector<16x128xf32>
    %196 = arith.truncf %195 : vector<16x128xf32> to vector<16x128xbf16>
    %c0_71 = arith.constant 0 : index
    %c0_72 = arith.constant 0 : index
    %197 = vector.load %arg16[%c0_71, %c0_72] : memref<128x32xf32, #tpu.memory_space<vmem>>, vector<128x32xf32>
    %198 = arith.truncf %197 : vector<128x32xf32> to vector<128x32xbf16>
    %cst_73 = arith.constant dense<0.000000e+00> : vector<16x32xf32>
    %199 = tpu.matmul %196, %198, %cst_73 {dimension_numbers = #tpu.dot_dimension_numbers<[1], [0], [0], [1], [0, 0, 1, 1], [], []>} : vector<16x128xbf16>, vector<128x32xbf16>, vector<16x32xf32> -> vector<16x32xf32>
    %c0_74 = arith.constant 0 : index
    %c0_75 = arith.constant 0 : index
    %200 = vector.load %arg17[%c0_74, %c0_75] : memref<1x32xf32, #tpu.memory_space<vmem>>, vector<1x32xf32>
    %201 = vector.broadcast %200 : vector<1x32xf32> to vector<16x32xf32>
    %202 = arith.addf %199, %201 : vector<16x32xf32>
    %203 = arith.addf %151, %202 : vector<16x32xf32>
    %cst_76 = arith.constant dense<0.000000e+00> : vector<16xf32>
    %204 = vector.multi_reduction <add>, %203, %cst_76 [1] : vector<16x32xf32> to vector<16xf32>
    %205 = vector.shape_cast %204 : vector<16xf32> to vector<16x1xf32>
    %cst_77 = arith.constant 3.200000e+01 : f32
    %206 = vector.broadcast %cst_77 : f32 to vector<16x1xf32>
    %207 = arith.divf %205, %206 : vector<16x1xf32>
    %208 = vector.broadcast %207 : vector<16x1xf32> to vector<16x32xf32>
    %209 = arith.subf %203, %208 : vector<16x32xf32>
    %210 = arith.mulf %209, %209 : vector<16x32xf32>
    %cst_78 = arith.constant dense<0.000000e+00> : vector<16xf32>
    %211 = vector.multi_reduction <add>, %210, %cst_78 [1] : vector<16x32xf32> to vector<16xf32>
    %212 = vector.shape_cast %211 : vector<16xf32> to vector<16x1xf32>
    %cst_79 = arith.constant 3.200000e+01 : f32
    %213 = vector.broadcast %cst_79 : f32 to vector<16x1xf32>
    %214 = arith.divf %212, %213 : vector<16x1xf32>
    %215 = vector.broadcast %207 : vector<16x1xf32> to vector<16x32xf32>
    %216 = arith.subf %203, %215 : vector<16x32xf32>
    %cst_80 = arith.constant 9.99999974E-6 : f32
    %217 = vector.broadcast %cst_80 : f32 to vector<16x1xf32>
    %218 = arith.addf %214, %217 : vector<16x1xf32>
    %219 = math.rsqrt %218 : vector<16x1xf32>
    %220 = vector.broadcast %219 : vector<16x1xf32> to vector<16x32xf32>
    %221 = arith.mulf %216, %220 : vector<16x32xf32>
    %c0_81 = arith.constant 0 : index
    %c0_82 = arith.constant 0 : index
    %222 = vector.load %arg18[%c0_81, %c0_82] : memref<1x32xf32, #tpu.memory_space<vmem>>, vector<1x32xf32>
    %223 = vector.broadcast %222 : vector<1x32xf32> to vector<16x32xf32>
    %224 = arith.mulf %221, %223 : vector<16x32xf32>
    %c0_83 = arith.constant 0 : index
    %c0_84 = arith.constant 0 : index
    %225 = vector.load %arg19[%c0_83, %c0_84] : memref<1x32xf32, #tpu.memory_space<vmem>>, vector<1x32xf32>
    %226 = vector.broadcast %225 : vector<1x32xf32> to vector<16x32xf32>
    %227 = arith.addf %224, %226 : vector<16x32xf32>
    %228 = arith.truncf %227 : vector<16x32xf32> to vector<16x32xbf16>
    %c0_85 = arith.constant 0 : index
    %c0_86 = arith.constant 0 : index
    %229 = vector.load %arg20[%c0_85, %c0_86] : memref<32x96xf32, #tpu.memory_space<vmem>>, vector<32x96xf32>
    %230 = arith.truncf %229 : vector<32x96xf32> to vector<32x96xbf16>
    %cst_87 = arith.constant dense<0.000000e+00> : vector<16x96xf32>
    %231 = tpu.matmul %228, %230, %cst_87 {dimension_numbers = #tpu.dot_dimension_numbers<[1], [0], [0], [1], [0, 0, 1, 1], [], []>} : vector<16x32xbf16>, vector<32x96xbf16>, vector<16x96xf32> -> vector<16x96xf32>
    %c0_88 = arith.constant 0 : index
    %c0_89 = arith.constant 0 : index
    %232 = vector.load %arg21[%c0_88, %c0_89] : memref<1x96xf32, #tpu.memory_space<vmem>>, vector<1x96xf32>
    %233 = vector.broadcast %232 : vector<1x96xf32> to vector<16x96xf32>
    %234 = arith.addf %231, %233 : vector<16x96xf32>
    %235 = vector.extract_strided_slice %234 {offsets = [0, 0], sizes = [16, 32], strides = [1, 1]} : vector<16x96xf32> to vector<16x32xf32>
    %236 = vector.extract_strided_slice %234 {offsets = [0, 32], sizes = [16, 32], strides = [1, 1]} : vector<16x96xf32> to vector<16x32xf32>
    %237 = vector.extract_strided_slice %234 {offsets = [0, 64], sizes = [16, 32], strides = [1, 1]} : vector<16x96xf32> to vector<16x32xf32>
    %238 = vector.extract_strided_slice %235 {offsets = [0, 0], sizes = [16, 8], strides = [1, 1]} : vector<16x32xf32> to vector<16x8xf32>
    %239 = vector.extract_strided_slice %236 {offsets = [0, 0], sizes = [16, 8], strides = [1, 1]} : vector<16x32xf32> to vector<16x8xf32>
    %240 = vector.extract_strided_slice %237 {offsets = [0, 0], sizes = [16, 8], strides = [1, 1]} : vector<16x32xf32> to vector<16x8xf32>
    %241 = arith.truncf %238 : vector<16x8xf32> to vector<16x8xbf16>
    %242 = arith.truncf %239 : vector<16x8xf32> to vector<16x8xbf16>
    %cst_90 = arith.constant dense<0.000000e+00> : vector<16x16xf32>
    %243 = tpu.matmul %241, %242, %cst_90 {dimension_numbers = #tpu.dot_dimension_numbers<[1], [1], [0], [0], [0, 0, 1, 0], [], []>} : vector<16x8xbf16>, vector<16x8xbf16>, vector<16x16xf32> -> vector<16x16xf32>
    %cst_91 = arith.constant 0.353553385 : f32
    %244 = vector.broadcast %cst_91 : f32 to vector<16x16xf32>
    %245 = arith.mulf %243, %244 : vector<16x16xf32>
    %cst_92 = arith.constant dense<0xFF800000> : vector<16xf32>
    %246 = vector.multi_reduction <maximumf>, %245, %cst_92 [1] : vector<16x16xf32> to vector<16xf32>
    %247 = vector.shape_cast %246 : vector<16xf32> to vector<16x1xf32>
    %248 = vector.broadcast %247 : vector<16x1xf32> to vector<16x16xf32>
    %249 = arith.subf %245, %248 : vector<16x16xf32>
    %250 = math.exp %249 : vector<16x16xf32>
    %cst_93 = arith.constant dense<0.000000e+00> : vector<16xf32>
    %251 = vector.multi_reduction <add>, %250, %cst_93 [1] : vector<16x16xf32> to vector<16xf32>
    %252 = vector.shape_cast %251 : vector<16xf32> to vector<16x1xf32>
    %253 = tpu.reciprocal %252 {approx = true} : vector<16x1xf32> -> vector<16x1xf32>
    %254 = vector.broadcast %253 : vector<16x1xf32> to vector<16x16xf32>
    %255 = arith.mulf %250, %254 : vector<16x16xf32>
    %256 = arith.truncf %255 : vector<16x16xf32> to vector<16x16xbf16>
    %257 = arith.truncf %240 : vector<16x8xf32> to vector<16x8xbf16>
    %cst_94 = arith.constant dense<0.000000e+00> : vector<16x8xf32>
    %258 = tpu.matmul %256, %257, %cst_94 {dimension_numbers = #tpu.dot_dimension_numbers<[1], [0], [0], [1], [0, 0, 1, 1], [], []>} : vector<16x16xbf16>, vector<16x8xbf16>, vector<16x8xf32> -> vector<16x8xf32>
    %c0_95 = arith.constant 0 : index
    %c0_96 = arith.constant 0 : index
    %259 = vector.load %arg22[%c0_95, %c0_96] : memref<32x32xf32, #tpu.memory_space<vmem>>, vector<8x32xf32>
    %260 = arith.truncf %258 : vector<16x8xf32> to vector<16x8xbf16>
    %261 = arith.truncf %259 : vector<8x32xf32> to vector<8x32xbf16>
    %cst_97 = arith.constant dense<0.000000e+00> : vector<16x32xf32>
    %262 = tpu.matmul %260, %261, %cst_97 {dimension_numbers = #tpu.dot_dimension_numbers<[1], [0], [0], [1], [0, 0, 1, 1], [], []>} : vector<16x8xbf16>, vector<8x32xbf16>, vector<16x32xf32> -> vector<16x32xf32>
    %263 = vector.extract_strided_slice %235 {offsets = [0, 8], sizes = [16, 8], strides = [1, 1]} : vector<16x32xf32> to vector<16x8xf32>
    %264 = vector.extract_strided_slice %236 {offsets = [0, 8], sizes = [16, 8], strides = [1, 1]} : vector<16x32xf32> to vector<16x8xf32>
    %265 = vector.extract_strided_slice %237 {offsets = [0, 8], sizes = [16, 8], strides = [1, 1]} : vector<16x32xf32> to vector<16x8xf32>
    %266 = arith.truncf %263 : vector<16x8xf32> to vector<16x8xbf16>
    %267 = arith.truncf %264 : vector<16x8xf32> to vector<16x8xbf16>
    %cst_98 = arith.constant dense<0.000000e+00> : vector<16x16xf32>
    %268 = tpu.matmul %266, %267, %cst_98 {dimension_numbers = #tpu.dot_dimension_numbers<[1], [1], [0], [0], [0, 0, 1, 0], [], []>} : vector<16x8xbf16>, vector<16x8xbf16>, vector<16x16xf32> -> vector<16x16xf32>
    %cst_99 = arith.constant 0.353553385 : f32
    %269 = vector.broadcast %cst_99 : f32 to vector<16x16xf32>
    %270 = arith.mulf %268, %269 : vector<16x16xf32>
    %cst_100 = arith.constant dense<0xFF800000> : vector<16xf32>
    %271 = vector.multi_reduction <maximumf>, %270, %cst_100 [1] : vector<16x16xf32> to vector<16xf32>
    %272 = vector.shape_cast %271 : vector<16xf32> to vector<16x1xf32>
    %273 = vector.broadcast %272 : vector<16x1xf32> to vector<16x16xf32>
    %274 = arith.subf %270, %273 : vector<16x16xf32>
    %275 = math.exp %274 : vector<16x16xf32>
    %cst_101 = arith.constant dense<0.000000e+00> : vector<16xf32>
    %276 = vector.multi_reduction <add>, %275, %cst_101 [1] : vector<16x16xf32> to vector<16xf32>
    %277 = vector.shape_cast %276 : vector<16xf32> to vector<16x1xf32>
    %278 = tpu.reciprocal %277 {approx = true} : vector<16x1xf32> -> vector<16x1xf32>
    %279 = vector.broadcast %278 : vector<16x1xf32> to vector<16x16xf32>
    %280 = arith.mulf %275, %279 : vector<16x16xf32>
    %281 = arith.truncf %280 : vector<16x16xf32> to vector<16x16xbf16>
    %282 = arith.truncf %265 : vector<16x8xf32> to vector<16x8xbf16>
    %cst_102 = arith.constant dense<0.000000e+00> : vector<16x8xf32>
    %283 = tpu.matmul %281, %282, %cst_102 {dimension_numbers = #tpu.dot_dimension_numbers<[1], [0], [0], [1], [0, 0, 1, 1], [], []>} : vector<16x16xbf16>, vector<16x8xbf16>, vector<16x8xf32> -> vector<16x8xf32>
    %c8_103 = arith.constant 8 : index
    %c0_104 = arith.constant 0 : index
    %284 = vector.load %arg22[%c8_103, %c0_104] : memref<32x32xf32, #tpu.memory_space<vmem>>, vector<8x32xf32>
    %285 = arith.truncf %283 : vector<16x8xf32> to vector<16x8xbf16>
    %286 = arith.truncf %284 : vector<8x32xf32> to vector<8x32xbf16>
    %cst_105 = arith.constant dense<0.000000e+00> : vector<16x32xf32>
    %287 = tpu.matmul %285, %286, %cst_105 {dimension_numbers = #tpu.dot_dimension_numbers<[1], [0], [0], [1], [0, 0, 1, 1], [], []>} : vector<16x8xbf16>, vector<8x32xbf16>, vector<16x32xf32> -> vector<16x32xf32>
    %288 = arith.addf %262, %287 : vector<16x32xf32>
    %289 = vector.extract_strided_slice %235 {offsets = [0, 16], sizes = [16, 8], strides = [1, 1]} : vector<16x32xf32> to vector<16x8xf32>
    %290 = vector.extract_strided_slice %236 {offsets = [0, 16], sizes = [16, 8], strides = [1, 1]} : vector<16x32xf32> to vector<16x8xf32>
    %291 = vector.extract_strided_slice %237 {offsets = [0, 16], sizes = [16, 8], strides = [1, 1]} : vector<16x32xf32> to vector<16x8xf32>
    %292 = arith.truncf %289 : vector<16x8xf32> to vector<16x8xbf16>
    %293 = arith.truncf %290 : vector<16x8xf32> to vector<16x8xbf16>
    %cst_106 = arith.constant dense<0.000000e+00> : vector<16x16xf32>
    %294 = tpu.matmul %292, %293, %cst_106 {dimension_numbers = #tpu.dot_dimension_numbers<[1], [1], [0], [0], [0, 0, 1, 0], [], []>} : vector<16x8xbf16>, vector<16x8xbf16>, vector<16x16xf32> -> vector<16x16xf32>
    %cst_107 = arith.constant 0.353553385 : f32
    %295 = vector.broadcast %cst_107 : f32 to vector<16x16xf32>
    %296 = arith.mulf %294, %295 : vector<16x16xf32>
    %cst_108 = arith.constant dense<0xFF800000> : vector<16xf32>
    %297 = vector.multi_reduction <maximumf>, %296, %cst_108 [1] : vector<16x16xf32> to vector<16xf32>
    %298 = vector.shape_cast %297 : vector<16xf32> to vector<16x1xf32>
    %299 = vector.broadcast %298 : vector<16x1xf32> to vector<16x16xf32>
    %300 = arith.subf %296, %299 : vector<16x16xf32>
    %301 = math.exp %300 : vector<16x16xf32>
    %cst_109 = arith.constant dense<0.000000e+00> : vector<16xf32>
    %302 = vector.multi_reduction <add>, %301, %cst_109 [1] : vector<16x16xf32> to vector<16xf32>
    %303 = vector.shape_cast %302 : vector<16xf32> to vector<16x1xf32>
    %304 = tpu.reciprocal %303 {approx = true} : vector<16x1xf32> -> vector<16x1xf32>
    %305 = vector.broadcast %304 : vector<16x1xf32> to vector<16x16xf32>
    %306 = arith.mulf %301, %305 : vector<16x16xf32>
    %307 = arith.truncf %306 : vector<16x16xf32> to vector<16x16xbf16>
    %308 = arith.truncf %291 : vector<16x8xf32> to vector<16x8xbf16>
    %cst_110 = arith.constant dense<0.000000e+00> : vector<16x8xf32>
    %309 = tpu.matmul %307, %308, %cst_110 {dimension_numbers = #tpu.dot_dimension_numbers<[1], [0], [0], [1], [0, 0, 1, 1], [], []>} : vector<16x16xbf16>, vector<16x8xbf16>, vector<16x8xf32> -> vector<16x8xf32>
    %c16_111 = arith.constant 16 : index
    %c0_112 = arith.constant 0 : index
    %310 = vector.load %arg22[%c16_111, %c0_112] : memref<32x32xf32, #tpu.memory_space<vmem>>, vector<8x32xf32>
    %311 = arith.truncf %309 : vector<16x8xf32> to vector<16x8xbf16>
    %312 = arith.truncf %310 : vector<8x32xf32> to vector<8x32xbf16>
    %cst_113 = arith.constant dense<0.000000e+00> : vector<16x32xf32>
    %313 = tpu.matmul %311, %312, %cst_113 {dimension_numbers = #tpu.dot_dimension_numbers<[1], [0], [0], [1], [0, 0, 1, 1], [], []>} : vector<16x8xbf16>, vector<8x32xbf16>, vector<16x32xf32> -> vector<16x32xf32>
    %314 = arith.addf %288, %313 : vector<16x32xf32>
    %315 = vector.extract_strided_slice %235 {offsets = [0, 24], sizes = [16, 8], strides = [1, 1]} : vector<16x32xf32> to vector<16x8xf32>
    %316 = vector.extract_strided_slice %236 {offsets = [0, 24], sizes = [16, 8], strides = [1, 1]} : vector<16x32xf32> to vector<16x8xf32>
    %317 = vector.extract_strided_slice %237 {offsets = [0, 24], sizes = [16, 8], strides = [1, 1]} : vector<16x32xf32> to vector<16x8xf32>
    %318 = arith.truncf %315 : vector<16x8xf32> to vector<16x8xbf16>
    %319 = arith.truncf %316 : vector<16x8xf32> to vector<16x8xbf16>
    %cst_114 = arith.constant dense<0.000000e+00> : vector<16x16xf32>
    %320 = tpu.matmul %318, %319, %cst_114 {dimension_numbers = #tpu.dot_dimension_numbers<[1], [1], [0], [0], [0, 0, 1, 0], [], []>} : vector<16x8xbf16>, vector<16x8xbf16>, vector<16x16xf32> -> vector<16x16xf32>
    %cst_115 = arith.constant 0.353553385 : f32
    %321 = vector.broadcast %cst_115 : f32 to vector<16x16xf32>
    %322 = arith.mulf %320, %321 : vector<16x16xf32>
    %cst_116 = arith.constant dense<0xFF800000> : vector<16xf32>
    %323 = vector.multi_reduction <maximumf>, %322, %cst_116 [1] : vector<16x16xf32> to vector<16xf32>
    %324 = vector.shape_cast %323 : vector<16xf32> to vector<16x1xf32>
    %325 = vector.broadcast %324 : vector<16x1xf32> to vector<16x16xf32>
    %326 = arith.subf %322, %325 : vector<16x16xf32>
    %327 = math.exp %326 : vector<16x16xf32>
    %cst_117 = arith.constant dense<0.000000e+00> : vector<16xf32>
    %328 = vector.multi_reduction <add>, %327, %cst_117 [1] : vector<16x16xf32> to vector<16xf32>
    %329 = vector.shape_cast %328 : vector<16xf32> to vector<16x1xf32>
    %330 = tpu.reciprocal %329 {approx = true} : vector<16x1xf32> -> vector<16x1xf32>
    %331 = vector.broadcast %330 : vector<16x1xf32> to vector<16x16xf32>
    %332 = arith.mulf %327, %331 : vector<16x16xf32>
    %333 = arith.truncf %332 : vector<16x16xf32> to vector<16x16xbf16>
    %334 = arith.truncf %317 : vector<16x8xf32> to vector<16x8xbf16>
    %cst_118 = arith.constant dense<0.000000e+00> : vector<16x8xf32>
    %335 = tpu.matmul %333, %334, %cst_118 {dimension_numbers = #tpu.dot_dimension_numbers<[1], [0], [0], [1], [0, 0, 1, 1], [], []>} : vector<16x16xbf16>, vector<16x8xbf16>, vector<16x8xf32> -> vector<16x8xf32>
    %c24_119 = arith.constant 24 : index
    %c0_120 = arith.constant 0 : index
    %336 = vector.load %arg22[%c24_119, %c0_120] : memref<32x32xf32, #tpu.memory_space<vmem>>, vector<8x32xf32>
    %337 = arith.truncf %335 : vector<16x8xf32> to vector<16x8xbf16>
    %338 = arith.truncf %336 : vector<8x32xf32> to vector<8x32xbf16>
    %cst_121 = arith.constant dense<0.000000e+00> : vector<16x32xf32>
    %339 = tpu.matmul %337, %338, %cst_121 {dimension_numbers = #tpu.dot_dimension_numbers<[1], [0], [0], [1], [0, 0, 1, 1], [], []>} : vector<16x8xbf16>, vector<8x32xbf16>, vector<16x32xf32> -> vector<16x32xf32>
    %340 = arith.addf %314, %339 : vector<16x32xf32>
    %c0_122 = arith.constant 0 : index
    %c0_123 = arith.constant 0 : index
    %341 = vector.load %arg23[%c0_122, %c0_123] : memref<1x32xf32, #tpu.memory_space<vmem>>, vector<1x32xf32>
    %342 = vector.broadcast %341 : vector<1x32xf32> to vector<16x32xf32>
    %343 = arith.addf %340, %342 : vector<16x32xf32>
    %344 = arith.addf %203, %343 : vector<16x32xf32>
    %cst_124 = arith.constant dense<0.000000e+00> : vector<16xf32>
    %345 = vector.multi_reduction <add>, %344, %cst_124 [1] : vector<16x32xf32> to vector<16xf32>
    %346 = vector.shape_cast %345 : vector<16xf32> to vector<16x1xf32>
    %cst_125 = arith.constant 3.200000e+01 : f32
    %347 = vector.broadcast %cst_125 : f32 to vector<16x1xf32>
    %348 = arith.divf %346, %347 : vector<16x1xf32>
    %349 = vector.broadcast %348 : vector<16x1xf32> to vector<16x32xf32>
    %350 = arith.subf %344, %349 : vector<16x32xf32>
    %351 = arith.mulf %350, %350 : vector<16x32xf32>
    %cst_126 = arith.constant dense<0.000000e+00> : vector<16xf32>
    %352 = vector.multi_reduction <add>, %351, %cst_126 [1] : vector<16x32xf32> to vector<16xf32>
    %353 = vector.shape_cast %352 : vector<16xf32> to vector<16x1xf32>
    %cst_127 = arith.constant 3.200000e+01 : f32
    %354 = vector.broadcast %cst_127 : f32 to vector<16x1xf32>
    %355 = arith.divf %353, %354 : vector<16x1xf32>
    %356 = vector.broadcast %348 : vector<16x1xf32> to vector<16x32xf32>
    %357 = arith.subf %344, %356 : vector<16x32xf32>
    %cst_128 = arith.constant 9.99999974E-6 : f32
    %358 = vector.broadcast %cst_128 : f32 to vector<16x1xf32>
    %359 = arith.addf %355, %358 : vector<16x1xf32>
    %360 = math.rsqrt %359 : vector<16x1xf32>
    %361 = vector.broadcast %360 : vector<16x1xf32> to vector<16x32xf32>
    %362 = arith.mulf %357, %361 : vector<16x32xf32>
    %c0_129 = arith.constant 0 : index
    %c0_130 = arith.constant 0 : index
    %363 = vector.load %arg24[%c0_129, %c0_130] : memref<1x32xf32, #tpu.memory_space<vmem>>, vector<1x32xf32>
    %364 = vector.broadcast %363 : vector<1x32xf32> to vector<16x32xf32>
    %365 = arith.mulf %362, %364 : vector<16x32xf32>
    %c0_131 = arith.constant 0 : index
    %c0_132 = arith.constant 0 : index
    %366 = vector.load %arg25[%c0_131, %c0_132] : memref<1x32xf32, #tpu.memory_space<vmem>>, vector<1x32xf32>
    %367 = vector.broadcast %366 : vector<1x32xf32> to vector<16x32xf32>
    %368 = arith.addf %365, %367 : vector<16x32xf32>
    %369 = arith.truncf %368 : vector<16x32xf32> to vector<16x32xbf16>
    %c0_133 = arith.constant 0 : index
    %c0_134 = arith.constant 0 : index
    %370 = vector.load %arg26[%c0_133, %c0_134] : memref<32x128xf32, #tpu.memory_space<vmem>>, vector<32x128xf32>
    %371 = arith.truncf %370 : vector<32x128xf32> to vector<32x128xbf16>
    %cst_135 = arith.constant dense<0.000000e+00> : vector<16x128xf32>
    %372 = tpu.matmul %369, %371, %cst_135 {dimension_numbers = #tpu.dot_dimension_numbers<[1], [0], [0], [1], [0, 0, 1, 1], [], []>} : vector<16x32xbf16>, vector<32x128xbf16>, vector<16x128xf32> -> vector<16x128xf32>
    %c0_136 = arith.constant 0 : index
    %c0_137 = arith.constant 0 : index
    %373 = vector.load %arg27[%c0_136, %c0_137] : memref<1x128xf32, #tpu.memory_space<vmem>>, vector<1x128xf32>
    %374 = vector.broadcast %373 : vector<1x128xf32> to vector<16x128xf32>
    %375 = arith.addf %372, %374 : vector<16x128xf32>
    %cst_138 = arith.constant 5.000000e-01 : f32
    %376 = vector.broadcast %cst_138 : f32 to vector<16x128xf32>
    %377 = arith.mulf %376, %375 : vector<16x128xf32>
    %cst_139 = arith.constant 4.471500e-02 : f32
    %378 = vector.broadcast %cst_139 : f32 to vector<16x128xf32>
    %379 = arith.mulf %378, %375 : vector<16x128xf32>
    %380 = arith.mulf %379, %375 : vector<16x128xf32>
    %381 = arith.mulf %380, %375 : vector<16x128xf32>
    %382 = arith.addf %375, %381 : vector<16x128xf32>
    %cst_140 = arith.constant 0.797884583 : f32
    %383 = vector.broadcast %cst_140 : f32 to vector<16x128xf32>
    %384 = arith.mulf %383, %382 : vector<16x128xf32>
    %385 = math.tanh %384 : vector<16x128xf32>
    %cst_141 = arith.constant 1.000000e+00 : f32
    %386 = vector.broadcast %cst_141 : f32 to vector<16x128xf32>
    %387 = arith.addf %386, %385 : vector<16x128xf32>
    %388 = arith.mulf %377, %387 : vector<16x128xf32>
    %389 = arith.truncf %388 : vector<16x128xf32> to vector<16x128xbf16>
    %c0_142 = arith.constant 0 : index
    %c0_143 = arith.constant 0 : index
    %390 = vector.load %arg28[%c0_142, %c0_143] : memref<128x32xf32, #tpu.memory_space<vmem>>, vector<128x32xf32>
    %391 = arith.truncf %390 : vector<128x32xf32> to vector<128x32xbf16>
    %cst_144 = arith.constant dense<0.000000e+00> : vector<16x32xf32>
    %392 = tpu.matmul %389, %391, %cst_144 {dimension_numbers = #tpu.dot_dimension_numbers<[1], [0], [0], [1], [0, 0, 1, 1], [], []>} : vector<16x128xbf16>, vector<128x32xbf16>, vector<16x32xf32> -> vector<16x32xf32>
    %c0_145 = arith.constant 0 : index
    %c0_146 = arith.constant 0 : index
    %393 = vector.load %arg29[%c0_145, %c0_146] : memref<1x32xf32, #tpu.memory_space<vmem>>, vector<1x32xf32>
    %394 = vector.broadcast %393 : vector<1x32xf32> to vector<16x32xf32>
    %395 = arith.addf %392, %394 : vector<16x32xf32>
    %396 = arith.addf %344, %395 : vector<16x32xf32>
    %c0_147 = arith.constant 0 : index
    %c0_148 = arith.constant 0 : index
    %397 = vector.load %arg5[%c0_147, %c0_148] : memref<1x32xf32, #tpu.memory_space<vmem>>, vector<1x32xf32>
    %cst_149 = arith.constant dense<0.000000e+00> : vector<1xf32>
    %398 = vector.multi_reduction <add>, %397, %cst_149 [1] : vector<1x32xf32> to vector<1xf32>
    %399 = vector.shape_cast %398 : vector<1xf32> to vector<1x1xf32>
    %cst_150 = arith.constant 3.200000e+01 : f32
    %400 = vector.broadcast %cst_150 : f32 to vector<1x1xf32>
    %401 = arith.divf %399, %400 : vector<1x1xf32>
    %402 = vector.broadcast %401 : vector<1x1xf32> to vector<1x32xf32>
    %403 = arith.subf %397, %402 : vector<1x32xf32>
    %404 = arith.mulf %403, %403 : vector<1x32xf32>
    %cst_151 = arith.constant dense<0.000000e+00> : vector<1xf32>
    %405 = vector.multi_reduction <add>, %404, %cst_151 [1] : vector<1x32xf32> to vector<1xf32>
    %406 = vector.shape_cast %405 : vector<1xf32> to vector<1x1xf32>
    %cst_152 = arith.constant 3.200000e+01 : f32
    %407 = vector.broadcast %cst_152 : f32 to vector<1x1xf32>
    %408 = arith.divf %406, %407 : vector<1x1xf32>
    %409 = vector.broadcast %401 : vector<1x1xf32> to vector<1x32xf32>
    %410 = arith.subf %397, %409 : vector<1x32xf32>
    %cst_153 = arith.constant 9.99999974E-6 : f32
    %411 = vector.broadcast %cst_153 : f32 to vector<1x1xf32>
    %412 = arith.addf %408, %411 : vector<1x1xf32>
    %413 = math.rsqrt %412 : vector<1x1xf32>
    %414 = vector.broadcast %413 : vector<1x1xf32> to vector<1x32xf32>
    %415 = arith.mulf %410, %414 : vector<1x32xf32>
    %c0_154 = arith.constant 0 : index
    %c0_155 = arith.constant 0 : index
    %416 = vector.load %arg30[%c0_154, %c0_155] : memref<1x32xf32, #tpu.memory_space<vmem>>, vector<1x32xf32>
    %417 = arith.mulf %415, %416 : vector<1x32xf32>
    %c0_156 = arith.constant 0 : index
    %c0_157 = arith.constant 0 : index
    %418 = vector.load %arg31[%c0_156, %c0_157] : memref<1x32xf32, #tpu.memory_space<vmem>>, vector<1x32xf32>
    %419 = arith.addf %417, %418 : vector<1x32xf32>
    %cst_158 = arith.constant dense<0.000000e+00> : vector<16xf32>
    %420 = vector.multi_reduction <add>, %396, %cst_158 [1] : vector<16x32xf32> to vector<16xf32>
    %421 = vector.shape_cast %420 : vector<16xf32> to vector<16x1xf32>
    %cst_159 = arith.constant 3.200000e+01 : f32
    %422 = vector.broadcast %cst_159 : f32 to vector<16x1xf32>
    %423 = arith.divf %421, %422 : vector<16x1xf32>
    %424 = vector.broadcast %423 : vector<16x1xf32> to vector<16x32xf32>
    %425 = arith.subf %396, %424 : vector<16x32xf32>
    %426 = arith.mulf %425, %425 : vector<16x32xf32>
    %cst_160 = arith.constant dense<0.000000e+00> : vector<16xf32>
    %427 = vector.multi_reduction <add>, %426, %cst_160 [1] : vector<16x32xf32> to vector<16xf32>
    %428 = vector.shape_cast %427 : vector<16xf32> to vector<16x1xf32>
    %cst_161 = arith.constant 3.200000e+01 : f32
    %429 = vector.broadcast %cst_161 : f32 to vector<16x1xf32>
    %430 = arith.divf %428, %429 : vector<16x1xf32>
    %431 = vector.broadcast %423 : vector<16x1xf32> to vector<16x32xf32>
    %432 = arith.subf %396, %431 : vector<16x32xf32>
    %cst_162 = arith.constant 9.99999974E-6 : f32
    %433 = vector.broadcast %cst_162 : f32 to vector<16x1xf32>
    %434 = arith.addf %430, %433 : vector<16x1xf32>
    %435 = math.rsqrt %434 : vector<16x1xf32>
    %436 = vector.broadcast %435 : vector<16x1xf32> to vector<16x32xf32>
    %437 = arith.mulf %432, %436 : vector<16x32xf32>
    %c0_163 = arith.constant 0 : index
    %c0_164 = arith.constant 0 : index
    %438 = vector.load %arg30[%c0_163, %c0_164] : memref<1x32xf32, #tpu.memory_space<vmem>>, vector<1x32xf32>
    %439 = vector.broadcast %438 : vector<1x32xf32> to vector<16x32xf32>
    %440 = arith.mulf %437, %439 : vector<16x32xf32>
    %c0_165 = arith.constant 0 : index
    %c0_166 = arith.constant 0 : index
    %441 = vector.load %arg31[%c0_165, %c0_166] : memref<1x32xf32, #tpu.memory_space<vmem>>, vector<1x32xf32>
    %442 = vector.broadcast %441 : vector<1x32xf32> to vector<16x32xf32>
    %443 = arith.addf %440, %442 : vector<16x32xf32>
    %444 = arith.truncf %419 : vector<1x32xf32> to vector<1x32xbf16>
    %c0_167 = arith.constant 0 : index
    %c0_168 = arith.constant 0 : index
    %445 = vector.load %arg32[%c0_167, %c0_168] : memref<32x32xf32, #tpu.memory_space<vmem>>, vector<32x32xf32>
    %446 = arith.truncf %445 : vector<32x32xf32> to vector<32x32xbf16>
    %cst_169 = arith.constant dense<0.000000e+00> : vector<1x32xf32>
    %447 = tpu.matmul %444, %446, %cst_169 {dimension_numbers = #tpu.dot_dimension_numbers<[1], [0], [0], [1], [0, 0, 1, 1], [], []>} : vector<1x32xbf16>, vector<32x32xbf16>, vector<1x32xf32> -> vector<1x32xf32>
    %c0_170 = arith.constant 0 : index
    %c0_171 = arith.constant 0 : index
    %448 = vector.load %arg33[%c0_170, %c0_171] : memref<1x32xf32, #tpu.memory_space<vmem>>, vector<1x32xf32>
    %449 = arith.addf %447, %448 : vector<1x32xf32>
    %450 = arith.truncf %419 : vector<1x32xf32> to vector<1x32xbf16>
    %c0_172 = arith.constant 0 : index
    %c0_173 = arith.constant 0 : index
    %451 = vector.load %arg34[%c0_172, %c0_173] : memref<32x32xf32, #tpu.memory_space<vmem>>, vector<32x32xf32>
    %452 = arith.truncf %451 : vector<32x32xf32> to vector<32x32xbf16>
    %cst_174 = arith.constant dense<0.000000e+00> : vector<1x32xf32>
    %453 = tpu.matmul %450, %452, %cst_174 {dimension_numbers = #tpu.dot_dimension_numbers<[1], [0], [0], [1], [0, 0, 1, 1], [], []>} : vector<1x32xbf16>, vector<32x32xbf16>, vector<1x32xf32> -> vector<1x32xf32>
    %c0_175 = arith.constant 0 : index
    %c0_176 = arith.constant 0 : index
    %454 = vector.load %arg35[%c0_175, %c0_176] : memref<1x32xf32, #tpu.memory_space<vmem>>, vector<1x32xf32>
    %455 = arith.addf %453, %454 : vector<1x32xf32>
    %456 = arith.truncf %443 : vector<16x32xf32> to vector<16x32xbf16>
    %c0_177 = arith.constant 0 : index
    %c0_178 = arith.constant 0 : index
    %457 = vector.load %arg34[%c0_177, %c0_178] : memref<32x32xf32, #tpu.memory_space<vmem>>, vector<32x32xf32>
    %458 = arith.truncf %457 : vector<32x32xf32> to vector<32x32xbf16>
    %cst_179 = arith.constant dense<0.000000e+00> : vector<16x32xf32>
    %459 = tpu.matmul %456, %458, %cst_179 {dimension_numbers = #tpu.dot_dimension_numbers<[1], [0], [0], [1], [0, 0, 1, 1], [], []>} : vector<16x32xbf16>, vector<32x32xbf16>, vector<16x32xf32> -> vector<16x32xf32>
    %c0_180 = arith.constant 0 : index
    %c0_181 = arith.constant 0 : index
    %460 = vector.load %arg35[%c0_180, %c0_181] : memref<1x32xf32, #tpu.memory_space<vmem>>, vector<1x32xf32>
    %461 = vector.broadcast %460 : vector<1x32xf32> to vector<16x32xf32>
    %462 = arith.addf %459, %461 : vector<16x32xf32>
    %463 = arith.truncf %419 : vector<1x32xf32> to vector<1x32xbf16>
    %c0_182 = arith.constant 0 : index
    %c0_183 = arith.constant 0 : index
    %464 = vector.load %arg36[%c0_182, %c0_183] : memref<32x32xf32, #tpu.memory_space<vmem>>, vector<32x32xf32>
    %465 = arith.truncf %464 : vector<32x32xf32> to vector<32x32xbf16>
    %cst_184 = arith.constant dense<0.000000e+00> : vector<1x32xf32>
    %466 = tpu.matmul %463, %465, %cst_184 {dimension_numbers = #tpu.dot_dimension_numbers<[1], [0], [0], [1], [0, 0, 1, 1], [], []>} : vector<1x32xbf16>, vector<32x32xbf16>, vector<1x32xf32> -> vector<1x32xf32>
    %c0_185 = arith.constant 0 : index
    %c0_186 = arith.constant 0 : index
    %467 = vector.load %arg37[%c0_185, %c0_186] : memref<1x32xf32, #tpu.memory_space<vmem>>, vector<1x32xf32>
    %468 = arith.addf %466, %467 : vector<1x32xf32>
    %469 = arith.truncf %443 : vector<16x32xf32> to vector<16x32xbf16>
    %c0_187 = arith.constant 0 : index
    %c0_188 = arith.constant 0 : index
    %470 = vector.load %arg36[%c0_187, %c0_188] : memref<32x32xf32, #tpu.memory_space<vmem>>, vector<32x32xf32>
    %471 = arith.truncf %470 : vector<32x32xf32> to vector<32x32xbf16>
    %cst_189 = arith.constant dense<0.000000e+00> : vector<16x32xf32>
    %472 = tpu.matmul %469, %471, %cst_189 {dimension_numbers = #tpu.dot_dimension_numbers<[1], [0], [0], [1], [0, 0, 1, 1], [], []>} : vector<16x32xbf16>, vector<32x32xbf16>, vector<16x32xf32> -> vector<16x32xf32>
    %c0_190 = arith.constant 0 : index
    %c0_191 = arith.constant 0 : index
    %473 = vector.load %arg37[%c0_190, %c0_191] : memref<1x32xf32, #tpu.memory_space<vmem>>, vector<1x32xf32>
    %474 = vector.broadcast %473 : vector<1x32xf32> to vector<16x32xf32>
    %475 = arith.addf %472, %474 : vector<16x32xf32>
    %476 = vector.extract_strided_slice %449 {offsets = [0, 0], sizes = [1, 8], strides = [1, 1]} : vector<1x32xf32> to vector<1x8xf32>
    %477 = vector.extract_strided_slice %455 {offsets = [0, 0], sizes = [1, 8], strides = [1, 1]} : vector<1x32xf32> to vector<1x8xf32>
    %478 = arith.truncf %476 : vector<1x8xf32> to vector<1x8xbf16>
    %479 = arith.truncf %477 : vector<1x8xf32> to vector<1x8xbf16>
    %480 = arith.extf %478 : vector<1x8xbf16> to vector<1x8xf32>
    %481 = arith.extf %479 : vector<1x8xbf16> to vector<1x8xf32>
    %cst_192 = arith.constant dense<0.000000e+00> : vector<1xf32>
    %482 = arith.mulf %480, %481 : vector<1x8xf32>
    %483 = vector.multi_reduction <add>, %482, %cst_192 [1] : vector<1x8xf32> to vector<1xf32>
    %484 = vector.shape_cast %483 : vector<1xf32> to vector<1x1xf32>
    %cst_193 = arith.constant 0.353553385 : f32
    %485 = vector.broadcast %cst_193 : f32 to vector<1x1xf32>
    %486 = arith.mulf %484, %485 : vector<1x1xf32>
    %487 = vector.extract_strided_slice %462 {offsets = [0, 0], sizes = [16, 8], strides = [1, 1]} : vector<16x32xf32> to vector<16x8xf32>
    %488 = arith.truncf %476 : vector<1x8xf32> to vector<1x8xbf16>
    %489 = arith.truncf %487 : vector<16x8xf32> to vector<16x8xbf16>
    %cst_194 = arith.constant dense<0.000000e+00> : vector<1x16xf32>
    %490 = tpu.matmul %488, %489, %cst_194 {dimension_numbers = #tpu.dot_dimension_numbers<[1], [1], [0], [0], [0, 0, 1, 0], [], []>} : vector<1x8xbf16>, vector<16x8xbf16>, vector<1x16xf32> -> vector<1x16xf32>
    %cst_195 = arith.constant 0.353553385 : f32
    %491 = vector.broadcast %cst_195 : f32 to vector<1x16xf32>
    %492 = arith.mulf %490, %491 : vector<1x16xf32>
    %cst_196 = arith.constant dense<0xFF800000> : vector<1xf32>
    %493 = vector.multi_reduction <maximumf>, %492, %cst_196 [1] : vector<1x16xf32> to vector<1xf32>
    %494 = vector.shape_cast %493 : vector<1xf32> to vector<1x1xf32>
    %495 = arith.maximumf %494, %486 : vector<1x1xf32>
    %496 = arith.subf %486, %495 : vector<1x1xf32>
    %497 = math.exp %496 : vector<1x1xf32>
    %498 = vector.broadcast %495 : vector<1x1xf32> to vector<1x16xf32>
    %499 = arith.subf %492, %498 : vector<1x16xf32>
    %500 = math.exp %499 : vector<1x16xf32>
    %cst_197 = arith.constant dense<0.000000e+00> : vector<1xf32>
    %501 = vector.multi_reduction <add>, %500, %cst_197 [1] : vector<1x16xf32> to vector<1xf32>
    %502 = vector.shape_cast %501 : vector<1xf32> to vector<1x1xf32>
    %503 = arith.addf %497, %502 : vector<1x1xf32>
    %504 = tpu.reciprocal %503 {approx = true} : vector<1x1xf32> -> vector<1x1xf32>
    %505 = vector.extract_strided_slice %468 {offsets = [0, 0], sizes = [1, 8], strides = [1, 1]} : vector<1x32xf32> to vector<1x8xf32>
    %506 = vector.broadcast %497 : vector<1x1xf32> to vector<1x8xf32>
    %507 = arith.mulf %506, %505 : vector<1x8xf32>
    %508 = vector.extract_strided_slice %475 {offsets = [0, 0], sizes = [16, 8], strides = [1, 1]} : vector<16x32xf32> to vector<16x8xf32>
    %509 = arith.truncf %500 : vector<1x16xf32> to vector<1x16xbf16>
    %510 = arith.truncf %508 : vector<16x8xf32> to vector<16x8xbf16>
    %cst_198 = arith.constant dense<0.000000e+00> : vector<1x8xf32>
    %511 = tpu.matmul %509, %510, %cst_198 {dimension_numbers = #tpu.dot_dimension_numbers<[1], [0], [0], [1], [0, 0, 1, 1], [], []>} : vector<1x16xbf16>, vector<16x8xbf16>, vector<1x8xf32> -> vector<1x8xf32>
    %512 = arith.addf %507, %511 : vector<1x8xf32>
    %513 = vector.broadcast %504 : vector<1x1xf32> to vector<1x8xf32>
    %514 = arith.mulf %512, %513 : vector<1x8xf32>
    %c0_199 = arith.constant 0 : index
    %c0_200 = arith.constant 0 : index
    %515 = vector.load %arg38[%c0_199, %c0_200] : memref<32x32xf32, #tpu.memory_space<vmem>>, vector<8x32xf32>
    %516 = arith.truncf %514 : vector<1x8xf32> to vector<1x8xbf16>
    %517 = arith.truncf %515 : vector<8x32xf32> to vector<8x32xbf16>
    %cst_201 = arith.constant dense<0.000000e+00> : vector<1x32xf32>
    %518 = tpu.matmul %516, %517, %cst_201 {dimension_numbers = #tpu.dot_dimension_numbers<[1], [0], [0], [1], [0, 0, 1, 1], [], []>} : vector<1x8xbf16>, vector<8x32xbf16>, vector<1x32xf32> -> vector<1x32xf32>
    %519 = vector.extract_strided_slice %449 {offsets = [0, 8], sizes = [1, 8], strides = [1, 1]} : vector<1x32xf32> to vector<1x8xf32>
    %520 = vector.extract_strided_slice %455 {offsets = [0, 8], sizes = [1, 8], strides = [1, 1]} : vector<1x32xf32> to vector<1x8xf32>
    %521 = arith.truncf %519 : vector<1x8xf32> to vector<1x8xbf16>
    %522 = arith.truncf %520 : vector<1x8xf32> to vector<1x8xbf16>
    %523 = arith.extf %521 : vector<1x8xbf16> to vector<1x8xf32>
    %524 = arith.extf %522 : vector<1x8xbf16> to vector<1x8xf32>
    %cst_202 = arith.constant dense<0.000000e+00> : vector<1xf32>
    %525 = arith.mulf %523, %524 : vector<1x8xf32>
    %526 = vector.multi_reduction <add>, %525, %cst_202 [1] : vector<1x8xf32> to vector<1xf32>
    %527 = vector.shape_cast %526 : vector<1xf32> to vector<1x1xf32>
    %cst_203 = arith.constant 0.353553385 : f32
    %528 = vector.broadcast %cst_203 : f32 to vector<1x1xf32>
    %529 = arith.mulf %527, %528 : vector<1x1xf32>
    %530 = vector.extract_strided_slice %462 {offsets = [0, 8], sizes = [16, 8], strides = [1, 1]} : vector<16x32xf32> to vector<16x8xf32>
    %531 = arith.truncf %519 : vector<1x8xf32> to vector<1x8xbf16>
    %532 = arith.truncf %530 : vector<16x8xf32> to vector<16x8xbf16>
    %cst_204 = arith.constant dense<0.000000e+00> : vector<1x16xf32>
    %533 = tpu.matmul %531, %532, %cst_204 {dimension_numbers = #tpu.dot_dimension_numbers<[1], [1], [0], [0], [0, 0, 1, 0], [], []>} : vector<1x8xbf16>, vector<16x8xbf16>, vector<1x16xf32> -> vector<1x16xf32>
    %cst_205 = arith.constant 0.353553385 : f32
    %534 = vector.broadcast %cst_205 : f32 to vector<1x16xf32>
    %535 = arith.mulf %533, %534 : vector<1x16xf32>
    %cst_206 = arith.constant dense<0xFF800000> : vector<1xf32>
    %536 = vector.multi_reduction <maximumf>, %535, %cst_206 [1] : vector<1x16xf32> to vector<1xf32>
    %537 = vector.shape_cast %536 : vector<1xf32> to vector<1x1xf32>
    %538 = arith.maximumf %537, %529 : vector<1x1xf32>
    %539 = arith.subf %529, %538 : vector<1x1xf32>
    %540 = math.exp %539 : vector<1x1xf32>
    %541 = vector.broadcast %538 : vector<1x1xf32> to vector<1x16xf32>
    %542 = arith.subf %535, %541 : vector<1x16xf32>
    %543 = math.exp %542 : vector<1x16xf32>
    %cst_207 = arith.constant dense<0.000000e+00> : vector<1xf32>
    %544 = vector.multi_reduction <add>, %543, %cst_207 [1] : vector<1x16xf32> to vector<1xf32>
    %545 = vector.shape_cast %544 : vector<1xf32> to vector<1x1xf32>
    %546 = arith.addf %540, %545 : vector<1x1xf32>
    %547 = tpu.reciprocal %546 {approx = true} : vector<1x1xf32> -> vector<1x1xf32>
    %548 = vector.extract_strided_slice %468 {offsets = [0, 8], sizes = [1, 8], strides = [1, 1]} : vector<1x32xf32> to vector<1x8xf32>
    %549 = vector.broadcast %540 : vector<1x1xf32> to vector<1x8xf32>
    %550 = arith.mulf %549, %548 : vector<1x8xf32>
    %551 = vector.extract_strided_slice %475 {offsets = [0, 8], sizes = [16, 8], strides = [1, 1]} : vector<16x32xf32> to vector<16x8xf32>
    %552 = arith.truncf %543 : vector<1x16xf32> to vector<1x16xbf16>
    %553 = arith.truncf %551 : vector<16x8xf32> to vector<16x8xbf16>
    %cst_208 = arith.constant dense<0.000000e+00> : vector<1x8xf32>
    %554 = tpu.matmul %552, %553, %cst_208 {dimension_numbers = #tpu.dot_dimension_numbers<[1], [0], [0], [1], [0, 0, 1, 1], [], []>} : vector<1x16xbf16>, vector<16x8xbf16>, vector<1x8xf32> -> vector<1x8xf32>
    %555 = arith.addf %550, %554 : vector<1x8xf32>
    %556 = vector.broadcast %547 : vector<1x1xf32> to vector<1x8xf32>
    %557 = arith.mulf %555, %556 : vector<1x8xf32>
    %c8_209 = arith.constant 8 : index
    %c0_210 = arith.constant 0 : index
    %558 = vector.load %arg38[%c8_209, %c0_210] : memref<32x32xf32, #tpu.memory_space<vmem>>, vector<8x32xf32>
    %559 = arith.truncf %557 : vector<1x8xf32> to vector<1x8xbf16>
    %560 = arith.truncf %558 : vector<8x32xf32> to vector<8x32xbf16>
    %cst_211 = arith.constant dense<0.000000e+00> : vector<1x32xf32>
    %561 = tpu.matmul %559, %560, %cst_211 {dimension_numbers = #tpu.dot_dimension_numbers<[1], [0], [0], [1], [0, 0, 1, 1], [], []>} : vector<1x8xbf16>, vector<8x32xbf16>, vector<1x32xf32> -> vector<1x32xf32>
    %562 = arith.addf %518, %561 : vector<1x32xf32>
    %563 = vector.extract_strided_slice %449 {offsets = [0, 16], sizes = [1, 8], strides = [1, 1]} : vector<1x32xf32> to vector<1x8xf32>
    %564 = vector.extract_strided_slice %455 {offsets = [0, 16], sizes = [1, 8], strides = [1, 1]} : vector<1x32xf32> to vector<1x8xf32>
    %565 = arith.truncf %563 : vector<1x8xf32> to vector<1x8xbf16>
    %566 = arith.truncf %564 : vector<1x8xf32> to vector<1x8xbf16>
    %567 = arith.extf %565 : vector<1x8xbf16> to vector<1x8xf32>
    %568 = arith.extf %566 : vector<1x8xbf16> to vector<1x8xf32>
    %cst_212 = arith.constant dense<0.000000e+00> : vector<1xf32>
    %569 = arith.mulf %567, %568 : vector<1x8xf32>
    %570 = vector.multi_reduction <add>, %569, %cst_212 [1] : vector<1x8xf32> to vector<1xf32>
    %571 = vector.shape_cast %570 : vector<1xf32> to vector<1x1xf32>
    %cst_213 = arith.constant 0.353553385 : f32
    %572 = vector.broadcast %cst_213 : f32 to vector<1x1xf32>
    %573 = arith.mulf %571, %572 : vector<1x1xf32>
    %574 = vector.extract_strided_slice %462 {offsets = [0, 16], sizes = [16, 8], strides = [1, 1]} : vector<16x32xf32> to vector<16x8xf32>
    %575 = arith.truncf %563 : vector<1x8xf32> to vector<1x8xbf16>
    %576 = arith.truncf %574 : vector<16x8xf32> to vector<16x8xbf16>
    %cst_214 = arith.constant dense<0.000000e+00> : vector<1x16xf32>
    %577 = tpu.matmul %575, %576, %cst_214 {dimension_numbers = #tpu.dot_dimension_numbers<[1], [1], [0], [0], [0, 0, 1, 0], [], []>} : vector<1x8xbf16>, vector<16x8xbf16>, vector<1x16xf32> -> vector<1x16xf32>
    %cst_215 = arith.constant 0.353553385 : f32
    %578 = vector.broadcast %cst_215 : f32 to vector<1x16xf32>
    %579 = arith.mulf %577, %578 : vector<1x16xf32>
    %cst_216 = arith.constant dense<0xFF800000> : vector<1xf32>
    %580 = vector.multi_reduction <maximumf>, %579, %cst_216 [1] : vector<1x16xf32> to vector<1xf32>
    %581 = vector.shape_cast %580 : vector<1xf32> to vector<1x1xf32>
    %582 = arith.maximumf %581, %573 : vector<1x1xf32>
    %583 = arith.subf %573, %582 : vector<1x1xf32>
    %584 = math.exp %583 : vector<1x1xf32>
    %585 = vector.broadcast %582 : vector<1x1xf32> to vector<1x16xf32>
    %586 = arith.subf %579, %585 : vector<1x16xf32>
    %587 = math.exp %586 : vector<1x16xf32>
    %cst_217 = arith.constant dense<0.000000e+00> : vector<1xf32>
    %588 = vector.multi_reduction <add>, %587, %cst_217 [1] : vector<1x16xf32> to vector<1xf32>
    %589 = vector.shape_cast %588 : vector<1xf32> to vector<1x1xf32>
    %590 = arith.addf %584, %589 : vector<1x1xf32>
    %591 = tpu.reciprocal %590 {approx = true} : vector<1x1xf32> -> vector<1x1xf32>
    %592 = vector.extract_strided_slice %468 {offsets = [0, 16], sizes = [1, 8], strides = [1, 1]} : vector<1x32xf32> to vector<1x8xf32>
    %593 = vector.broadcast %584 : vector<1x1xf32> to vector<1x8xf32>
    %594 = arith.mulf %593, %592 : vector<1x8xf32>
    %595 = vector.extract_strided_slice %475 {offsets = [0, 16], sizes = [16, 8], strides = [1, 1]} : vector<16x32xf32> to vector<16x8xf32>
    %596 = arith.truncf %587 : vector<1x16xf32> to vector<1x16xbf16>
    %597 = arith.truncf %595 : vector<16x8xf32> to vector<16x8xbf16>
    %cst_218 = arith.constant dense<0.000000e+00> : vector<1x8xf32>
    %598 = tpu.matmul %596, %597, %cst_218 {dimension_numbers = #tpu.dot_dimension_numbers<[1], [0], [0], [1], [0, 0, 1, 1], [], []>} : vector<1x16xbf16>, vector<16x8xbf16>, vector<1x8xf32> -> vector<1x8xf32>
    %599 = arith.addf %594, %598 : vector<1x8xf32>
    %600 = vector.broadcast %591 : vector<1x1xf32> to vector<1x8xf32>
    %601 = arith.mulf %599, %600 : vector<1x8xf32>
    %c16_219 = arith.constant 16 : index
    %c0_220 = arith.constant 0 : index
    %602 = vector.load %arg38[%c16_219, %c0_220] : memref<32x32xf32, #tpu.memory_space<vmem>>, vector<8x32xf32>
    %603 = arith.truncf %601 : vector<1x8xf32> to vector<1x8xbf16>
    %604 = arith.truncf %602 : vector<8x32xf32> to vector<8x32xbf16>
    %cst_221 = arith.constant dense<0.000000e+00> : vector<1x32xf32>
    %605 = tpu.matmul %603, %604, %cst_221 {dimension_numbers = #tpu.dot_dimension_numbers<[1], [0], [0], [1], [0, 0, 1, 1], [], []>} : vector<1x8xbf16>, vector<8x32xbf16>, vector<1x32xf32> -> vector<1x32xf32>
    %606 = arith.addf %562, %605 : vector<1x32xf32>
    %607 = vector.extract_strided_slice %449 {offsets = [0, 24], sizes = [1, 8], strides = [1, 1]} : vector<1x32xf32> to vector<1x8xf32>
    %608 = vector.extract_strided_slice %455 {offsets = [0, 24], sizes = [1, 8], strides = [1, 1]} : vector<1x32xf32> to vector<1x8xf32>
    %609 = arith.truncf %607 : vector<1x8xf32> to vector<1x8xbf16>
    %610 = arith.truncf %608 : vector<1x8xf32> to vector<1x8xbf16>
    %611 = arith.extf %609 : vector<1x8xbf16> to vector<1x8xf32>
    %612 = arith.extf %610 : vector<1x8xbf16> to vector<1x8xf32>
    %cst_222 = arith.constant dense<0.000000e+00> : vector<1xf32>
    %613 = arith.mulf %611, %612 : vector<1x8xf32>
    %614 = vector.multi_reduction <add>, %613, %cst_222 [1] : vector<1x8xf32> to vector<1xf32>
    %615 = vector.shape_cast %614 : vector<1xf32> to vector<1x1xf32>
    %cst_223 = arith.constant 0.353553385 : f32
    %616 = vector.broadcast %cst_223 : f32 to vector<1x1xf32>
    %617 = arith.mulf %615, %616 : vector<1x1xf32>
    %618 = vector.extract_strided_slice %462 {offsets = [0, 24], sizes = [16, 8], strides = [1, 1]} : vector<16x32xf32> to vector<16x8xf32>
    %619 = arith.truncf %607 : vector<1x8xf32> to vector<1x8xbf16>
    %620 = arith.truncf %618 : vector<16x8xf32> to vector<16x8xbf16>
    %cst_224 = arith.constant dense<0.000000e+00> : vector<1x16xf32>
    %621 = tpu.matmul %619, %620, %cst_224 {dimension_numbers = #tpu.dot_dimension_numbers<[1], [1], [0], [0], [0, 0, 1, 0], [], []>} : vector<1x8xbf16>, vector<16x8xbf16>, vector<1x16xf32> -> vector<1x16xf32>
    %cst_225 = arith.constant 0.353553385 : f32
    %622 = vector.broadcast %cst_225 : f32 to vector<1x16xf32>
    %623 = arith.mulf %621, %622 : vector<1x16xf32>
    %cst_226 = arith.constant dense<0xFF800000> : vector<1xf32>
    %624 = vector.multi_reduction <maximumf>, %623, %cst_226 [1] : vector<1x16xf32> to vector<1xf32>
    %625 = vector.shape_cast %624 : vector<1xf32> to vector<1x1xf32>
    %626 = arith.maximumf %625, %617 : vector<1x1xf32>
    %627 = arith.subf %617, %626 : vector<1x1xf32>
    %628 = math.exp %627 : vector<1x1xf32>
    %629 = vector.broadcast %626 : vector<1x1xf32> to vector<1x16xf32>
    %630 = arith.subf %623, %629 : vector<1x16xf32>
    %631 = math.exp %630 : vector<1x16xf32>
    %cst_227 = arith.constant dense<0.000000e+00> : vector<1xf32>
    %632 = vector.multi_reduction <add>, %631, %cst_227 [1] : vector<1x16xf32> to vector<1xf32>
    %633 = vector.shape_cast %632 : vector<1xf32> to vector<1x1xf32>
    %634 = arith.addf %628, %633 : vector<1x1xf32>
    %635 = tpu.reciprocal %634 {approx = true} : vector<1x1xf32> -> vector<1x1xf32>
    %636 = vector.extract_strided_slice %468 {offsets = [0, 24], sizes = [1, 8], strides = [1, 1]} : vector<1x32xf32> to vector<1x8xf32>
    %637 = vector.broadcast %628 : vector<1x1xf32> to vector<1x8xf32>
    %638 = arith.mulf %637, %636 : vector<1x8xf32>
    %639 = vector.extract_strided_slice %475 {offsets = [0, 24], sizes = [16, 8], strides = [1, 1]} : vector<16x32xf32> to vector<16x8xf32>
    %640 = arith.truncf %631 : vector<1x16xf32> to vector<1x16xbf16>
    %641 = arith.truncf %639 : vector<16x8xf32> to vector<16x8xbf16>
    %cst_228 = arith.constant dense<0.000000e+00> : vector<1x8xf32>
    %642 = tpu.matmul %640, %641, %cst_228 {dimension_numbers = #tpu.dot_dimension_numbers<[1], [0], [0], [1], [0, 0, 1, 1], [], []>} : vector<1x16xbf16>, vector<16x8xbf16>, vector<1x8xf32> -> vector<1x8xf32>
    %643 = arith.addf %638, %642 : vector<1x8xf32>
    %644 = vector.broadcast %635 : vector<1x1xf32> to vector<1x8xf32>
    %645 = arith.mulf %643, %644 : vector<1x8xf32>
    %c24_229 = arith.constant 24 : index
    %c0_230 = arith.constant 0 : index
    %646 = vector.load %arg38[%c24_229, %c0_230] : memref<32x32xf32, #tpu.memory_space<vmem>>, vector<8x32xf32>
    %647 = arith.truncf %645 : vector<1x8xf32> to vector<1x8xbf16>
    %648 = arith.truncf %646 : vector<8x32xf32> to vector<8x32xbf16>
    %cst_231 = arith.constant dense<0.000000e+00> : vector<1x32xf32>
    %649 = tpu.matmul %647, %648, %cst_231 {dimension_numbers = #tpu.dot_dimension_numbers<[1], [0], [0], [1], [0, 0, 1, 1], [], []>} : vector<1x8xbf16>, vector<8x32xbf16>, vector<1x32xf32> -> vector<1x32xf32>
    %650 = arith.addf %606, %649 : vector<1x32xf32>
    %c0_232 = arith.constant 0 : index
    %c0_233 = arith.constant 0 : index
    %651 = vector.load %arg39[%c0_232, %c0_233] : memref<1x32xf32, #tpu.memory_space<vmem>>, vector<1x32xf32>
    %652 = arith.addf %650, %651 : vector<1x32xf32>
    %653 = arith.addf %397, %652 : vector<1x32xf32>
    %cst_234 = arith.constant dense<0.000000e+00> : vector<1xf32>
    %654 = vector.multi_reduction <add>, %653, %cst_234 [1] : vector<1x32xf32> to vector<1xf32>
    %655 = vector.shape_cast %654 : vector<1xf32> to vector<1x1xf32>
    %cst_235 = arith.constant 3.200000e+01 : f32
    %656 = vector.broadcast %cst_235 : f32 to vector<1x1xf32>
    %657 = arith.divf %655, %656 : vector<1x1xf32>
    %658 = vector.broadcast %657 : vector<1x1xf32> to vector<1x32xf32>
    %659 = arith.subf %653, %658 : vector<1x32xf32>
    %660 = arith.mulf %659, %659 : vector<1x32xf32>
    %cst_236 = arith.constant dense<0.000000e+00> : vector<1xf32>
    %661 = vector.multi_reduction <add>, %660, %cst_236 [1] : vector<1x32xf32> to vector<1xf32>
    %662 = vector.shape_cast %661 : vector<1xf32> to vector<1x1xf32>
    %cst_237 = arith.constant 3.200000e+01 : f32
    %663 = vector.broadcast %cst_237 : f32 to vector<1x1xf32>
    %664 = arith.divf %662, %663 : vector<1x1xf32>
    %665 = vector.broadcast %657 : vector<1x1xf32> to vector<1x32xf32>
    %666 = arith.subf %653, %665 : vector<1x32xf32>
    %cst_238 = arith.constant 9.99999974E-6 : f32
    %667 = vector.broadcast %cst_238 : f32 to vector<1x1xf32>
    %668 = arith.addf %664, %667 : vector<1x1xf32>
    %669 = math.rsqrt %668 : vector<1x1xf32>
    %670 = vector.broadcast %669 : vector<1x1xf32> to vector<1x32xf32>
    %671 = arith.mulf %666, %670 : vector<1x32xf32>
    %c0_239 = arith.constant 0 : index
    %c0_240 = arith.constant 0 : index
    %672 = vector.load %arg40[%c0_239, %c0_240] : memref<1x32xf32, #tpu.memory_space<vmem>>, vector<1x32xf32>
    %673 = arith.mulf %671, %672 : vector<1x32xf32>
    %c0_241 = arith.constant 0 : index
    %c0_242 = arith.constant 0 : index
    %674 = vector.load %arg41[%c0_241, %c0_242] : memref<1x32xf32, #tpu.memory_space<vmem>>, vector<1x32xf32>
    %675 = arith.addf %673, %674 : vector<1x32xf32>
    %676 = arith.truncf %675 : vector<1x32xf32> to vector<1x32xbf16>
    %c0_243 = arith.constant 0 : index
    %c0_244 = arith.constant 0 : index
    %677 = vector.load %arg42[%c0_243, %c0_244] : memref<32x128xf32, #tpu.memory_space<vmem>>, vector<32x128xf32>
    %678 = arith.truncf %677 : vector<32x128xf32> to vector<32x128xbf16>
    %cst_245 = arith.constant dense<0.000000e+00> : vector<1x128xf32>
    %679 = tpu.matmul %676, %678, %cst_245 {dimension_numbers = #tpu.dot_dimension_numbers<[1], [0], [0], [1], [0, 0, 1, 1], [], []>} : vector<1x32xbf16>, vector<32x128xbf16>, vector<1x128xf32> -> vector<1x128xf32>
    %c0_246 = arith.constant 0 : index
    %c0_247 = arith.constant 0 : index
    %680 = vector.load %arg43[%c0_246, %c0_247] : memref<1x128xf32, #tpu.memory_space<vmem>>, vector<1x128xf32>
    %681 = arith.addf %679, %680 : vector<1x128xf32>
    %cst_248 = arith.constant 5.000000e-01 : f32
    %682 = vector.broadcast %cst_248 : f32 to vector<1x128xf32>
    %683 = arith.mulf %682, %681 : vector<1x128xf32>
    %cst_249 = arith.constant 4.471500e-02 : f32
    %684 = vector.broadcast %cst_249 : f32 to vector<1x128xf32>
    %685 = arith.mulf %684, %681 : vector<1x128xf32>
    %686 = arith.mulf %685, %681 : vector<1x128xf32>
    %687 = arith.mulf %686, %681 : vector<1x128xf32>
    %688 = arith.addf %681, %687 : vector<1x128xf32>
    %cst_250 = arith.constant 0.797884583 : f32
    %689 = vector.broadcast %cst_250 : f32 to vector<1x128xf32>
    %690 = arith.mulf %689, %688 : vector<1x128xf32>
    %691 = math.tanh %690 : vector<1x128xf32>
    %cst_251 = arith.constant 1.000000e+00 : f32
    %692 = vector.broadcast %cst_251 : f32 to vector<1x128xf32>
    %693 = arith.addf %692, %691 : vector<1x128xf32>
    %694 = arith.mulf %683, %693 : vector<1x128xf32>
    %695 = arith.truncf %694 : vector<1x128xf32> to vector<1x128xbf16>
    %c0_252 = arith.constant 0 : index
    %c0_253 = arith.constant 0 : index
    %696 = vector.load %arg44[%c0_252, %c0_253] : memref<128x32xf32, #tpu.memory_space<vmem>>, vector<128x32xf32>
    %697 = arith.truncf %696 : vector<128x32xf32> to vector<128x32xbf16>
    %cst_254 = arith.constant dense<0.000000e+00> : vector<1x32xf32>
    %698 = tpu.matmul %695, %697, %cst_254 {dimension_numbers = #tpu.dot_dimension_numbers<[1], [0], [0], [1], [0, 0, 1, 1], [], []>} : vector<1x128xbf16>, vector<128x32xbf16>, vector<1x32xf32> -> vector<1x32xf32>
    %c0_255 = arith.constant 0 : index
    %c0_256 = arith.constant 0 : index
    %699 = vector.load %arg45[%c0_255, %c0_256] : memref<1x32xf32, #tpu.memory_space<vmem>>, vector<1x32xf32>
    %700 = arith.addf %698, %699 : vector<1x32xf32>
    %701 = arith.addf %653, %700 : vector<1x32xf32>
    %cst_257 = arith.constant dense<0.000000e+00> : vector<1xf32>
    %702 = vector.multi_reduction <add>, %701, %cst_257 [1] : vector<1x32xf32> to vector<1xf32>
    %703 = vector.shape_cast %702 : vector<1xf32> to vector<1x1xf32>
    %cst_258 = arith.constant 3.200000e+01 : f32
    %704 = vector.broadcast %cst_258 : f32 to vector<1x1xf32>
    %705 = arith.divf %703, %704 : vector<1x1xf32>
    %706 = vector.broadcast %705 : vector<1x1xf32> to vector<1x32xf32>
    %707 = arith.subf %701, %706 : vector<1x32xf32>
    %708 = arith.mulf %707, %707 : vector<1x32xf32>
    %cst_259 = arith.constant dense<0.000000e+00> : vector<1xf32>
    %709 = vector.multi_reduction <add>, %708, %cst_259 [1] : vector<1x32xf32> to vector<1xf32>
    %710 = vector.shape_cast %709 : vector<1xf32> to vector<1x1xf32>
    %cst_260 = arith.constant 3.200000e+01 : f32
    %711 = vector.broadcast %cst_260 : f32 to vector<1x1xf32>
    %712 = arith.divf %710, %711 : vector<1x1xf32>
    %713 = vector.broadcast %705 : vector<1x1xf32> to vector<1x32xf32>
    %714 = arith.subf %701, %713 : vector<1x32xf32>
    %cst_261 = arith.constant 9.99999974E-6 : f32
    %715 = vector.broadcast %cst_261 : f32 to vector<1x1xf32>
    %716 = arith.addf %712, %715 : vector<1x1xf32>
    %717 = math.rsqrt %716 : vector<1x1xf32>
    %718 = vector.broadcast %717 : vector<1x1xf32> to vector<1x32xf32>
    %719 = arith.mulf %714, %718 : vector<1x32xf32>
    %c0_262 = arith.constant 0 : index
    %c0_263 = arith.constant 0 : index
    %720 = vector.load %arg46[%c0_262, %c0_263] : memref<1x32xf32, #tpu.memory_space<vmem>>, vector<1x32xf32>
    %721 = arith.mulf %719, %720 : vector<1x32xf32>
    %c0_264 = arith.constant 0 : index
    %c0_265 = arith.constant 0 : index
    %722 = vector.load %arg47[%c0_264, %c0_265] : memref<1x32xf32, #tpu.memory_space<vmem>>, vector<1x32xf32>
    %723 = arith.addf %721, %722 : vector<1x32xf32>
    %724 = arith.truncf %723 : vector<1x32xf32> to vector<1x32xbf16>
    %c0_266 = arith.constant 0 : index
    %c0_267 = arith.constant 0 : index
    %725 = vector.load %arg48[%c0_266, %c0_267] : memref<32x10xf32, #tpu.memory_space<vmem>>, vector<32x10xf32>
    %726 = arith.truncf %725 : vector<32x10xf32> to vector<32x10xbf16>
    %cst_268 = arith.constant dense<0.000000e+00> : vector<1x10xf32>
    %727 = tpu.matmul %724, %726, %cst_268 {dimension_numbers = #tpu.dot_dimension_numbers<[1], [0], [0], [1], [0, 0, 1, 1], [], []>} : vector<1x32xbf16>, vector<32x10xbf16>, vector<1x10xf32> -> vector<1x10xf32>
    %c0_269 = arith.constant 0 : index
    %c0_270 = arith.constant 0 : index
    %728 = vector.load %arg49[%c0_269, %c0_270] : memref<1x10xf32, #tpu.memory_space<vmem>>, vector<1x10xf32>
    %729 = arith.addf %727, %728 : vector<1x10xf32>
    %c0_271 = arith.constant 0 : index
    %c0_272 = arith.constant 0 : index
    %c0_273 = arith.constant 0 : index
    %730 = vector.load %arg50[%c0_271, %c0_272, %c0_273] : memref<1x1x10xf32, #tpu.memory_space<vmem>>, vector<1x1x10xf32>
    %731 = vector.shape_cast %730 : vector<1x1x10xf32> to vector<1x10xf32>
    %732 = vector.shape_cast %729 : vector<1x10xf32> to vector<1x1x10xf32>
    tpu.vector_store %arg50[%c0_271, %c0_272, %c0_273], %732 {strides = array<i32>} : memref<1x1x10xf32, #tpu.memory_space<vmem>>, vector<1x1x10xf32>,
    %c0_274 = arith.constant 0 : index
    %c0_275 = arith.constant 0 : index
    %c0_276 = arith.constant 0 : index
    %733 = vector.load %arg51[%c0_274, %c0_275, %c0_276] : memref<1x1x32xf32, #tpu.memory_space<vmem>>, vector<1x1x32xf32>
    %734 = vector.shape_cast %733 : vector<1x1x32xf32> to vector<1x32xf32>
    %735 = vector.shape_cast %701 : vector<1x32xf32> to vector<1x1x32xf32>
    tpu.vector_store %arg51[%c0_274, %c0_275, %c0_276], %735 {strides = array<i32>} : memref<1x1x32xf32, #tpu.memory_space<vmem>>, vector<1x1x32xf32>,
    return
  }
  func.func @transform_0(%arg0: i32) -> (i32, i32, i32) {
    %c0_i32 = arith.constant 0 : i32
    %c0_i32_0 = arith.constant 0 : i32
    %c0_i32_1 = arith.constant 0 : i32
    return %arg0, %c0_i32, %c0_i32_0 : i32, i32, i32
  }
  func.func @transform_1(%arg0: i32) -> (i32, i32) {
    %c0_i32 = arith.constant 0 : i32
    %c0_i32_0 = arith.constant 0 : i32
    %c0_i32_1 = arith.constant 0 : i32
    return %c0_i32, %c0_i32_0 : i32, i32
  }
  func.func @transform_2(%arg0: i32) -> (i32, i32) {
    %c0_i32 = arith.constant 0 : i32
    %c0_i32_0 = arith.constant 0 : i32
    %c0_i32_1 = arith.constant 0 : i32
    return %c0_i32, %c0_i32_0 : i32, i32
  }
  func.func @transform_3(%arg0: i32) -> (i32, i32) {
    %c0_i32 = arith.constant 0 : i32
    %c0_i32_0 = arith.constant 0 : i32
    %c0_i32_1 = arith.constant 0 : i32
    return %c0_i32, %c0_i32_0 : i32, i32
  }
  func.func @transform_4(%arg0: i32) -> (i32, i32) {
    %c0_i32 = arith.constant 0 : i32
    %c0_i32_0 = arith.constant 0 : i32
    %c0_i32_1 = arith.constant 0 : i32
    return %c0_i32, %c0_i32_0 : i32, i32
  }
  func.func @transform_5(%arg0: i32) -> (i32, i32) {
    %c0_i32 = arith.constant 0 : i32
    %c0_i32_0 = arith.constant 0 : i32
    %c0_i32_1 = arith.constant 0 : i32
    return %c0_i32, %c0_i32_0 : i32, i32
  }
  func.func @transform_6(%arg0: i32) -> (i32, i32) {
    %c0_i32 = arith.constant 0 : i32
    %c0_i32_0 = arith.constant 0 : i32
    %c0_i32_1 = arith.constant 0 : i32
    return %c0_i32, %c0_i32_0 : i32, i32
  }
  func.func @transform_7(%arg0: i32) -> (i32, i32) {
    %c0_i32 = arith.constant 0 : i32
    %c0_i32_0 = arith.constant 0 : i32
    %c0_i32_1 = arith.constant 0 : i32
    return %c0_i32, %c0_i32_0 : i32, i32
  }
  func.func @transform_8(%arg0: i32) -> (i32, i32) {
    %c0_i32 = arith.constant 0 : i32
    %c0_i32_0 = arith.constant 0 : i32
    %c0_i32_1 = arith.constant 0 : i32
    return %c0_i32, %c0_i32_0 : i32, i32
  }
  func.func @transform_9(%arg0: i32) -> (i32, i32) {
    %c0_i32 = arith.constant 0 : i32
    %c0_i32_0 = arith.constant 0 : i32
    %c0_i32_1 = arith.constant 0 : i32
    return %c0_i32, %c0_i32_0 : i32, i32
  }
  func.func @transform_10(%arg0: i32) -> (i32, i32) {
    %c0_i32 = arith.constant 0 : i32
    %c0_i32_0 = arith.constant 0 : i32
    %c0_i32_1 = arith.constant 0 : i32
    return %c0_i32, %c0_i32_0 : i32, i32
  }
  func.func @transform_11(%arg0: i32) -> (i32, i32) {
    %c0_i32 = arith.constant 0 : i32
    %c0_i32_0 = arith.constant 0 : i32
    %c0_i32_1 = arith.constant 0 : i32
    return %c0_i32, %c0_i32_0 : i32, i32
  }
  func.func @transform_12(%arg0: i32) -> (i32, i32) {
    %c0_i32 = arith.constant 0 : i32
    %c0_i32_0 = arith.constant 0 : i32
    %c0_i32_1 = arith.constant 0 : i32
    return %c0_i32, %c0_i32_0 : i32, i32
  }
  func.func @transform_13(%arg0: i32) -> (i32, i32) {
    %c0_i32 = arith.constant 0 : i32
    %c0_i32_0 = arith.constant 0 : i32
    %c0_i32_1 = arith.constant 0 : i32
    return %c0_i32, %c0_i32_0 : i32, i32
  }
  func.func @transform_14(%arg0: i32) -> (i32, i32) {
    %c0_i32 = arith.constant 0 : i32
    %c0_i32_0 = arith.constant 0 : i32
    %c0_i32_1 = arith.constant 0 : i32
    return %c0_i32, %c0_i32_0 : i32, i32
  }
  func.func @transform_15(%arg0: i32) -> (i32, i32) {
    %c0_i32 = arith.constant 0 : i32
    %c0_i32_0 = arith.constant 0 : i32
    %c0_i32_1 = arith.constant 0 : i32
    return %c0_i32, %c0_i32_0 : i32, i32
  }
  func.func @transform_16(%arg0: i32) -> (i32, i32) {
    %c0_i32 = arith.constant 0 : i32
    %c0_i32_0 = arith.constant 0 : i32
    %c0_i32_1 = arith.constant 0 : i32
    return %c0_i32, %c0_i32_0 : i32, i32
  }
  func.func @transform_17(%arg0: i32) -> (i32, i32) {
    %c0_i32 = arith.constant 0 : i32
    %c0_i32_0 = arith.constant 0 : i32
    %c0_i32_1 = arith.constant 0 : i32
    return %c0_i32, %c0_i32_0 : i32, i32
  }
  func.func @transform_18(%arg0: i32) -> (i32, i32) {
    %c0_i32 = arith.constant 0 : i32
    %c0_i32_0 = arith.constant 0 : i32
    %c0_i32_1 = arith.constant 0 : i32
    return %c0_i32, %c0_i32_0 : i32, i32
  }
  func.func @transform_19(%arg0: i32) -> (i32, i32) {
    %c0_i32 = arith.constant 0 : i32
    %c0_i32_0 = arith.constant 0 : i32
    %c0_i32_1 = arith.constant 0 : i32
    return %c0_i32, %c0_i32_0 : i32, i32
  }
  func.func @transform_20(%arg0: i32) -> (i32, i32) {
    %c0_i32 = arith.constant 0 : i32
    %c0_i32_0 = arith.constant 0 : i32
    %c0_i32_1 = arith.constant 0 : i32
    return %c0_i32, %c0_i32_0 : i32, i32
  }
  func.func @transform_21(%arg0: i32) -> (i32, i32) {
    %c0_i32 = arith.constant 0 : i32
    %c0_i32_0 = arith.constant 0 : i32
    %c0_i32_1 = arith.constant 0 : i32
    return %c0_i32, %c0_i32_0 : i32, i32
  }
  func.func @transform_22(%arg0: i32) -> (i32, i32) {
    %c0_i32 = arith.constant 0 : i32
    %c0_i32_0 = arith.constant 0 : i32
    %c0_i32_1 = arith.constant 0 : i32
    return %c0_i32, %c0_i32_0 : i32, i32
  }
  func.func @transform_23(%arg0: i32) -> (i32, i32) {
    %c0_i32 = arith.constant 0 : i32
    %c0_i32_0 = arith.constant 0 : i32
    %c0_i32_1 = arith.constant 0 : i32
    return %c0_i32, %c0_i32_0 : i32, i32
  }
  func.func @transform_24(%arg0: i32) -> (i32, i32) {
    %c0_i32 = arith.constant 0 : i32
    %c0_i32_0 = arith.constant 0 : i32
    %c0_i32_1 = arith.constant 0 : i32
    return %c0_i32, %c0_i32_0 : i32, i32
  }
  func.func @transform_25(%arg0: i32) -> (i32, i32) {
    %c0_i32 = arith.constant 0 : i32
    %c0_i32_0 = arith.constant 0 : i32
    %c0_i32_1 = arith.constant 0 : i32
    return %c0_i32, %c0_i32_0 : i32, i32
  }
  func.func @transform_26(%arg0: i32) -> (i32, i32) {
    %c0_i32 = arith.constant 0 : i32
    %c0_i32_0 = arith.constant 0 : i32
    %c0_i32_1 = arith.constant 0 : i32
    return %c0_i32, %c0_i32_0 : i32, i32
  }
  func.func @transform_27(%arg0: i32) -> (i32, i32) {
    %c0_i32 = arith.constant 0 : i32
    %c0_i32_0 = arith.constant 0 : i32
    %c0_i32_1 = arith.constant 0 : i32
    return %c0_i32, %c0_i32_0 : i32, i32
  }
  func.func @transform_28(%arg0: i32) -> (i32, i32) {
    %c0_i32 = arith.constant 0 : i32
    %c0_i32_0 = arith.constant 0 : i32
    %c0_i32_1 = arith.constant 0 : i32
    return %c0_i32, %c0_i32_0 : i32, i32
  }
  func.func @transform_29(%arg0: i32) -> (i32, i32) {
    %c0_i32 = arith.constant 0 : i32
    %c0_i32_0 = arith.constant 0 : i32
    %c0_i32_1 = arith.constant 0 : i32
    return %c0_i32, %c0_i32_0 : i32, i32
  }
  func.func @transform_30(%arg0: i32) -> (i32, i32) {
    %c0_i32 = arith.constant 0 : i32
    %c0_i32_0 = arith.constant 0 : i32
    %c0_i32_1 = arith.constant 0 : i32
    return %c0_i32, %c0_i32_0 : i32, i32
  }
  func.func @transform_31(%arg0: i32) -> (i32, i32) {
    %c0_i32 = arith.constant 0 : i32
    %c0_i32_0 = arith.constant 0 : i32
    %c0_i32_1 = arith.constant 0 : i32
    return %c0_i32, %c0_i32_0 : i32, i32
  }
  func.func @transform_32(%arg0: i32) -> (i32, i32) {
    %c0_i32 = arith.constant 0 : i32
    %c0_i32_0 = arith.constant 0 : i32
    %c0_i32_1 = arith.constant 0 : i32
    return %c0_i32, %c0_i32_0 : i32, i32
  }
  func.func @transform_33(%arg0: i32) -> (i32, i32) {
    %c0_i32 = arith.constant 0 : i32
    %c0_i32_0 = arith.constant 0 : i32
    %c0_i32_1 = arith.constant 0 : i32
    return %c0_i32, %c0_i32_0 : i32, i32
  }
  func.func @transform_34(%arg0: i32) -> (i32, i32) {
    %c0_i32 = arith.constant 0 : i32
    %c0_i32_0 = arith.constant 0 : i32
    %c0_i32_1 = arith.constant 0 : i32
    return %c0_i32, %c0_i32_0 : i32, i32
  }
  func.func @transform_35(%arg0: i32) -> (i32, i32) {
    %c0_i32 = arith.constant 0 : i32
    %c0_i32_0 = arith.constant 0 : i32
    %c0_i32_1 = arith.constant 0 : i32
    return %c0_i32, %c0_i32_0 : i32, i32
  }
  func.func @transform_36(%arg0: i32) -> (i32, i32) {
    %c0_i32 = arith.constant 0 : i32
    %c0_i32_0 = arith.constant 0 : i32
    %c0_i32_1 = arith.constant 0 : i32
    return %c0_i32, %c0_i32_0 : i32, i32
  }
  func.func @transform_37(%arg0: i32) -> (i32, i32) {
    %c0_i32 = arith.constant 0 : i32
    %c0_i32_0 = arith.constant 0 : i32
    %c0_i32_1 = arith.constant 0 : i32
    return %c0_i32, %c0_i32_0 : i32, i32
  }
  func.func @transform_38(%arg0: i32) -> (i32, i32) {
    %c0_i32 = arith.constant 0 : i32
    %c0_i32_0 = arith.constant 0 : i32
    %c0_i32_1 = arith.constant 0 : i32
    return %c0_i32, %c0_i32_0 : i32, i32
  }
  func.func @transform_39(%arg0: i32) -> (i32, i32) {
    %c0_i32 = arith.constant 0 : i32
    %c0_i32_0 = arith.constant 0 : i32
    %c0_i32_1 = arith.constant 0 : i32
    return %c0_i32, %c0_i32_0 : i32, i32
  }
  func.func @transform_40(%arg0: i32) -> (i32, i32) {
    %c0_i32 = arith.constant 0 : i32
    %c0_i32_0 = arith.constant 0 : i32
    %c0_i32_1 = arith.constant 0 : i32
    return %c0_i32, %c0_i32_0 : i32, i32
  }
  func.func @transform_41(%arg0: i32) -> (i32, i32) {
    %c0_i32 = arith.constant 0 : i32
    %c0_i32_0 = arith.constant 0 : i32
    %c0_i32_1 = arith.constant 0 : i32
    return %c0_i32, %c0_i32_0 : i32, i32
  }
  func.func @transform_42(%arg0: i32) -> (i32, i32) {
    %c0_i32 = arith.constant 0 : i32
    %c0_i32_0 = arith.constant 0 : i32
    %c0_i32_1 = arith.constant 0 : i32
    return %c0_i32, %c0_i32_0 : i32, i32
  }
  func.func @transform_43(%arg0: i32) -> (i32, i32) {
    %c0_i32 = arith.constant 0 : i32
    %c0_i32_0 = arith.constant 0 : i32
    %c0_i32_1 = arith.constant 0 : i32
    return %c0_i32, %c0_i32_0 : i32, i32
  }
  func.func @transform_44(%arg0: i32) -> (i32, i32) {
    %c0_i32 = arith.constant 0 : i32
    %c0_i32_0 = arith.constant 0 : i32
    %c0_i32_1 = arith.constant 0 : i32
    return %c0_i32, %c0_i32_0 : i32, i32
  }
  func.func @transform_45(%arg0: i32) -> (i32, i32) {
    %c0_i32 = arith.constant 0 : i32
    %c0_i32_0 = arith.constant 0 : i32
    %c0_i32_1 = arith.constant 0 : i32
    return %c0_i32, %c0_i32_0 : i32, i32
  }
  func.func @transform_46(%arg0: i32) -> (i32, i32) {
    %c0_i32 = arith.constant 0 : i32
    %c0_i32_0 = arith.constant 0 : i32
    %c0_i32_1 = arith.constant 0 : i32
    return %c0_i32, %c0_i32_0 : i32, i32
  }
  func.func @transform_47(%arg0: i32) -> (i32, i32) {
    %c0_i32 = arith.constant 0 : i32
    %c0_i32_0 = arith.constant 0 : i32
    %c0_i32_1 = arith.constant 0 : i32
    return %c0_i32, %c0_i32_0 : i32, i32
  }
  func.func @transform_48(%arg0: i32) -> (i32, i32) {
    %c0_i32 = arith.constant 0 : i32
    %c0_i32_0 = arith.constant 0 : i32
    %c0_i32_1 = arith.constant 0 : i32
    return %c0_i32, %c0_i32_0 : i32, i32
  }
  func.func @transform_49(%arg0: i32) -> (i32, i32, i32) {
    %c0_i32 = arith.constant 0 : i32
    %c0_i32_0 = arith.constant 0 : i32
    %c0_i32_1 = arith.constant 0 : i32
    return %arg0, %c0_i32, %c0_i32_0 : i32, i32, i32
  }
  func.func @transform_50(%arg0: i32) -> (i32, i32, i32) {
    %c0_i32 = arith.constant 0 : i32
    %c0_i32_0 = arith.constant 0 : i32
    %c0_i32_1 = arith.constant 0 : i32
    return %arg0, %c0_i32, %c0_i32_0 : i32, i32, i32
  }
}

</mosaic_0001>

<llo_original>
// kernel: dytox_forward.1
$region0: #{dytox_forward.1}
  #allocation0 [shape = 'u32[]', space=smem, size = 0x4, offset = 0x4, fixed_abs, tag = 'smem constant byte address 0x4 - core index']
  #allocation1 [shape = 'u32[72,128]{1,0:T(1,128)}', space=vmem, size = 0x9000, scoped, tag = 'internal scratch']
  %s0 = inlined_call_operand.smem [shape: u32[51], index: -1, kind: input, shape index: {}]
  %s1 = sld [smem:[%s0]]
  %s2 = scalar_lea.smem %s0, 1
  %s3 = sld [smem:[%s2]]
  %s4 = scalar_lea.smem %s0, 2
  %s5 = sld [smem:[%s4]]
  %s6 = scalar_lea.smem %s0, 3
  %s7 = sld [smem:[%s6]]
  %s8 = scalar_lea.smem %s0, 4
  %s9 = sld [smem:[%s8]]
  %s10 = scalar_lea.smem %s0, 5
  %s11 = sld [smem:[%s10]]
  %s12 = scalar_lea.smem %s0, 6
  %s13 = sld [smem:[%s12]]
  %s14 = scalar_lea.smem %s0, 7
  %s15 = sld [smem:[%s14]]
  %s16 = scalar_lea.smem %s0, 8
  %s17 = sld [smem:[%s16]]
  %s18 = scalar_lea.smem %s0, 9
  %s19 = sld [smem:[%s18]]
  %s20 = scalar_lea.smem %s0, 10
  %s21 = sld [smem:[%s20]]
  %s22 = scalar_lea.smem %s0, 11
  %s23 = sld [smem:[%s22]]
  %s24 = scalar_lea.smem %s0, 12
  %s25 = sld [smem:[%s24]]
  %s26 = scalar_lea.smem %s0, 13
  %s27 = sld [smem:[%s26]]
  %s28 = scalar_lea.smem %s0, 14
  %s29 = sld [smem:[%s28]]
  %s30 = scalar_lea.smem %s0, 15
  %s31 = sld [smem:[%s30]]
  %s32 = scalar_lea.smem %s0, 16
  %s33 = sld [smem:[%s32]]
  %s34 = scalar_lea.smem %s0, 17
  %s35 = sld [smem:[%s34]]
  %s36 = scalar_lea.smem %s0, 18
  %s37 = sld [smem:[%s36]]
  %s38 = scalar_lea.smem %s0, 19
  %s39 = sld [smem:[%s38]]
  %s40 = scalar_lea.smem %s0, 20
  %s41 = sld [smem:[%s40]]
  %s42 = scalar_lea.smem %s0, 21
  %s43 = sld [smem:[%s42]]
  %s44 = scalar_lea.smem %s0, 22
  %s45 = sld [smem:[%s44]]
  %s46 = scalar_lea.smem %s0, 23
  %s47 = sld [smem:[%s46]]
  %s48 = scalar_lea.smem %s0, 24
  %s49 = sld [smem:[%s48]]
  %s50 = scalar_lea.smem %s0, 25
  %s51 = sld [smem:[%s50]]
  %s52 = scalar_lea.smem %s0, 26
  %s53 = sld [smem:[%s52]]
  %s54 = scalar_lea.smem %s0, 27
  %s55 = sld [smem:[%s54]]
  %s56 = scalar_lea.smem %s0, 28
  %s57 = sld [smem:[%s56]]
  %s58 = scalar_lea.smem %s0, 29
  %s59 = sld [smem:[%s58]]
  %s60 = scalar_lea.smem %s0, 30
  %s61 = sld [smem:[%s60]]
  %s62 = scalar_lea.smem %s0, 31
  %s63 = sld [smem:[%s62]]
  %s64 = scalar_lea.smem %s0, 32
  %s65 = sld [smem:[%s64]]
  %s66 = scalar_lea.smem %s0, 33
  %s67 = sld [smem:[%s66]]
  %s68 = scalar_lea.smem %s0, 34
  %s69 = sld [smem:[%s68]]
  %s70 = scalar_lea.smem %s0, 35
  %s71 = sld [smem:[%s70]]
  %s72 = scalar_lea.smem %s0, 36
  %s73 = sld [smem:[%s72]]
  %s74 = scalar_lea.smem %s0, 37
  %s75 = sld [smem:[%s74]]
  %s76 = scalar_lea.smem %s0, 38
  %s77 = sld [smem:[%s76]]
  %s78 = scalar_lea.smem %s0, 39
  %s79 = sld [smem:[%s78]]
  %s80 = scalar_lea.smem %s0, 40
  %s81 = sld [smem:[%s80]]
  %s82 = scalar_lea.smem %s0, 41
  %s83 = sld [smem:[%s82]]
  %s84 = scalar_lea.smem %s0, 42
  %s85 = sld [smem:[%s84]]
  %s86 = scalar_lea.smem %s0, 43
  %s87 = sld [smem:[%s86]]
  %s88 = scalar_lea.smem %s0, 44
  %s89 = sld [smem:[%s88]]
  %s90 = scalar_lea.smem %s0, 45
  %s91 = sld [smem:[%s90]]
  %s92 = scalar_lea.smem %s0, 46
  %s93 = sld [smem:[%s92]]
  %s94 = scalar_lea.smem %s0, 47
  %s95 = sld [smem:[%s94]]
  %s96 = scalar_lea.smem %s0, 48
  %s97 = sld [smem:[%s96]]
  %s98 = scalar_lea.smem %s0, 49
  %s99 = sld [smem:[%s98]]
  %s100 = scalar_lea.smem %s0, 50
  %s101 = sld [smem:[%s100]]
  %102 = xla_tuple %s99, %s101
  %s103 = sld [smem:[#allocation0]]
  $region269: #{dytox_forward.1} parent=0
    _
  %s105 = ssub.s32 1, %s103
  %s106 = scalar_select 0, %s105, %s103
  $region1: #{dytox_forward.1} parent=0
    #allocation2 [shape = 'u8[512]{0}', space=vmem, size = 0x400, scoped, tag = 'input window, operand 38, single buffered']
    #allocation3 [shape = 's32[2]{0}', space=sflag, size = 0x8, scoped, tag = 'scoped memory for dytox_forward.1']
    #allocation4 [shape = 's32[2]{0}', space=sflag, size = 0x8, scoped, tag = 'scoped memory for dytox_forward.1']
    #allocation5 [shape = 'u8[512]{0}', space=vmem, size = 0x400, scoped, tag = 'input window, operand 39, single buffered']
    #allocation6 [shape = 's32[1]{0}', space=sflag, size = 0x4, scoped, tag = 'scoped memory for dytox_forward.1']
    #allocation7 [shape = 'u8[512]{0}', space=vmem, size = 0x400, scoped, tag = 'input window, operand 40, single buffered']
    #allocation8 [shape = 'u8[512]{0}', space=vmem, size = 0x400, scoped, tag = 'input window, operand 42, single buffered']
    #allocation9 [shape = 's32[1]{0}', space=sflag, size = 0x4, scoped, tag = 'scoped memory for dytox_forward.1']
    #allocation10 [shape = 'u8[512]{0}', space=vmem, size = 0x400, scoped, tag = 'input window, operand 44, single buffered']
    #allocation11 [shape = 'u8[512]{0}', space=vmem, size = 0x400, scoped, tag = 'input window, operand 45, single buffered']
    #allocation12 [shape = 's32[1]{0}', space=sflag, size = 0x4, scoped, tag = 'scoped memory for dytox_forward.1']
    #allocation13 [shape = 'u8[512]{0}', space=vmem, size = 0x400, scoped, tag = 'input window, operand 46, single buffered']
    #allocation14 [shape = 'u8[512]{0}', space=vmem, size = 0x400, scoped, tag = 'input window, operand 48, single buffered']
    #allocation15 [shape = 's32[1]{0}', space=sflag, size = 0x4, scoped, tag = 'scoped memory for dytox_forward.1']
    #allocation16 [shape = 'u8[1024]{0}', space=vmem, size = 0x400, scoped, tag = 'output window, operand 0']
    #allocation17 [shape = 'u8[1024]{0}', space=vmem, size = 0x400, scoped, tag = 'output window, operand 1']
    #allocation18 [shape = 's32[2]{0}', space=sflag, size = 0x8, scoped, tag = 'scoped memory for dytox_forward.1']
    %107 = vsyncpa [#allocation3], 0
    %108 = vsyncpa [#allocation6], 0
    %109 = vsyncpa [#allocation9], 0
    %110 = vsyncpa [#allocation12], 0
    %111 = vsyncpa [#allocation15], 0
    %112 = vsyncpa [#allocation4], 0
    %s113 = scalar_lea.sflag [#allocation4], 1
    %114 = vsyncpa %s113, 0
    %115 = vsyncpa [#allocation18], 0
    %s116 = scalar_lea.sflag [#allocation18], 1
    %117 = vsyncpa %s116, 0
    loop: start=0, step=1, limit=4
    $region2: #{dytox_forward.1} parent=1 // loop_pre_header
      _
    $region3: #{dytox_forward.1} parent=1 // loop_header
      %s119 = sphi 0, %s123
      %p120 = scmp.ge.s32.totalorder %s119, 4
      %s129 = sphi 0, %s131
      %s132 = sphi 0, %s129
      %s133 = sphi 0, %s132
      %s149 = sphi 0, %s133
      %s153 = sphi 0, %s153
      %s155 = sphi 0, %s153
      %s156 = sphi 0, %s155
      %s170 = sphi 0, %s156
      %s174 = sphi 0, %s174
      %s176 = sphi 0, %s174
      %s177 = sphi 0, %s176
      %s191 = sphi 0, %s177
      %s195 = sphi 0, %s195
      %s197 = sphi 0, %s195
      %s198 = sphi 0, %s197
      %s212 = sphi 0, %s198
      %s216 = sphi 0, %s216
      %s218 = sphi 0, %s216
      %s219 = sphi 0, %s218
      %s233 = sphi 0, %s219
      %s237 = sphi 0, %s237
      %s239 = sphi 0, %s237
      %s240 = sphi 0, %s239
      %s254 = sphi 0, %s240
      %s258 = sphi 0, %s258
      %s260 = sphi 0, %s258
      %s261 = sphi 0, %s260
      %s275 = sphi 0, %s261
      %s279 = sphi 0, %s279
      %s281 = sphi 0, %s279
      %s282 = sphi 0, %s281
      %s296 = sphi 0, %s282
      %s300 = sphi 0, %s300
      %s302 = sphi 0, %s300
      %s303 = sphi 0, %s302
      %s317 = sphi 0, %s303
      %s321 = sphi 0, %s321
      %s323 = sphi 0, %s321
      %s324 = sphi 0, %s323
      %s338 = sphi 0, %s324
      %s342 = sphi 0, %s342
      %s344 = sphi 0, %s342
      %s345 = sphi 0, %s344
      %s359 = sphi 0, %s345
      %s363 = sphi 0, %s363
      %s365 = sphi 0, %s363
      %s366 = sphi 0, %s365
      %s380 = sphi 0, %s366
      %s384 = sphi 0, %s384
      %s386 = sphi 0, %s384
      %s387 = sphi 0, %s386
      %s401 = sphi 0, %s387
      %s405 = sphi 0, %s405
      %s407 = sphi 0, %s405
      %s408 = sphi 0, %s407
      %s422 = sphi 0, %s408
      %s426 = sphi 0, %s426
      %s428 = sphi 0, %s426
      %s429 = sphi 0, %s428
      %s443 = sphi 0, %s429
      %s447 = sphi 0, %s447
      %s449 = sphi 0, %s447
      %s450 = sphi 0, %s449
      %s464 = sphi 0, %s450
      %s468 = sphi 0, %s468
      %s470 = sphi 0, %s468
      %s471 = sphi 0, %s470
      %s485 = sphi 0, %s471
      %s489 = sphi 0, %s489
      %s491 = sphi 0, %s489
      %s492 = sphi 0, %s491
      %s506 = sphi 0, %s492
      %s510 = sphi 0, %s510
      %s512 = sphi 0, %s510
      %s513 = sphi 0, %s512
      %s527 = sphi 0, %s513
      %s531 = sphi 0, %s531
      %s533 = sphi 0, %s531
      %s534 = sphi 0, %s533
      %s548 = sphi 0, %s534
      %s552 = sphi 0, %s552
      %s554 = sphi 0, %s552
      %s555 = sphi 0, %s554
      %s569 = sphi 0, %s555
      %s573 = sphi 0, %s573
      %s575 = sphi 0, %s573
      %s576 = sphi 0, %s575
      %s590 = sphi 0, %s576
      %s594 = sphi 0, %s594
      %s596 = sphi 0, %s594
      %s597 = sphi 0, %s596
      %s611 = sphi 0, %s597
      %s615 = sphi 0, %s615
      %s617 = sphi 0, %s615
      %s618 = sphi 0, %s617
      %s632 = sphi 0, %s618
      %s636 = sphi 0, %s636
      %s638 = sphi 0, %s636
      %s639 = sphi 0, %s638
      %s653 = sphi 0, %s639
      %s657 = sphi 0, %s657
      %s659 = sphi 0, %s657
      %s660 = sphi 0, %s659
      %s674 = sphi 0, %s660
      %s678 = sphi 0, %s678
      %s680 = sphi 0, %s678
      %s681 = sphi 0, %s680
      %s695 = sphi 0, %s681
      %s699 = sphi 0, %s699
      %s701 = sphi 0, %s699
      %s702 = sphi 0, %s701
      %s716 = sphi 0, %s702
      %s720 = sphi 0, %s720
      %s722 = sphi 0, %s720
      %s723 = sphi 0, %s722
      %s737 = sphi 0, %s723
      %s741 = sphi 0, %s741
      %s743 = sphi 0, %s741
      %s744 = sphi 0, %s743
      %s758 = sphi 0, %s744
      %s762 = sphi 0, %s762
      %s764 = sphi 0, %s762
      %s765 = sphi 0, %s764
      %s779 = sphi 0, %s765
      %s783 = sphi 0, %s783
      %s785 = sphi 0, %s783
      %s786 = sphi 0, %s785
      %s800 = sphi 0, %s786
      %s804 = sphi 0, %s804
      %s806 = sphi 0, %s804
      %s807 = sphi 0, %s806
      %s821 = sphi 0, %s807
      %s825 = sphi 0, %s825
      %s827 = sphi 0, %s825
      %s828 = sphi 0, %s827
      %s842 = sphi 0, %s828
      %s846 = sphi 0, %s846
      %s848 = sphi 0, %s846
      %s849 = sphi 0, %s848
      %s863 = sphi 0, %s849
      %s867 = sphi 0, %s867
      %s869 = sphi 0, %s867
      %s870 = sphi 0, %s869
      %s884 = sphi 0, %s870
      %s888 = sphi 0, %s888
      %s890 = sphi 0, %s888
      %s891 = sphi 0, %s890
      %s905 = sphi 0, %s891
      %s909 = sphi 0, %s909
      %s911 = sphi 0, %s909
      %s912 = sphi 0, %s911
      %s926 = sphi 0, %s912
      %s930 = sphi 0, %s930
      %s932 = sphi 0, %s930
      %s933 = sphi 0, %s932
      %s947 = sphi 0, %s933
      %s951 = sphi 0, %s951
      %s953 = sphi 0, %s951
      %s954 = sphi 0, %s953
      %s968 = sphi 0, %s954
      %s972 = sphi 0, %s972
      %s974 = sphi 0, %s972
      %s975 = sphi 0, %s974
      %s989 = sphi 0, %s975
      %s993 = sphi 0, %s993
      %s995 = sphi 0, %s993
      %s996 = sphi 0, %s995
      %s1010 = sphi 0, %s996
      %s1014 = sphi 0, %s1014
      %s1016 = sphi 0, %s1014
      %s1017 = sphi 0, %s1016
      %s1031 = sphi 0, %s1017
      %s1035 = sphi 0, %s1035
      %s1037 = sphi 0, %s1035
      %s1038 = sphi 0, %s1037
      %s1052 = sphi 0, %s1038
      %s1056 = sphi 0, %s1056
      %s1058 = sphi 0, %s1056
      %s1059 = sphi 0, %s1058
      %s1073 = sphi 0, %s1059
      %s1077 = sphi 0, %s1077
      %s1079 = sphi 0, %s1077
      %s1080 = sphi 0, %s1079
      %s1094 = sphi 0, %s1080
      %s1098 = sphi 0, %s1098
      %s1100 = sphi 0, %s1098
      %s1101 = sphi 0, %s1100
      %s1115 = sphi 0, %s1101
      %s1119 = sphi 0, %s1119
      %s1121 = sphi 0, %s1119
      %s1122 = sphi 0, %s1121
      %s1136 = sphi 0, %s1122
      %s1140 = sphi 0, %s1140
      %s1142 = sphi 0, %s1140
      %s1143 = sphi 0, %s1142
      %s1157 = sphi 0, %s1143
      %s1163 = sphi 0, %s1165
      %s1166 = sphi 0, %s1163
      %s1167 = sphi 0, %s1166
      %s1183 = sphi 0, %s1167
      %s1189 = sphi 0, %s1191
      %s1192 = sphi 0, %s1189
      %s1193 = sphi 0, %s1192
      %s1209 = sphi 0, %s1193
    $region4: #{dytox_forward.1} parent=1 // loop_header_branch
      %122 = sbr.rel (%p120) target = $region8
    $region5: #{dytox_forward.1} parent=1 // loop_body
      %s124 = ssub.s32 %s119, 1
      %s125 = ssub.s32 %s119, 2
      %s126 = sadd.s32 %s119, 1
      %s127 = ssub.s32 %s119, %s126
      %p128 = scmp.eq.s32.totalorder %s127, 0
      %s130 = sadd.s32 %s129, 1
      %s131 = scalar_select %p128, %s129, %s130
      %p134 = pneg %p128
      %p135 = scmp.eq.s32.totalorder %s119, 1
      %p136 = por %p134, %p135
      %p137 = scmp.ne.s32.totalorder %s129, %s132
      %p138 = scmp.eq.s32.totalorder %s119, 0
      %p139 = por %p137, %p138
      %p140 = scmp.ne.s32.totalorder %s129, %s132
      %p141 = scmp.eq.s32.totalorder %s124, 1
      %p142 = por %p140, %p141
      %p143 = scmp.ne.s32.totalorder %s132, %s133
      %p144 = scmp.eq.s32.totalorder %s124, 0
      %p145 = por %p143, %p144
      %p146 = scmp.ne.s32.totalorder %s132, %s133
      %p147 = scmp.eq.s32.totalorder %s125, 1
      %p148 = por %p146, %p147
      %p150 = scmp.ne.s32.totalorder %s133, %s149
      %p151 = scmp.eq.s32.totalorder %s125, 0
      %p152 = por %p150, %p151
      %s154 = sadd.s32 %s153, 1
      %p157 = scmp.eq.s32.totalorder %s119, 1
      %p158 = scmp.ne.s32.totalorder %s153, %s155
      %p159 = scmp.eq.s32.totalorder %s119, 0
      %p160 = por %p158, %p159
      %p161 = scmp.ne.s32.totalorder %s153, %s155
      %p162 = scmp.eq.s32.totalorder %s124, 1
      %p163 = por %p161, %p162
      %p164 = scmp.ne.s32.totalorder %s155, %s156
      %p165 = scmp.eq.s32.totalorder %s124, 0
      %p166 = por %p164, %p165
      %p167 = scmp.ne.s32.totalorder %s155, %s156
      %p168 = scmp.eq.s32.totalorder %s125, 1
      %p169 = por %p167, %p168
      %p171 = scmp.ne.s32.totalorder %s156, %s170
      %p172 = scmp.eq.s32.totalorder %s125, 0
      %p173 = por %p171, %p172
      %s175 = sadd.s32 %s174, 1
      %p178 = scmp.eq.s32.totalorder %s119, 1
      %p179 = scmp.ne.s32.totalorder %s174, %s176
      %p180 = scmp.eq.s32.totalorder %s119, 0
      %p181 = por %p179, %p180
      %p182 = scmp.ne.s32.totalorder %s174, %s176
      %p183 = scmp.eq.s32.totalorder %s124, 1
      %p184 = por %p182, %p183
      %p185 = scmp.ne.s32.totalorder %s176, %s177
      %p186 = scmp.eq.s32.totalorder %s124, 0
      %p187 = por %p185, %p186
      %p188 = scmp.ne.s32.totalorder %s176, %s177
      %p189 = scmp.eq.s32.totalorder %s125, 1
      %p190 = por %p188, %p189
      %p192 = scmp.ne.s32.totalorder %s177, %s191
      %p193 = scmp.eq.s32.totalorder %s125, 0
      %p194 = por %p192, %p193
      %s196 = sadd.s32 %s195, 1
      %p199 = scmp.eq.s32.totalorder %s119, 1
      %p200 = scmp.ne.s32.totalorder %s195, %s197
      %p201 = scmp.eq.s32.totalorder %s119, 0
      %p202 = por %p200, %p201
      %p203 = scmp.ne.s32.totalorder %s195, %s197
      %p204 = scmp.eq.s32.totalorder %s124, 1
      %p205 = por %p203, %p204
      %p206 = scmp.ne.s32.totalorder %s197, %s198
      %p207 = scmp.eq.s32.totalorder %s124, 0
      %p208 = por %p206, %p207
      %p209 = scmp.ne.s32.totalorder %s197, %s198
      %p210 = scmp.eq.s32.totalorder %s125, 1
      %p211 = por %p209, %p210
      %p213 = scmp.ne.s32.totalorder %s198, %s212
      %p214 = scmp.eq.s32.totalorder %s125, 0
      %p215 = por %p213, %p214
      %s217 = sadd.s32 %s216, 1
      %p220 = scmp.eq.s32.totalorder %s119, 1
      %p221 = scmp.ne.s32.totalorder %s216, %s218
      %p222 = scmp.eq.s32.totalorder %s119, 0
      %p223 = por %p221, %p222
      %p224 = scmp.ne.s32.totalorder %s216, %s218
      %p225 = scmp.eq.s32.totalorder %s124, 1
      %p226 = por %p224, %p225
      %p227 = scmp.ne.s32.totalorder %s218, %s219
      %p228 = scmp.eq.s32.totalorder %s124, 0
      %p229 = por %p227, %p228
      %p230 = scmp.ne.s32.totalorder %s218, %s219
      %p231 = scmp.eq.s32.totalorder %s125, 1
      %p232 = por %p230, %p231
      %p234 = scmp.ne.s32.totalorder %s219, %s233
      %p235 = scmp.eq.s32.totalorder %s125, 0
      %p236 = por %p234, %p235
      %s238 = sadd.s32 %s237, 1
      %p241 = scmp.eq.s32.totalorder %s119, 1
      %p242 = scmp.ne.s32.totalorder %s237, %s239
      %p243 = scmp.eq.s32.totalorder %s119, 0
      %p244 = por %p242, %p243
      %p245 = scmp.ne.s32.totalorder %s237, %s239
      %p246 = scmp.eq.s32.totalorder %s124, 1
      %p247 = por %p245, %p246
      %p248 = scmp.ne.s32.totalorder %s239, %s240
      %p249 = scmp.eq.s32.totalorder %s124, 0
      %p250 = por %p248, %p249
      %p251 = scmp.ne.s32.totalorder %s239, %s240
      %p252 = scmp.eq.s32.totalorder %s125, 1
      %p253 = por %p251, %p252
      %p255 = scmp.ne.s32.totalorder %s240, %s254
      %p256 = scmp.eq.s32.totalorder %s125, 0
      %p257 = por %p255, %p256
      %s259 = sadd.s32 %s258, 1
      %p262 = scmp.eq.s32.totalorder %s119, 1
      %p263 = scmp.ne.s32.totalorder %s258, %s260
      %p264 = scmp.eq.s32.totalorder %s119, 0
      %p265 = por %p263, %p264
      %p266 = scmp.ne.s32.totalorder %s258, %s260
      %p267 = scmp.eq.s32.totalorder %s124, 1
      %p268 = por %p266, %p267
      %p269 = scmp.ne.s32.totalorder %s260, %s261
      %p270 = scmp.eq.s32.totalorder %s124, 0
      %p271 = por %p269, %p270
      %p272 = scmp.ne.s32.totalorder %s260, %s261
      %p273 = scmp.eq.s32.totalorder %s125, 1
      %p274 = por %p272, %p273
      %p276 = scmp.ne.s32.totalorder %s261, %s275
      %p277 = scmp.eq.s32.totalorder %s125, 0
      %p278 = por %p276, %p277
      %s280 = sadd.s32 %s279, 1
      %p283 = scmp.eq.s32.totalorder %s119, 1
      %p284 = scmp.ne.s32.totalorder %s279, %s281
      %p285 = scmp.eq.s32.totalorder %s119, 0
      %p286 = por %p284, %p285
      %p287 = scmp.ne.s32.totalorder %s279, %s281
      %p288 = scmp.eq.s32.totalorder %s124, 1
      %p289 = por %p287, %p288
      %p290 = scmp.ne.s32.totalorder %s281, %s282
      %p291 = scmp.eq.s32.totalorder %s124, 0
      %p292 = por %p290, %p291
      %p293 = scmp.ne.s32.totalorder %s281, %s282
      %p294 = scmp.eq.s32.totalorder %s125, 1
      %p295 = por %p293, %p294
      %p297 = scmp.ne.s32.totalorder %s282, %s296
      %p298 = scmp.eq.s32.totalorder %s125, 0
      %p299 = por %p297, %p298
      %s301 = sadd.s32 %s300, 1
      %p304 = scmp.eq.s32.totalorder %s119, 1
      %p305 = scmp.ne.s32.totalorder %s300, %s302
      %p306 = scmp.eq.s32.totalorder %s119, 0
      %p307 = por %p305, %p306
      %p308 = scmp.ne.s32.totalorder %s300, %s302
      %p309 = scmp.eq.s32.totalorder %s124, 1
      %p310 = por %p308, %p309
      %p311 = scmp.ne.s32.totalorder %s302, %s303
      %p312 = scmp.eq.s32.totalorder %s124, 0
      %p313 = por %p311, %p312
      %p314 = scmp.ne.s32.totalorder %s302, %s303
      %p315 = scmp.eq.s32.totalorder %s125, 1
      %p316 = por %p314, %p315
      %p318 = scmp.ne.s32.totalorder %s303, %s317
      %p319 = scmp.eq.s32.totalorder %s125, 0
      %p320 = por %p318, %p319
      %s322 = sadd.s32 %s321, 1
      %p325 = scmp.eq.s32.totalorder %s119, 1
      %p326 = scmp.ne.s32.totalorder %s321, %s323
      %p327 = scmp.eq.s32.totalorder %s119, 0
      %p328 = por %p326, %p327
      %p329 = scmp.ne.s32.totalorder %s321, %s323
      %p330 = scmp.eq.s32.totalorder %s124, 1
      %p331 = por %p329, %p330
      %p332 = scmp.ne.s32.totalorder %s323, %s324
      %p333 = scmp.eq.s32.totalorder %s124, 0
      %p334 = por %p332, %p333
      %p335 = scmp.ne.s32.totalorder %s323, %s324
      %p336 = scmp.eq.s32.totalorder %s125, 1
      %p337 = por %p335, %p336
      %p339 = scmp.ne.s32.totalorder %s324, %s338
      %p340 = scmp.eq.s32.totalorder %s125, 0
      %p341 = por %p339, %p340
      %s343 = sadd.s32 %s342, 1
      %p346 = scmp.eq.s32.totalorder %s119, 1
      %p347 = scmp.ne.s32.totalorder %s342, %s344
      %p348 = scmp.eq.s32.totalorder %s119, 0
      %p349 = por %p347, %p348
      %p350 = scmp.ne.s32.totalorder %s342, %s344
      %p351 = scmp.eq.s32.totalorder %s124, 1
      %p352 = por %p350, %p351
      %p353 = scmp.ne.s32.totalorder %s344, %s345
      %p354 = scmp.eq.s32.totalorder %s124, 0
      %p355 = por %p353, %p354
      %p356 = scmp.ne.s32.totalorder %s344, %s345
      %p357 = scmp.eq.s32.totalorder %s125, 1
      %p358 = por %p356, %p357
      %p360 = scmp.ne.s32.totalorder %s345, %s359
      %p361 = scmp.eq.s32.totalorder %s125, 0
      %p362 = por %p360, %p361
      %s364 = sadd.s32 %s363, 1
      %p367 = scmp.eq.s32.totalorder %s119, 1
      %p368 = scmp.ne.s32.totalorder %s363, %s365
      %p369 = scmp.eq.s32.totalorder %s119, 0
      %p370 = por %p368, %p369
      %p371 = scmp.ne.s32.totalorder %s363, %s365
      %p372 = scmp.eq.s32.totalorder %s124, 1
      %p373 = por %p371, %p372
      %p374 = scmp.ne.s32.totalorder %s365, %s366
      %p375 = scmp.eq.s32.totalorder %s124, 0
      %p376 = por %p374, %p375
      %p377 = scmp.ne.s32.totalorder %s365, %s366
      %p378 = scmp.eq.s32.totalorder %s125, 1
      %p379 = por %p377, %p378
      %p381 = scmp.ne.s32.totalorder %s366, %s380
      %p382 = scmp.eq.s32.totalorder %s125, 0
      %p383 = por %p381, %p382
      %s385 = sadd.s32 %s384, 1
      %p388 = scmp.eq.s32.totalorder %s119, 1
      %p389 = scmp.ne.s32.totalorder %s384, %s386
      %p390 = scmp.eq.s32.totalorder %s119, 0
      %p391 = por %p389, %p390
      %p392 = scmp.ne.s32.totalorder %s384, %s386
      %p393 = scmp.eq.s32.totalorder %s124, 1
      %p394 = por %p392, %p393
      %p395 = scmp.ne.s32.totalorder %s386, %s387
      %p396 = scmp.eq.s32.totalorder %s124, 0
      %p397 = por %p395, %p396
      %p398 = scmp.ne.s32.totalorder %s386, %s387
      %p399 = scmp.eq.s32.totalorder %s125, 1
      %p400 = por %p398, %p399
      %p402 = scmp.ne.s32.totalorder %s387, %s401
      %p403 = scmp.eq.s32.totalorder %s125, 0
      %p404 = por %p402, %p403
      %s406 = sadd.s32 %s405, 1
      %p409 = scmp.eq.s32.totalorder %s119, 1
      %p410 = scmp.ne.s32.totalorder %s405, %s407
      %p411 = scmp.eq.s32.totalorder %s119, 0
      %p412 = por %p410, %p411
      %p413 = scmp.ne.s32.totalorder %s405, %s407
      %p414 = scmp.eq.s32.totalorder %s124, 1
      %p415 = por %p413, %p414
      %p416 = scmp.ne.s32.totalorder %s407, %s408
      %p417 = scmp.eq.s32.totalorder %s124, 0
      %p418 = por %p416, %p417
      %p419 = scmp.ne.s32.totalorder %s407, %s408
      %p420 = scmp.eq.s32.totalorder %s125, 1
      %p421 = por %p419, %p420
      %p423 = scmp.ne.s32.totalorder %s408, %s422
      %p424 = scmp.eq.s32.totalorder %s125, 0
      %p425 = por %p423, %p424
      %s427 = sadd.s32 %s426, 1
      %p430 = scmp.eq.s32.totalorder %s119, 1
      %p431 = scmp.ne.s32.totalorder %s426, %s428
      %p432 = scmp.eq.s32.totalorder %s119, 0
      %p433 = por %p431, %p432
      %p434 = scmp.ne.s32.totalorder %s426, %s428
      %p435 = scmp.eq.s32.totalorder %s124, 1
      %p436 = por %p434, %p435
      %p437 = scmp.ne.s32.totalorder %s428, %s429
      %p438 = scmp.eq.s32.totalorder %s124, 0
      %p439 = por %p437, %p438
      %p440 = scmp.ne.s32.totalorder %s428, %s429
      %p441 = scmp.eq.s32.totalorder %s125, 1
      %p442 = por %p440, %p441
      %p444 = scmp.ne.s32.totalorder %s429, %s443
      %p445 = scmp.eq.s32.totalorder %s125, 0
      %p446 = por %p444, %p445
      %s448 = sadd.s32 %s447, 1
      %p451 = scmp.eq.s32.totalorder %s119, 1
      %p452 = scmp.ne.s32.totalorder %s447, %s449
      %p453 = scmp.eq.s32.totalorder %s119, 0
      %p454 = por %p452, %p453
      %p455 = scmp.ne.s32.totalorder %s447, %s449
      %p456 = scmp.eq.s32.totalorder %s124, 1
      %p457 = por %p455, %p456
      %p458 = scmp.ne.s32.totalorder %s449, %s450
      %p459 = scmp.eq.s32.totalorder %s124, 0
      %p460 = por %p458, %p459
      %p461 = scmp.ne.s32.totalorder %s449, %s450
      %p462 = scmp.eq.s32.totalorder %s125, 1
      %p463 = por %p461, %p462
      %p465 = scmp.ne.s32.totalorder %s450, %s464
      %p466 = scmp.eq.s32.totalorder %s125, 0
      %p467 = por %p465, %p466
      %s469 = sadd.s32 %s468, 1
      %p472 = scmp.eq.s32.totalorder %s119, 1
      %p473 = scmp.ne.s32.totalorder %s468, %s470
      %p474 = scmp.eq.s32.totalorder %s119, 0
      %p475 = por %p473, %p474
      %p476 = scmp.ne.s32.totalorder %s468, %s470
      %p477 = scmp.eq.s32.totalorder %s124, 1
      %p478 = por %p476, %p477
      %p479 = scmp.ne.s32.totalorder %s470, %s471
      %p480 = scmp.eq.s32.totalorder %s124, 0
      %p481 = por %p479, %p480
      %p482 = scmp.ne.s32.totalorder %s470, %s471
      %p483 = scmp.eq.s32.totalorder %s125, 1
      %p484 = por %p482, %p483
      %p486 = scmp.ne.s32.totalorder %s471, %s485
      %p487 = scmp.eq.s32.totalorder %s125, 0
      %p488 = por %p486, %p487
      %s490 = sadd.s32 %s489, 1
      %p493 = scmp.eq.s32.totalorder %s119, 1
      %p494 = scmp.ne.s32.totalorder %s489, %s491
      %p495 = scmp.eq.s32.totalorder %s119, 0
      %p496 = por %p494, %p495
      %p497 = scmp.ne.s32.totalorder %s489, %s491
      %p498 = scmp.eq.s32.totalorder %s124, 1
      %p499 = por %p497, %p498
      %p500 = scmp.ne.s32.totalorder %s491, %s492
      %p501 = scmp.eq.s32.totalorder %s124, 0
      %p502 = por %p500, %p501
      %p503 = scmp.ne.s32.totalorder %s491, %s492
      %p504 = scmp.eq.s32.totalorder %s125, 1
      %p505 = por %p503, %p504
      %p507 = scmp.ne.s32.totalorder %s492, %s506
      %p508 = scmp.eq.s32.totalorder %s125, 0
      %p509 = por %p507, %p508
      %s511 = sadd.s32 %s510, 1
      %p514 = scmp.eq.s32.totalorder %s119, 1
      %p515 = scmp.ne.s32.totalorder %s510, %s512
      %p516 = scmp.eq.s32.totalorder %s119, 0
      %p517 = por %p515, %p516
      %p518 = scmp.ne.s32.totalorder %s510, %s512
      %p519 = scmp.eq.s32.totalorder %s124, 1
      %p520 = por %p518, %p519
      %p521 = scmp.ne.s32.totalorder %s512, %s513
      %p522 = scmp.eq.s32.totalorder %s124, 0
      %p523 = por %p521, %p522
      %p524 = scmp.ne.s32.totalorder %s512, %s513
      %p525 = scmp.eq.s32.totalorder %s125, 1
      %p526 = por %p524, %p525
      %p528 = scmp.ne.s32.totalorder %s513, %s527
      %p529 = scmp.eq.s32.totalorder %s125, 0
      %p530 = por %p528, %p529
      %s532 = sadd.s32 %s531, 1
      %p535 = scmp.eq.s32.totalorder %s119, 1
      %p536 = scmp.ne.s32.totalorder %s531, %s533
      %p537 = scmp.eq.s32.totalorder %s119, 0
      %p538 = por %p536, %p537
      %p539 = scmp.ne.s32.totalorder %s531, %s533
      %p540 = scmp.eq.s32.totalorder %s124, 1
      %p541 = por %p539, %p540
      %p542 = scmp.ne.s32.totalorder %s533, %s534
      %p543 = scmp.eq.s32.totalorder %s124, 0
      %p544 = por %p542, %p543
      %p545 = scmp.ne.s32.totalorder %s533, %s534
      %p546 = scmp.eq.s32.totalorder %s125, 1
      %p547 = por %p545, %p546
      %p549 = scmp.ne.s32.totalorder %s534, %s548
      %p550 = scmp.eq.s32.totalorder %s125, 0
      %p551 = por %p549, %p550
      %s553 = sadd.s32 %s552, 1
      %p556 = scmp.eq.s32.totalorder %s119, 1
      %p557 = scmp.ne.s32.totalorder %s552, %s554
      %p558 = scmp.eq.s32.totalorder %s119, 0
      %p559 = por %p557, %p558
      %p560 = scmp.ne.s32.totalorder %s552, %s554
      %p561 = scmp.eq.s32.totalorder %s124, 1
      %p562 = por %p560, %p561
      %p563 = scmp.ne.s32.totalorder %s554, %s555
      %p564 = scmp.eq.s32.totalorder %s124, 0
      %p565 = por %p563, %p564
      %p566 = scmp.ne.s32.totalorder %s554, %s555
      %p567 = scmp.eq.s32.totalorder %s125, 1
      %p568 = por %p566, %p567
      %p570 = scmp.ne.s32.totalorder %s555, %s569
      %p571 = scmp.eq.s32.totalorder %s125, 0
      %p572 = por %p570, %p571
      %s574 = sadd.s32 %s573, 1
      %p577 = scmp.eq.s32.totalorder %s119, 1
      %p578 = scmp.ne.s32.totalorder %s573, %s575
      %p579 = scmp.eq.s32.totalorder %s119, 0
      %p580 = por %p578, %p579
      %p581 = scmp.ne.s32.totalorder %s573, %s575
      %p582 = scmp.eq.s32.totalorder %s124, 1
      %p583 = por %p581, %p582
      %p584 = scmp.ne.s32.totalorder %s575, %s576
      %p585 = scmp.eq.s32.totalorder %s124, 0
      %p586 = por %p584, %p585
      %p587 = scmp.ne.s32.totalorder %s575, %s576
      %p588 = scmp.eq.s32.totalorder %s125, 1
      %p589 = por %p587, %p588
      %p591 = scmp.ne.s32.totalorder %s576, %s590
      %p592 = scmp.eq.s32.totalorder %s125, 0
      %p593 = por %p591, %p592
      %s595 = sadd.s32 %s594, 1
      %p598 = scmp.eq.s32.totalorder %s119, 1
      %p599 = scmp.ne.s32.totalorder %s594, %s596
      %p600 = scmp.eq.s32.totalorder %s119, 0
      %p601 = por %p599, %p600
      %p602 = scmp.ne.s32.totalorder %s594, %s596
      %p603 = scmp.eq.s32.totalorder %s124, 1
      %p604 = por %p602, %p603
      %p605 = scmp.ne.s32.totalorder %s596, %s597
      %p606 = scmp.eq.s32.totalorder %s124, 0
      %p607 = por %p605, %p606
      %p608 = scmp.ne.s32.totalorder %s596, %s597
      %p609 = scmp.eq.s32.totalorder %s125, 1
      %p610 = por %p608, %p609
      %p612 = scmp.ne.s32.totalorder %s597, %s611
      %p613 = scmp.eq.s32.totalorder %s125, 0
      %p614 = por %p612, %p613
      %s616 = sadd.s32 %s615, 1
      %p619 = scmp.eq.s32.totalorder %s119, 1
      %p620 = scmp.ne.s32.totalorder %s615, %s617
      %p621 = scmp.eq.s32.totalorder %s119, 0
      %p622 = por %p620, %p621
      %p623 = scmp.ne.s32.totalorder %s615, %s617
      %p624 = scmp.eq.s32.totalorder %s124, 1
      %p625 = por %p623, %p624
      %p626 = scmp.ne.s32.totalorder %s617, %s618
      %p627 = scmp.eq.s32.totalorder %s124, 0
      %p628 = por %p626, %p627
      %p629 = scmp.ne.s32.totalorder %s617, %s618
      %p630 = scmp.eq.s32.totalorder %s125, 1
      %p631 = por %p629, %p630
      %p633 = scmp.ne.s32.totalorder %s618, %s632
      %p634 = scmp.eq.s32.totalorder %s125, 0
      %p635 = por %p633, %p634
      %s637 = sadd.s32 %s636, 1
      %p640 = scmp.eq.s32.totalorder %s119, 1
      %p641 = scmp.ne.s32.totalorder %s636, %s638
      %p642 = scmp.eq.s32.totalorder %s119, 0
      %p643 = por %p641, %p642
      %p644 = scmp.ne.s32.totalorder %s636, %s638
      %p645 = scmp.eq.s32.totalorder %s124, 1
      %p646 = por %p644, %p645
      %p647 = scmp.ne.s32.totalorder %s638, %s639
      %p648 = scmp.eq.s32.totalorder %s124, 0
      %p649 = por %p647, %p648
      %p650 = scmp.ne.s32.totalorder %s638, %s639
      %p651 = scmp.eq.s32.totalorder %s125, 1
      %p652 = por %p650, %p651
      %p654 = scmp.ne.s32.totalorder %s639, %s653
      %p655 = scmp.eq.s32.totalorder %s125, 0
      %p656 = por %p654, %p655
      %s658 = sadd.s32 %s657, 1
      %p661 = scmp.eq.s32.totalorder %s119, 1
      %p662 = scmp.ne.s32.totalorder %s657, %s659
      %p663 = scmp.eq.s32.totalorder %s119, 0
      %p664 = por %p662, %p663
      %p665 = scmp.ne.s32.totalorder %s657, %s659
      %p666 = scmp.eq.s32.totalorder %s124, 1
      %p667 = por %p665, %p666
      %p668 = scmp.ne.s32.totalorder %s659, %s660
      %p669 = scmp.eq.s32.totalorder %s124, 0
      %p670 = por %p668, %p669
      %p671 = scmp.ne.s32.totalorder %s659, %s660
      %p672 = scmp.eq.s32.totalorder %s125, 1
      %p673 = por %p671, %p672
      %p675 = scmp.ne.s32.totalorder %s660, %s674
      %p676 = scmp.eq.s32.totalorder %s125, 0
      %p677 = por %p675, %p676
      %s679 = sadd.s32 %s678, 1
      %p682 = scmp.eq.s32.totalorder %s119, 1
      %p683 = scmp.ne.s32.totalorder %s678, %s680
      %p684 = scmp.eq.s32.totalorder %s119, 0
      %p685 = por %p683, %p684
      %p686 = scmp.ne.s32.totalorder %s678, %s680
      %p687 = scmp.eq.s32.totalorder %s124, 1
      %p688 = por %p686, %p687
      %p689 = scmp.ne.s32.totalorder %s680, %s681
      %p690 = scmp.eq.s32.totalorder %s124, 0
      %p691 = por %p689, %p690
      %p692 = scmp.ne.s32.totalorder %s680, %s681
      %p693 = scmp.eq.s32.totalorder %s125, 1
      %p694 = por %p692, %p693
      %p696 = scmp.ne.s32.totalorder %s681, %s695
      %p697 = scmp.eq.s32.totalorder %s125, 0
      %p698 = por %p696, %p697
      %s700 = sadd.s32 %s699, 1
      %p703 = scmp.eq.s32.totalorder %s119, 1
      %p704 = scmp.ne.s32.totalorder %s699, %s701
      %p705 = scmp.eq.s32.totalorder %s119, 0
      %p706 = por %p704, %p705
      %p707 = scmp.ne.s32.totalorder %s699, %s701
      %p708 = scmp.eq.s32.totalorder %s124, 1
      %p709 = por %p707, %p708
      %p710 = scmp.ne.s32.totalorder %s701, %s702
      %p711 = scmp.eq.s32.totalorder %s124, 0
      %p712 = por %p710, %p711
      %p713 = scmp.ne.s32.totalorder %s701, %s702
      %p714 = scmp.eq.s32.totalorder %s125, 1
      %p715 = por %p713, %p714
      %p717 = scmp.ne.s32.totalorder %s702, %s716
      %p718 = scmp.eq.s32.totalorder %s125, 0
      %p719 = por %p717, %p718
      %s721 = sadd.s32 %s720, 1
      %p724 = scmp.eq.s32.totalorder %s119, 1
      %p725 = scmp.ne.s32.totalorder %s720, %s722
      %p726 = scmp.eq.s32.totalorder %s119, 0
      %p727 = por %p725, %p726
      %p728 = scmp.ne.s32.totalorder %s720, %s722
      %p729 = scmp.eq.s32.totalorder %s124, 1
      %p730 = por %p728, %p729
      %p731 = scmp.ne.s32.totalorder %s722, %s723
      %p732 = scmp.eq.s32.totalorder %s124, 0
      %p733 = por %p731, %p732
      %p734 = scmp.ne.s32.totalorder %s722, %s723
      %p735 = scmp.eq.s32.totalorder %s125, 1
      %p736 = por %p734, %p735
      %p738 = scmp.ne.s32.totalorder %s723, %s737
      %p739 = scmp.eq.s32.totalorder %s125, 0
      %p740 = por %p738, %p739
      %s742 = sadd.s32 %s741, 1
      %p745 = scmp.eq.s32.totalorder %s119, 1
      %p746 = scmp.ne.s32.totalorder %s741, %s743
      %p747 = scmp.eq.s32.totalorder %s119, 0
      %p748 = por %p746, %p747
      %p749 = scmp.ne.s32.totalorder %s741, %s743
      %p750 = scmp.eq.s32.totalorder %s124, 1
      %p751 = por %p749, %p750
      %p752 = scmp.ne.s32.totalorder %s743, %s744
      %p753 = scmp.eq.s32.totalorder %s124, 0
      %p754 = por %p752, %p753
      %p755 = scmp.ne.s32.totalorder %s743, %s744
      %p756 = scmp.eq.s32.totalorder %s125, 1
      %p757 = por %p755, %p756
      %p759 = scmp.ne.s32.totalorder %s744, %s758
      %p760 = scmp.eq.s32.totalorder %s125, 0
      %p761 = por %p759, %p760
      %s763 = sadd.s32 %s762, 1
      %p766 = scmp.eq.s32.totalorder %s119, 1
      %p767 = scmp.ne.s32.totalorder %s762, %s764
      %p768 = scmp.eq.s32.totalorder %s119, 0
      %p769 = por %p767, %p768
      %p770 = scmp.ne.s32.totalorder %s762, %s764
      %p771 = scmp.eq.s32.totalorder %s124, 1
      %p772 = por %p770, %p771
      %p773 = scmp.ne.s32.totalorder %s764, %s765
      %p774 = scmp.eq.s32.totalorder %s124, 0
      %p775 = por %p773, %p774
      %p776 = scmp.ne.s32.totalorder %s764, %s765
      %p777 = scmp.eq.s32.totalorder %s125, 1
      %p778 = por %p776, %p777
      %p780 = scmp.ne.s32.totalorder %s765, %s779
      %p781 = scmp.eq.s32.totalorder %s125, 0
      %p782 = por %p780, %p781
      %s784 = sadd.s32 %s783, 1
      %p787 = scmp.eq.s32.totalorder %s119, 1
      %p788 = scmp.ne.s32.totalorder %s783, %s785
      %p789 = scmp.eq.s32.totalorder %s119, 0
      %p790 = por %p788, %p789
      %p791 = scmp.ne.s32.totalorder %s783, %s785
      %p792 = scmp.eq.s32.totalorder %s124, 1
      %p793 = por %p791, %p792
      %p794 = scmp.ne.s32.totalorder %s785, %s786
      %p795 = scmp.eq.s32.totalorder %s124, 0
      %p796 = por %p794, %p795
      %p797 = scmp.ne.s32.totalorder %s785, %s786
      %p798 = scmp.eq.s32.totalorder %s125, 1
      %p799 = por %p797, %p798
      %p801 = scmp.ne.s32.totalorder %s786, %s800
      %p802 = scmp.eq.s32.totalorder %s125, 0
      %p803 = por %p801, %p802
      %s805 = sadd.s32 %s804, 1
      %p808 = scmp.eq.s32.totalorder %s119, 1
      %p809 = scmp.ne.s32.totalorder %s804, %s806
      %p810 = scmp.eq.s32.totalorder %s119, 0
      %p811 = por %p809, %p810
      %p812 = scmp.ne.s32.totalorder %s804, %s806
      %p813 = scmp.eq.s32.totalorder %s124, 1
      %p814 = por %p812, %p813
      %p815 = scmp.ne.s32.totalorder %s806, %s807
      %p816 = scmp.eq.s32.totalorder %s124, 0
      %p817 = por %p815, %p816
      %p818 = scmp.ne.s32.totalorder %s806, %s807
      %p819 = scmp.eq.s32.totalorder %s125, 1
      %p820 = por %p818, %p819
      %p822 = scmp.ne.s32.totalorder %s807, %s821
      %p823 = scmp.eq.s32.totalorder %s125, 0
      %p824 = por %p822, %p823
      %s826 = sadd.s32 %s825, 1
      %p829 = scmp.eq.s32.totalorder %s119, 1
      %p830 = scmp.ne.s32.totalorder %s825, %s827
      %p831 = scmp.eq.s32.totalorder %s119, 0
      %p832 = por %p830, %p831
      %p833 = scmp.ne.s32.totalorder %s825, %s827
      %p834 = scmp.eq.s32.totalorder %s124, 1
      %p835 = por %p833, %p834
      %p836 = scmp.ne.s32.totalorder %s827, %s828
      %p837 = scmp.eq.s32.totalorder %s124, 0
      %p838 = por %p836, %p837
      %p839 = scmp.ne.s32.totalorder %s827, %s828
      %p840 = scmp.eq.s32.totalorder %s125, 1
      %p841 = por %p839, %p840
      %p843 = scmp.ne.s32.totalorder %s828, %s842
      %p844 = scmp.eq.s32.totalorder %s125, 0
      %p845 = por %p843, %p844
      %s847 = sadd.s32 %s846, 1
      %p850 = scmp.eq.s32.totalorder %s119, 1
      %p851 = scmp.ne.s32.totalorder %s846, %s848
      %p852 = scmp.eq.s32.totalorder %s119, 0
      %p853 = por %p851, %p852
      %p854 = scmp.ne.s32.totalorder %s846, %s848
      %p855 = scmp.eq.s32.totalorder %s124, 1
      %p856 = por %p854, %p855
      %p857 = scmp.ne.s32.totalorder %s848, %s849
      %p858 = scmp.eq.s32.totalorder %s124, 0
      %p859 = por %p857, %p858
      %p860 = scmp.ne.s32.totalorder %s848, %s849
      %p861 = scmp.eq.s32.totalorder %s125, 1
      %p862 = por %p860, %p861
      %p864 = scmp.ne.s32.totalorder %s849, %s863
      %p865 = scmp.eq.s32.totalorder %s125, 0
      %p866 = por %p864, %p865
      %s868 = sadd.s32 %s867, 1
      %p871 = scmp.eq.s32.totalorder %s119, 1
      %p872 = scmp.ne.s32.totalorder %s867, %s869
      %p873 = scmp.eq.s32.totalorder %s119, 0
      %p874 = por %p872, %p873
      %p875 = scmp.ne.s32.totalorder %s867, %s869
      %p876 = scmp.eq.s32.totalorder %s124, 1
      %p877 = por %p875, %p876
      %p878 = scmp.ne.s32.totalorder %s869, %s870
      %p879 = scmp.eq.s32.totalorder %s124, 0
      %p880 = por %p878, %p879
      %p881 = scmp.ne.s32.totalorder %s869, %s870
      %p882 = scmp.eq.s32.totalorder %s125, 1
      %p883 = por %p881, %p882
      %p885 = scmp.ne.s32.totalorder %s870, %s884
      %p886 = scmp.eq.s32.totalorder %s125, 0
      %p887 = por %p885, %p886
      %s889 = sadd.s32 %s888, 1
      %p892 = scmp.eq.s32.totalorder %s119, 1
      %p893 = scmp.ne.s32.totalorder %s888, %s890
      %p894 = scmp.eq.s32.totalorder %s119, 0
      %p895 = por %p893, %p894
      %p896 = scmp.ne.s32.totalorder %s888, %s890
      %p897 = scmp.eq.s32.totalorder %s124, 1
      %p898 = por %p896, %p897
      %p899 = scmp.ne.s32.totalorder %s890, %s891
      %p900 = scmp.eq.s32.totalorder %s124, 0
      %p901 = por %p899, %p900
      %p902 = scmp.ne.s32.totalorder %s890, %s891
      %p903 = scmp.eq.s32.totalorder %s125, 1
      %p904 = por %p902, %p903
      %p906 = scmp.ne.s32.totalorder %s891, %s905
      %p907 = scmp.eq.s32.totalorder %s125, 0
      %p908 = por %p906, %p907
      %s910 = sadd.s32 %s909, 1
      %p913 = scmp.eq.s32.totalorder %s119, 1
      %p914 = scmp.ne.s32.totalorder %s909, %s911
      %p915 = scmp.eq.s32.totalorder %s119, 0
      %p916 = por %p914, %p915
      %p917 = scmp.ne.s32.totalorder %s909, %s911
      %p918 = scmp.eq.s32.totalorder %s124, 1
      %p919 = por %p917, %p918
      %p920 = scmp.ne.s32.totalorder %s911, %s912
      %p921 = scmp.eq.s32.totalorder %s124, 0
      %p922 = por %p920, %p921
      %p923 = scmp.ne.s32.totalorder %s911, %s912
      %p924 = scmp.eq.s32.totalorder %s125, 1
      %p925 = por %p923, %p924
      %p927 = scmp.ne.s32.totalorder %s912, %s926
      %p928 = scmp.eq.s32.totalorder %s125, 0
      %p929 = por %p927, %p928
      %s931 = sadd.s32 %s930, 1
      %p934 = scmp.eq.s32.totalorder %s119, 1
      %p935 = scmp.ne.s32.totalorder %s930, %s932
      %p936 = scmp.eq.s32.totalorder %s119, 0
      %p937 = por %p935, %p936
      %p938 = scmp.ne.s32.totalorder %s930, %s932
      %p939 = scmp.eq.s32.totalorder %s124, 1
      %p940 = por %p938, %p939
      %p941 = scmp.ne.s32.totalorder %s932, %s933
      %p942 = scmp.eq.s32.totalorder %s124, 0
      %p943 = por %p941, %p942
      %p944 = scmp.ne.s32.totalorder %s932, %s933
      %p945 = scmp.eq.s32.totalorder %s125, 1
      %p946 = por %p944, %p945
      %p948 = scmp.ne.s32.totalorder %s933, %s947
      %p949 = scmp.eq.s32.totalorder %s125, 0
      %p950 = por %p948, %p949
      %s952 = sadd.s32 %s951, 1
      %p955 = scmp.eq.s32.totalorder %s119, 1
      %p956 = scmp.ne.s32.totalorder %s951, %s953
      %p957 = scmp.eq.s32.totalorder %s119, 0
      %p958 = por %p956, %p957
      %p959 = scmp.ne.s32.totalorder %s951, %s953
      %p960 = scmp.eq.s32.totalorder %s124, 1
      %p961 = por %p959, %p960
      %p962 = scmp.ne.s32.totalorder %s953, %s954
      %p963 = scmp.eq.s32.totalorder %s124, 0
      %p964 = por %p962, %p963
      %p965 = scmp.ne.s32.totalorder %s953, %s954
      %p966 = scmp.eq.s32.totalorder %s125, 1
      %p967 = por %p965, %p966
      %p969 = scmp.ne.s32.totalorder %s954, %s968
      %p970 = scmp.eq.s32.totalorder %s125, 0
      %p971 = por %p969, %p970
      %s973 = sadd.s32 %s972, 1
      %p976 = scmp.eq.s32.totalorder %s119, 1
      %p977 = scmp.ne.s32.totalorder %s972, %s974
      %p978 = scmp.eq.s32.totalorder %s119, 0
      %p979 = por %p977, %p978
      %p980 = scmp.ne.s32.totalorder %s972, %s974
      %p981 = scmp.eq.s32.totalorder %s124, 1
      %p982 = por %p980, %p981
      %p983 = scmp.ne.s32.totalorder %s974, %s975
      %p984 = scmp.eq.s32.totalorder %s124, 0
      %p985 = por %p983, %p984
      %p986 = scmp.ne.s32.totalorder %s974, %s975
      %p987 = scmp.eq.s32.totalorder %s125, 1
      %p988 = por %p986, %p987
      %p990 = scmp.ne.s32.totalorder %s975, %s989
      %p991 = scmp.eq.s32.totalorder %s125, 0
      %p992 = por %p990, %p991
      %s994 = sadd.s32 %s993, 1
      %p997 = scmp.eq.s32.totalorder %s119, 1
      %p998 = scmp.ne.s32.totalorder %s993, %s995
      %p999 = scmp.eq.s32.totalorder %s119, 0
      %p1000 = por %p998, %p999
      %p1001 = scmp.ne.s32.totalorder %s993, %s995
      %p1002 = scmp.eq.s32.totalorder %s124, 1
      %p1003 = por %p1001, %p1002
      %p1004 = scmp.ne.s32.totalorder %s995, %s996
      %p1005 = scmp.eq.s32.totalorder %s124, 0
      %p1006 = por %p1004, %p1005
      %p1007 = scmp.ne.s32.totalorder %s995, %s996
      %p1008 = scmp.eq.s32.totalorder %s125, 1
      %p1009 = por %p1007, %p1008
      %p1011 = scmp.ne.s32.totalorder %s996, %s1010
      %p1012 = scmp.eq.s32.totalorder %s125, 0
      %p1013 = por %p1011, %p1012
      %s1015 = sadd.s32 %s1014, 1
      %p1018 = scmp.eq.s32.totalorder %s119, 1
      %p1019 = scmp.ne.s32.totalorder %s1014, %s1016
      %p1020 = scmp.eq.s32.totalorder %s119, 0
      %p1021 = por %p1019, %p1020
      %p1022 = scmp.ne.s32.totalorder %s1014, %s1016
      %p1023 = scmp.eq.s32.totalorder %s124, 1
      %p1024 = por %p1022, %p1023
      %p1025 = scmp.ne.s32.totalorder %s1016, %s1017
      %p1026 = scmp.eq.s32.totalorder %s124, 0
      %p1027 = por %p1025, %p1026
      %p1028 = scmp.ne.s32.totalorder %s1016, %s1017
      %p1029 = scmp.eq.s32.totalorder %s125, 1
      %p1030 = por %p1028, %p1029
      %p1032 = scmp.ne.s32.totalorder %s1017, %s1031
      %p1033 = scmp.eq.s32.totalorder %s125, 0
      %p1034 = por %p1032, %p1033
      %s1036 = sadd.s32 %s1035, 1
      %p1039 = scmp.eq.s32.totalorder %s119, 1
      %p1040 = scmp.ne.s32.totalorder %s1035, %s1037
      %p1041 = scmp.eq.s32.totalorder %s119, 0
      %p1042 = por %p1040, %p1041
      %p1043 = scmp.ne.s32.totalorder %s1035, %s1037
      %p1044 = scmp.eq.s32.totalorder %s124, 1
      %p1045 = por %p1043, %p1044
      %p1046 = scmp.ne.s32.totalorder %s1037, %s1038
      %p1047 = scmp.eq.s32.totalorder %s124, 0
      %p1048 = por %p1046, %p1047
      %p1049 = scmp.ne.s32.totalorder %s1037, %s1038
      %p1050 = scmp.eq.s32.totalorder %s125, 1
      %p1051 = por %p1049, %p1050
      %p1053 = scmp.ne.s32.totalorder %s1038, %s1052
      %p1054 = scmp.eq.s32.totalorder %s125, 0
      %p1055 = por %p1053, %p1054
      %s1057 = sadd.s32 %s1056, 1
      %p1060 = scmp.eq.s32.totalorder %s119, 1
      %p1061 = scmp.ne.s32.totalorder %s1056, %s1058
      %p1062 = scmp.eq.s32.totalorder %s119, 0
      %p1063 = por %p1061, %p1062
      %p1064 = scmp.ne.s32.totalorder %s1056, %s1058
      %p1065 = scmp.eq.s32.totalorder %s124, 1
      %p1066 = por %p1064, %p1065
      %p1067 = scmp.ne.s32.totalorder %s1058, %s1059
      %p1068 = scmp.eq.s32.totalorder %s124, 0
      %p1069 = por %p1067, %p1068
      %p1070 = scmp.ne.s32.totalorder %s1058, %s1059
      %p1071 = scmp.eq.s32.totalorder %s125, 1
      %p1072 = por %p1070, %p1071
      %p1074 = scmp.ne.s32.totalorder %s1059, %s1073
      %p1075 = scmp.eq.s32.totalorder %s125, 0
      %p1076 = por %p1074, %p1075
      %s1078 = sadd.s32 %s1077, 1
      %p1081 = scmp.eq.s32.totalorder %s119, 1
      %p1082 = scmp.ne.s32.totalorder %s1077, %s1079
      %p1083 = scmp.eq.s32.totalorder %s119, 0
      %p1084 = por %p1082, %p1083
      %p1085 = scmp.ne.s32.totalorder %s1077, %s1079
      %p1086 = scmp.eq.s32.totalorder %s124, 1
      %p1087 = por %p1085, %p1086
      %p1088 = scmp.ne.s32.totalorder %s1079, %s1080
      %p1089 = scmp.eq.s32.totalorder %s124, 0
      %p1090 = por %p1088, %p1089
      %p1091 = scmp.ne.s32.totalorder %s1079, %s1080
      %p1092 = scmp.eq.s32.totalorder %s125, 1
      %p1093 = por %p1091, %p1092
      %p1095 = scmp.ne.s32.totalorder %s1080, %s1094
      %p1096 = scmp.eq.s32.totalorder %s125, 0
      %p1097 = por %p1095, %p1096
      %s1099 = sadd.s32 %s1098, 1
      %p1102 = scmp.eq.s32.totalorder %s119, 1
      %p1103 = scmp.ne.s32.totalorder %s1098, %s1100
      %p1104 = scmp.eq.s32.totalorder %s119, 0
      %p1105 = por %p1103, %p1104
      %p1106 = scmp.ne.s32.totalorder %s1098, %s1100
      %p1107 = scmp.eq.s32.totalorder %s124, 1
      %p1108 = por %p1106, %p1107
      %p1109 = scmp.ne.s32.totalorder %s1100, %s1101
      %p1110 = scmp.eq.s32.totalorder %s124, 0
      %p1111 = por %p1109, %p1110
      %p1112 = scmp.ne.s32.totalorder %s1100, %s1101
      %p1113 = scmp.eq.s32.totalorder %s125, 1
      %p1114 = por %p1112, %p1113
      %p1116 = scmp.ne.s32.totalorder %s1101, %s1115
      %p1117 = scmp.eq.s32.totalorder %s125, 0
      %p1118 = por %p1116, %p1117
      %s1120 = sadd.s32 %s1119, 1
      %p1123 = scmp.eq.s32.totalorder %s119, 1
      %p1124 = scmp.ne.s32.totalorder %s1119, %s1121
      %p1125 = scmp.eq.s32.totalorder %s119, 0
      %p1126 = por %p1124, %p1125
      %p1127 = scmp.ne.s32.totalorder %s1119, %s1121
      %p1128 = scmp.eq.s32.totalorder %s124, 1
      %p1129 = por %p1127, %p1128
      %p1130 = scmp.ne.s32.totalorder %s1121, %s1122
      %p1131 = scmp.eq.s32.totalorder %s124, 0
      %p1132 = por %p1130, %p1131
      %p1133 = scmp.ne.s32.totalorder %s1121, %s1122
      %p1134 = scmp.eq.s32.totalorder %s125, 1
      %p1135 = por %p1133, %p1134
      %p1137 = scmp.ne.s32.totalorder %s1122, %s1136
      %p1138 = scmp.eq.s32.totalorder %s125, 0
      %p1139 = por %p1137, %p1138
      %s1141 = sadd.s32 %s1140, 1
      %p1144 = scmp.eq.s32.totalorder %s119, 1
      %p1145 = scmp.ne.s32.totalorder %s1140, %s1142
      %p1146 = scmp.eq.s32.totalorder %s119, 0
      %p1147 = por %p1145, %p1146
      %p1148 = scmp.ne.s32.totalorder %s1140, %s1142
      %p1149 = scmp.eq.s32.totalorder %s124, 1
      %p1150 = por %p1148, %p1149
      %p1151 = scmp.ne.s32.totalorder %s1142, %s1143
      %p1152 = scmp.eq.s32.totalorder %s124, 0
      %p1153 = por %p1151, %p1152
      %p1154 = scmp.ne.s32.totalorder %s1142, %s1143
      %p1155 = scmp.eq.s32.totalorder %s125, 1
      %p1156 = por %p1154, %p1155
      %p1158 = scmp.ne.s32.totalorder %s1143, %s1157
      %p1159 = scmp.eq.s32.totalorder %s125, 0
      %p1160 = por %p1158, %p1159
      %s1161 = ssub.s32 %s119, %s126
      %p1162 = scmp.eq.s32.totalorder %s1161, 0
      %s1164 = sadd.s32 %s1163, 1
      %s1165 = scalar_select %p1162, %s1163, %s1164
      %p1168 = pneg %p1162
      %p1169 = scmp.eq.s32.totalorder %s119, 1
      %p1170 = por %p1168, %p1169
      %p1171 = scmp.ne.s32.totalorder %s1163, %s1166
      %p1172 = scmp.eq.s32.totalorder %s119, 0
      %p1173 = por %p1171, %p1172
      %p1174 = scmp.ne.s32.totalorder %s1163, %s1166
      %p1175 = scmp.eq.s32.totalorder %s124, 1
      %p1176 = por %p1174, %p1175
      %p1177 = scmp.ne.s32.totalorder %s1166, %s1167
      %p1178 = scmp.eq.s32.totalorder %s124, 0
      %p1179 = por %p1177, %p1178
      %p1180 = scmp.ne.s32.totalorder %s1166, %s1167
      %p1181 = scmp.eq.s32.totalorder %s125, 1
      %p1182 = por %p1180, %p1181
      %p1184 = scmp.ne.s32.totalorder %s1167, %s1183
      %p1185 = scmp.eq.s32.totalorder %s125, 0
      %p1186 = por %p1184, %p1185
      %s1187 = ssub.s32 %s119, %s126
      %p1188 = scmp.eq.s32.totalorder %s1187, 0
      %s1190 = sadd.s32 %s1189, 1
      %s1191 = scalar_select %p1188, %s1189, %s1190
      %p1194 = pneg %p1188
      %p1195 = scmp.eq.s32.totalorder %s119, 1
      %p1196 = por %p1194, %p1195
      %p1197 = scmp.ne.s32.totalorder %s1189, %s1192
      %p1198 = scmp.eq.s32.totalorder %s119, 0
      %p1199 = por %p1197, %p1198
      %p1200 = scmp.ne.s32.totalorder %s1189, %s1192
      %p1201 = scmp.eq.s32.totalorder %s124, 1
      %p1202 = por %p1200, %p1201
      %p1203 = scmp.ne.s32.totalorder %s1192, %s1193
      %p1204 = scmp.eq.s32.totalorder %s124, 0
      %p1205 = por %p1203, %p1204
      %p1206 = scmp.ne.s32.totalorder %s1192, %s1193
      %p1207 = scmp.eq.s32.totalorder %s125, 1
      %p1208 = por %p1206, %p1207
      %p1210 = scmp.ne.s32.totalorder %s1193, %s1209
      %p1211 = scmp.eq.s32.totalorder %s125, 0
      %p1212 = por %p1210, %p1211
      %p1213 = scmp.le.s32.totalorder 1, %s119
      %p1214 = scmp.lt.s32.totalorder %s119, 3
      %p1215 = pnand %p1213, %p1214
      %p1216 = pneg %p1215
      // Predicated region
      $region9: #{dytox_forward.1} parent=5 // pred_check
        _
      $region10: #{dytox_forward.1} parent=5 // pred_check_branch
        %1218 = sbr.rel (%p1215) target = $region12
      $region11: #{dytox_forward.1} parent=5 // pred_region
        %s1219 = ssub.s32 %s119, 1
        // Predicated region
        $region13: #{dytox_forward.1} parent=11 // pred_check
          %p1220 = pneg %p166
        $region14: #{dytox_forward.1} parent=11 // pred_check_branch
          %1222 = sbr.rel (%p1220) target = $region16
        $region15: #{dytox_forward.1} parent=11 // pred_region
          _
        $region16: #{dytox_forward.1} parent=11 // pred_fallthru
          _
        // Predicated region
        $region17: #{dytox_forward.1} parent=11 // pred_check
          %p1223 = pneg %p187
        $region18: #{dytox_forward.1} parent=11 // pred_check_branch
          %1225 = sbr.rel (%p1223) target = $region20
        $region19: #{dytox_forward.1} parent=11 // pred_region
          _
        $region20: #{dytox_forward.1} parent=11 // pred_fallthru
          _
        // Predicated region
        $region21: #{dytox_forward.1} parent=11 // pred_check
          %p1226 = pneg %p208
        $region22: #{dytox_forward.1} parent=11 // pred_check_branch
          %1228 = sbr.rel (%p1226) target = $region24
        $region23: #{dytox_forward.1} parent=11 // pred_region
          _
        $region24: #{dytox_forward.1} parent=11 // pred_fallthru
          _
        // Predicated region
        $region25: #{dytox_forward.1} parent=11 // pred_check
          %p1229 = pneg %p229
        $region26: #{dytox_forward.1} parent=11 // pred_check_branch
          %1231 = sbr.rel (%p1229) target = $region28
        $region27: #{dytox_forward.1} parent=11 // pred_region
          _
        $region28: #{dytox_forward.1} parent=11 // pred_fallthru
          _
        // Predicated region
        $region29: #{dytox_forward.1} parent=11 // pred_check
          %p1232 = pneg %p250
        $region30: #{dytox_forward.1} parent=11 // pred_check_branch
          %1234 = sbr.rel (%p1232) target = $region32
        $region31: #{dytox_forward.1} parent=11 // pred_region
          _
        $region32: #{dytox_forward.1} parent=11 // pred_fallthru
          _
        // Predicated region
        $region33: #{dytox_forward.1} parent=11 // pred_check
          %p1235 = pneg %p271
        $region34: #{dytox_forward.1} parent=11 // pred_check_branch
          %1237 = sbr.rel (%p1235) target = $region36
        $region35: #{dytox_forward.1} parent=11 // pred_region
          _
        $region36: #{dytox_forward.1} parent=11 // pred_fallthru
          _
        // Predicated region
        $region37: #{dytox_forward.1} parent=11 // pred_check
          %p1238 = pneg %p292
        $region38: #{dytox_forward.1} parent=11 // pred_check_branch
          %1240 = sbr.rel (%p1238) target = $region40
        $region39: #{dytox_forward.1} parent=11 // pred_region
          _
        $region40: #{dytox_forward.1} parent=11 // pred_fallthru
          _
        // Predicated region
        $region41: #{dytox_forward.1} parent=11 // pred_check
          %p1241 = pneg %p313
        $region42: #{dytox_forward.1} parent=11 // pred_check_branch
          %1243 = sbr.rel (%p1241) target = $region44
        $region43: #{dytox_forward.1} parent=11 // pred_region
          _
        $region44: #{dytox_forward.1} parent=11 // pred_fallthru
          _
        // Predicated region
        $region45: #{dytox_forward.1} parent=11 // pred_check
          %p1244 = pneg %p334
        $region46: #{dytox_forward.1} parent=11 // pred_check_branch
          %1246 = sbr.rel (%p1244) target = $region48
        $region47: #{dytox_forward.1} parent=11 // pred_region
          _
        $region48: #{dytox_forward.1} parent=11 // pred_fallthru
          _
        // Predicated region
        $region49: #{dytox_forward.1} parent=11 // pred_check
          %p1247 = pneg %p355
        $region50: #{dytox_forward.1} parent=11 // pred_check_branch
          %1249 = sbr.rel (%p1247) target = $region52
        $region51: #{dytox_forward.1} parent=11 // pred_region
          _
        $region52: #{dytox_forward.1} parent=11 // pred_fallthru
          _
        // Predicated region
        $region53: #{dytox_forward.1} parent=11 // pred_check
          %p1250 = pneg %p376
        $region54: #{dytox_forward.1} parent=11 // pred_check_branch
          %1252 = sbr.rel (%p1250) target = $region56
        $region55: #{dytox_forward.1} parent=11 // pred_region
          _
        $region56: #{dytox_forward.1} parent=11 // pred_fallthru
          _
        // Predicated region
        $region57: #{dytox_forward.1} parent=11 // pred_check
          %p1253 = pneg %p397
        $region58: #{dytox_forward.1} parent=11 // pred_check_branch
          %1255 = sbr.rel (%p1253) target = $region60
        $region59: #{dytox_forward.1} parent=11 // pred_region
          _
        $region60: #{dytox_forward.1} parent=11 // pred_fallthru
          _
        // Predicated region
        $region61: #{dytox_forward.1} parent=11 // pred_check
          %p1256 = pneg %p418
        $region62: #{dytox_forward.1} parent=11 // pred_check_branch
          %1258 = sbr.rel (%p1256) target = $region64
        $region63: #{dytox_forward.1} parent=11 // pred_region
          _
        $region64: #{dytox_forward.1} parent=11 // pred_fallthru
          _
        // Predicated region
        $region65: #{dytox_forward.1} parent=11 // pred_check
          %p1259 = pneg %p439
        $region66: #{dytox_forward.1} parent=11 // pred_check_branch
          %1261 = sbr.rel (%p1259) target = $region68
        $region67: #{dytox_forward.1} parent=11 // pred_region
          _
        $region68: #{dytox_forward.1} parent=11 // pred_fallthru
          _
        // Predicated region
        $region69: #{dytox_forward.1} parent=11 // pred_check
          %p1262 = pneg %p460
        $region70: #{dytox_forward.1} parent=11 // pred_check_branch
          %1264 = sbr.rel (%p1262) target = $region72
        $region71: #{dytox_forward.1} parent=11 // pred_region
          _
        $region72: #{dytox_forward.1} parent=11 // pred_fallthru
          _
        // Predicated region
        $region73: #{dytox_forward.1} parent=11 // pred_check
          %p1265 = pneg %p481
        $region74: #{dytox_forward.1} parent=11 // pred_check_branch
          %1267 = sbr.rel (%p1265) target = $region76
        $region75: #{dytox_forward.1} parent=11 // pred_region
          _
        $region76: #{dytox_forward.1} parent=11 // pred_fallthru
          _
        // Predicated region
        $region77: #{dytox_forward.1} parent=11 // pred_check
          %p1268 = pneg %p502
        $region78: #{dytox_forward.1} parent=11 // pred_check_branch
          %1270 = sbr.rel (%p1268) target = $region80
        $region79: #{dytox_forward.1} parent=11 // pred_region
          _
        $region80: #{dytox_forward.1} parent=11 // pred_fallthru
          _
        // Predicated region
        $region81: #{dytox_forward.1} parent=11 // pred_check
          %p1271 = pneg %p523
        $region82: #{dytox_forward.1} parent=11 // pred_check_branch
          %1273 = sbr.rel (%p1271) target = $region84
        $region83: #{dytox_forward.1} parent=11 // pred_region
          _
        $region84: #{dytox_forward.1} parent=11 // pred_fallthru
          _
        // Predicated region
        $region85: #{dytox_forward.1} parent=11 // pred_check
          %p1274 = pneg %p544
        $region86: #{dytox_forward.1} parent=11 // pred_check_branch
          %1276 = sbr.rel (%p1274) target = $region88
        $region87: #{dytox_forward.1} parent=11 // pred_region
          _
        $region88: #{dytox_forward.1} parent=11 // pred_fallthru
          _
        // Predicated region
        $region89: #{dytox_forward.1} parent=11 // pred_check
          %p1277 = pneg %p565
        $region90: #{dytox_forward.1} parent=11 // pred_check_branch
          %1279 = sbr.rel (%p1277) target = $region92
        $region91: #{dytox_forward.1} parent=11 // pred_region
          _
        $region92: #{dytox_forward.1} parent=11 // pred_fallthru
          _
        // Predicated region
        $region93: #{dytox_forward.1} parent=11 // pred_check
          %p1280 = pneg %p586
        $region94: #{dytox_forward.1} parent=11 // pred_check_branch
          %1282 = sbr.rel (%p1280) target = $region96
        $region95: #{dytox_forward.1} parent=11 // pred_region
          _
        $region96: #{dytox_forward.1} parent=11 // pred_fallthru
          _
        // Predicated region
        $region97: #{dytox_forward.1} parent=11 // pred_check
          %p1283 = pneg %p607
        $region98: #{dytox_forward.1} parent=11 // pred_check_branch
          %1285 = sbr.rel (%p1283) target = $region100
        $region99: #{dytox_forward.1} parent=11 // pred_region
          _
        $region100: #{dytox_forward.1} parent=11 // pred_fallthru
          _
        // Predicated region
        $region101: #{dytox_forward.1} parent=11 // pred_check
          %p1286 = pneg %p628
        $region102: #{dytox_forward.1} parent=11 // pred_check_branch
          %1288 = sbr.rel (%p1286) target = $region104
        $region103: #{dytox_forward.1} parent=11 // pred_region
          _
        $region104: #{dytox_forward.1} parent=11 // pred_fallthru
          _
        // Predicated region
        $region105: #{dytox_forward.1} parent=11 // pred_check
          %p1289 = pneg %p649
        $region106: #{dytox_forward.1} parent=11 // pred_check_branch
          %1291 = sbr.rel (%p1289) target = $region108
        $region107: #{dytox_forward.1} parent=11 // pred_region
          _
        $region108: #{dytox_forward.1} parent=11 // pred_fallthru
          _
        // Predicated region
        $region109: #{dytox_forward.1} parent=11 // pred_check
          %p1292 = pneg %p670
        $region110: #{dytox_forward.1} parent=11 // pred_check_branch
          %1294 = sbr.rel (%p1292) target = $region112
        $region111: #{dytox_forward.1} parent=11 // pred_region
          _
        $region112: #{dytox_forward.1} parent=11 // pred_fallthru
          _
        // Predicated region
        $region113: #{dytox_forward.1} parent=11 // pred_check
          %p1295 = pneg %p691
        $region114: #{dytox_forward.1} parent=11 // pred_check_branch
          %1297 = sbr.rel (%p1295) target = $region116
        $region115: #{dytox_forward.1} parent=11 // pred_region
          _
        $region116: #{dytox_forward.1} parent=11 // pred_fallthru
          _
        // Predicated region
        $region117: #{dytox_forward.1} parent=11 // pred_check
          %p1298 = pneg %p712
        $region118: #{dytox_forward.1} parent=11 // pred_check_branch
          %1300 = sbr.rel (%p1298) target = $region120
        $region119: #{dytox_forward.1} parent=11 // pred_region
          _
        $region120: #{dytox_forward.1} parent=11 // pred_fallthru
          _
        // Predicated region
        $region121: #{dytox_forward.1} parent=11 // pred_check
          %p1301 = pneg %p733
        $region122: #{dytox_forward.1} parent=11 // pred_check_branch
          %1303 = sbr.rel (%p1301) target = $region124
        $region123: #{dytox_forward.1} parent=11 // pred_region
          _
        $region124: #{dytox_forward.1} parent=11 // pred_fallthru
          _
        // Predicated region
        $region125: #{dytox_forward.1} parent=11 // pred_check
          %p1304 = pneg %p754
        $region126: #{dytox_forward.1} parent=11 // pred_check_branch
          %1306 = sbr.rel (%p1304) target = $region128
        $region127: #{dytox_forward.1} parent=11 // pred_region
          _
        $region128: #{dytox_forward.1} parent=11 // pred_fallthru
          _
        // Predicated region
        $region129: #{dytox_forward.1} parent=11 // pred_check
          %p1307 = pneg %p775
        $region130: #{dytox_forward.1} parent=11 // pred_check_branch
          %1309 = sbr.rel (%p1307) target = $region132
        $region131: #{dytox_forward.1} parent=11 // pred_region
          _
        $region132: #{dytox_forward.1} parent=11 // pred_fallthru
          _
        // Predicated region
        $region133: #{dytox_forward.1} parent=11 // pred_check
          %p1310 = pneg %p796
        $region134: #{dytox_forward.1} parent=11 // pred_check_branch
          %1312 = sbr.rel (%p1310) target = $region136
        $region135: #{dytox_forward.1} parent=11 // pred_region
          _
        $region136: #{dytox_forward.1} parent=11 // pred_fallthru
          _
        // Predicated region
        $region137: #{dytox_forward.1} parent=11 // pred_check
          %p1313 = pneg %p817
        $region138: #{dytox_forward.1} parent=11 // pred_check_branch
          %1315 = sbr.rel (%p1313) target = $region140
        $region139: #{dytox_forward.1} parent=11 // pred_region
          _
        $region140: #{dytox_forward.1} parent=11 // pred_fallthru
          _
        // Predicated region
        $region141: #{dytox_forward.1} parent=11 // pred_check
          %p1316 = pneg %p838
        $region142: #{dytox_forward.1} parent=11 // pred_check_branch
          %1318 = sbr.rel (%p1316) target = $region144
        $region143: #{dytox_forward.1} parent=11 // pred_region
          _
        $region144: #{dytox_forward.1} parent=11 // pred_fallthru
          _
        // Predicated region
        $region145: #{dytox_forward.1} parent=11 // pred_check
          %p1319 = pneg %p859
        $region146: #{dytox_forward.1} parent=11 // pred_check_branch
          %1321 = sbr.rel (%p1319) target = $region148
        $region147: #{dytox_forward.1} parent=11 // pred_region
          _
        $region148: #{dytox_forward.1} parent=11 // pred_fallthru
          _
        // Predicated region
        $region149: #{dytox_forward.1} parent=11 // pred_check
          %p1322 = pneg %p880
        $region150: #{dytox_forward.1} parent=11 // pred_check_branch
          %1324 = sbr.rel (%p1322) target = $region152
        $region151: #{dytox_forward.1} parent=11 // pred_region
          _
        $region152: #{dytox_forward.1} parent=11 // pred_fallthru
          _
        // Predicated region
        $region153: #{dytox_forward.1} parent=11 // pred_check
          %p1325 = pneg %p901
        $region154: #{dytox_forward.1} parent=11 // pred_check_branch
          %1327 = sbr.rel (%p1325) target = $region156
        $region155: #{dytox_forward.1} parent=11 // pred_region
          _
        $region156: #{dytox_forward.1} parent=11 // pred_fallthru
          _
        // Predicated region
        $region157: #{dytox_forward.1} parent=11 // pred_check
          %p1328 = pneg %p922
        $region158: #{dytox_forward.1} parent=11 // pred_check_branch
          %1330 = sbr.rel (%p1328) target = $region160
        $region159: #{dytox_forward.1} parent=11 // pred_region
          _
        $region160: #{dytox_forward.1} parent=11 // pred_fallthru
          _
        // Predicated region
        $region161: #{dytox_forward.1} parent=11 // pred_check
          %p1331 = pneg %p943
        $region162: #{dytox_forward.1} parent=11 // pred_check_branch
          %1333 = sbr.rel (%p1331) target = $region164
        $region163: #{dytox_forward.1} parent=11 // pred_region
          %1335 = vsyncadd [#allocation3], 0
          %s1337 = sshll.u32 %s77, 4
          %s1338 = int_to_ptr.hbm [resolvable:$true] %s1337
          %s1339 = sshll.u32 [#allocation2], 4
          %s1340 = int_to_ptr.vmem [resolvable:$true] %s1339
          %1342 = dma.hbm_to_vmem [thread:$0]  %s1338, 16, %s1340, [#allocation3]
        $region164: #{dytox_forward.1} parent=11 // pred_fallthru
          _
        // Predicated region
        $region165: #{dytox_forward.1} parent=11 // pred_check
          %p1343 = pneg %p964
        $region166: #{dytox_forward.1} parent=11 // pred_check_branch
          %1345 = sbr.rel (%p1343) target = $region168
        $region167: #{dytox_forward.1} parent=11 // pred_region
          %1347 = vsyncadd [#allocation6], 0
          %s1349 = sshll.u32 %s79, 4
          %s1350 = int_to_ptr.hbm [resolvable:$true] %s1349
          %s1351 = sshll.u32 [#allocation5], 4
          %s1352 = int_to_ptr.vmem [resolvable:$true] %s1351
          %1354 = dma.hbm_to_vmem [thread:$0]  %s1350, 16, %s1352, [#allocation6]
        $region168: #{dytox_forward.1} parent=11 // pred_fallthru
          _
        // Predicated region
        $region169: #{dytox_forward.1} parent=11 // pred_check
          %p1355 = pneg %p985
        $region170: #{dytox_forward.1} parent=11 // pred_check_branch
          %1357 = sbr.rel (%p1355) target = $region172
        $region171: #{dytox_forward.1} parent=11 // pred_region
          %1359 = vsyncadd [#allocation6], 0
          %s1361 = sshll.u32 %s81, 4
          %s1362 = int_to_ptr.hbm [resolvable:$true] %s1361
          %s1363 = sshll.u32 [#allocation7], 4
          %s1364 = int_to_ptr.vmem [resolvable:$true] %s1363
          %1366 = dma.hbm_to_vmem [thread:$0]  %s1362, 16, %s1364, [#allocation6]
        $region172: #{dytox_forward.1} parent=11 // pred_fallthru
          _
        // Predicated region
        $region173: #{dytox_forward.1} parent=11 // pred_check
          %p1367 = pneg %p1006
        $region174: #{dytox_forward.1} parent=11 // pred_check_branch
          %1369 = sbr.rel (%p1367) target = $region176
        $region175: #{dytox_forward.1} parent=11 // pred_region
          _
        $region176: #{dytox_forward.1} parent=11 // pred_fallthru
          _
        // Predicated region
        $region177: #{dytox_forward.1} parent=11 // pred_check
          %p1370 = pneg %p1027
        $region178: #{dytox_forward.1} parent=11 // pred_check_branch
          %1372 = sbr.rel (%p1370) target = $region180
        $region179: #{dytox_forward.1} parent=11 // pred_region
          %1374 = vsyncadd [#allocation9], 0
          %s1376 = sshll.u32 %s85, 4
          %s1377 = int_to_ptr.hbm [resolvable:$true] %s1376
          %s1378 = sshll.u32 [#allocation8], 4
          %s1379 = int_to_ptr.vmem [resolvable:$true] %s1378
          %1381 = dma.hbm_to_vmem [thread:$0]  %s1377, 16, %s1379, [#allocation9]
        $region180: #{dytox_forward.1} parent=11 // pred_fallthru
          _
        // Predicated region
        $region181: #{dytox_forward.1} parent=11 // pred_check
          %p1382 = pneg %p1048
        $region182: #{dytox_forward.1} parent=11 // pred_check_branch
          %1384 = sbr.rel (%p1382) target = $region184
        $region183: #{dytox_forward.1} parent=11 // pred_region
          _
        $region184: #{dytox_forward.1} parent=11 // pred_fallthru
          _
        // Predicated region
        $region185: #{dytox_forward.1} parent=11 // pred_check
          %p1385 = pneg %p1069
        $region186: #{dytox_forward.1} parent=11 // pred_check_branch
          %1387 = sbr.rel (%p1385) target = $region188
        $region187: #{dytox_forward.1} parent=11 // pred_region
          %1389 = vsyncadd [#allocation9], 0
          %s1391 = sshll.u32 %s89, 4
          %s1392 = int_to_ptr.hbm [resolvable:$true] %s1391
          %s1393 = sshll.u32 [#allocation10], 4
          %s1394 = int_to_ptr.vmem [resolvable:$true] %s1393
          %1396 = dma.hbm_to_vmem [thread:$0]  %s1392, 16, %s1394, [#allocation9]
        $region188: #{dytox_forward.1} parent=11 // pred_fallthru
          _
        // Predicated region
        $region189: #{dytox_forward.1} parent=11 // pred_check
          %p1397 = pneg %p1090
        $region190: #{dytox_forward.1} parent=11 // pred_check_branch
          %1399 = sbr.rel (%p1397) target = $region192
        $region191: #{dytox_forward.1} parent=11 // pred_region
          %1401 = vsyncadd [#allocation12], 0
          %s1403 = sshll.u32 %s91, 4
          %s1404 = int_to_ptr.hbm [resolvable:$true] %s1403
          %s1405 = sshll.u32 [#allocation11], 4
          %s1406 = int_to_ptr.vmem [resolvable:$true] %s1405
          %1408 = dma.hbm_to_vmem [thread:$0]  %s1404, 16, %s1406, [#allocation12]
        $region192: #{dytox_forward.1} parent=11 // pred_fallthru
          _
        // Predicated region
        $region193: #{dytox_forward.1} parent=11 // pred_check
          %p1409 = pneg %p1111
        $region194: #{dytox_forward.1} parent=11 // pred_check_branch
          %1411 = sbr.rel (%p1409) target = $region196
        $region195: #{dytox_forward.1} parent=11 // pred_region
          %1413 = vsyncadd [#allocation12], 0
          %s1415 = sshll.u32 %s93, 4
          %s1416 = int_to_ptr.hbm [resolvable:$true] %s1415
          %s1417 = sshll.u32 [#allocation13], 4
          %s1418 = int_to_ptr.vmem [resolvable:$true] %s1417
          %1420 = dma.hbm_to_vmem [thread:$0]  %s1416, 16, %s1418, [#allocation12]
        $region196: #{dytox_forward.1} parent=11 // pred_fallthru
          _
        // Predicated region
        $region197: #{dytox_forward.1} parent=11 // pred_check
          %p1421 = pneg %p1132
        $region198: #{dytox_forward.1} parent=11 // pred_check_branch
          %1423 = sbr.rel (%p1421) target = $region200
        $region199: #{dytox_forward.1} parent=11 // pred_region
          _
        $region200: #{dytox_forward.1} parent=11 // pred_fallthru
          _
        // Predicated region
        $region201: #{dytox_forward.1} parent=11 // pred_check
          %p1424 = pneg %p1153
        $region202: #{dytox_forward.1} parent=11 // pred_check_branch
          %1426 = sbr.rel (%p1424) target = $region204
        $region203: #{dytox_forward.1} parent=11 // pred_region
          %1428 = vsyncadd [#allocation15], 0
          %s1430 = sshll.u32 %s97, 4
          %s1431 = int_to_ptr.hbm [resolvable:$true] %s1430
          %s1432 = sshll.u32 [#allocation14], 4
          %s1433 = int_to_ptr.vmem [resolvable:$true] %s1432
          %1435 = dma.hbm_to_vmem [thread:$0]  %s1431, 16, %s1433, [#allocation15]
        $region204: #{dytox_forward.1} parent=11 // pred_fallthru
          _
      $region12: #{dytox_forward.1} parent=5 // pred_fallthru
        _
      %p1436 = scmp.lt.s32.totalorder %s119, 2
      // Predicated region
      $region205: #{dytox_forward.1} parent=5 // pred_check
        %p1437 = pneg %p1436
      $region206: #{dytox_forward.1} parent=5 // pred_check_branch
        %1439 = sbr.rel (%p1437) target = $region208
      $region207: #{dytox_forward.1} parent=5 // pred_region
        // Predicated region
        $region209: #{dytox_forward.1} parent=207 // pred_check
          %p1440 = pneg %p139
        $region210: #{dytox_forward.1} parent=207 // pred_check_branch
          %1442 = sbr.rel (%p1440) target = $region212
        $region211: #{dytox_forward.1} parent=207 // pred_region
          %p1443 = scmp.lt.s32.totalorder %s119, 1
          %s1444 = scalar_select %p1443, %s119, 1
          %s1445 = smul.addr %s1444, 2
          %s1446 = smul.addr %s1445, 8
          %s1447 = scalar_lea.vmem %s1, %s1446
        $region212: #{dytox_forward.1} parent=207 // pred_fallthru
          _
      $region208: #{dytox_forward.1} parent=5 // pred_fallthru
        _
      %p1448 = scmp.le.s32.totalorder 1, %s119
      %p1449 = scmp.lt.s32.totalorder %s119, 3
      %p1450 = pnand %p1448, %p1449
      %p1451 = pneg %p1450
      // Predicated region
      $region213: #{dytox_forward.1} parent=5 // pred_check
        _
      $region214: #{dytox_forward.1} parent=5 // pred_check_branch
        %1453 = sbr.rel (%p1450) target = $region216
      $region215: #{dytox_forward.1} parent=5 // pred_region
        %s1454 = ssub.s32 %s119, 1
        // Predicated region
        $region217: #{dytox_forward.1} parent=215 // pred_check
          %p1455 = pneg %p943
        $region218: #{dytox_forward.1} parent=215 // pred_check_branch
          %1457 = sbr.rel (%p1455) target = $region220
        $region219: #{dytox_forward.1} parent=215 // pred_region
          %1459 = dma.done [#allocation3], 16
        $region220: #{dytox_forward.1} parent=215 // pred_fallthru
          _
        // Predicated region
        $region221: #{dytox_forward.1} parent=215 // pred_check
          %p1460 = pneg %p964
        $region222: #{dytox_forward.1} parent=215 // pred_check_branch
          %1462 = sbr.rel (%p1460) target = $region224
        $region223: #{dytox_forward.1} parent=215 // pred_region
          %1464 = dma.done [#allocation6], 16
        $region224: #{dytox_forward.1} parent=215 // pred_fallthru
          _
        // Predicated region
        $region225: #{dytox_forward.1} parent=215 // pred_check
          %p1465 = pneg %p985
        $region226: #{dytox_forward.1} parent=215 // pred_check_branch
          %1467 = sbr.rel (%p1465) target = $region228
        $region227: #{dytox_forward.1} parent=215 // pred_region
          %1469 = dma.done [#allocation6], 16
        $region228: #{dytox_forward.1} parent=215 // pred_fallthru
          _
        // Predicated region
        $region229: #{dytox_forward.1} parent=215 // pred_check
          %p1470 = pneg %p1027
        $region230: #{dytox_forward.1} parent=215 // pred_check_branch
          %1472 = sbr.rel (%p1470) target = $region232
        $region231: #{dytox_forward.1} parent=215 // pred_region
          %1474 = dma.done [#allocation9], 16
        $region232: #{dytox_forward.1} parent=215 // pred_fallthru
          _
        // Predicated region
        $region233: #{dytox_forward.1} parent=215 // pred_check
          %p1475 = pneg %p1069
        $region234: #{dytox_forward.1} parent=215 // pred_check_branch
          %1477 = sbr.rel (%p1475) target = $region236
        $region235: #{dytox_forward.1} parent=215 // pred_region
          %1479 = dma.done [#allocation9], 16
        $region236: #{dytox_forward.1} parent=215 // pred_fallthru
          _
        // Predicated region
        $region237: #{dytox_forward.1} parent=215 // pred_check
          %p1480 = pneg %p1090
        $region238: #{dytox_forward.1} parent=215 // pred_check_branch
          %1482 = sbr.rel (%p1480) target = $region240
        $region239: #{dytox_forward.1} parent=215 // pred_region
          %1484 = dma.done [#allocation12], 16
        $region240: #{dytox_forward.1} parent=215 // pred_fallthru
          _
        // Predicated region
        $region241: #{dytox_forward.1} parent=215 // pred_check
          %p1485 = pneg %p1111
        $region242: #{dytox_forward.1} parent=215 // pred_check_branch
          %1487 = sbr.rel (%p1485) target = $region244
        $region243: #{dytox_forward.1} parent=215 // pred_region
          %1489 = dma.done [#allocation12], 16
        $region244: #{dytox_forward.1} parent=215 // pred_fallthru
          _
        // Predicated region
        $region245: #{dytox_forward.1} parent=215 // pred_check
          %p1490 = pneg %p1153
        $region246: #{dytox_forward.1} parent=215 // pred_check_branch
          %1492 = sbr.rel (%p1490) target = $region248
        $region247: #{dytox_forward.1} parent=215 // pred_region
          %1494 = dma.done [#allocation15], 16
        $region248: #{dytox_forward.1} parent=215 // pred_fallthru
          _
        %p1495 = scmp.lt.s32.totalorder %s124, 1
        %s1496 = scalar_select %p1495, %s124, 1
        %s1497 = smul.addr %s1496, 2
        %s1498 = smul.addr %s1497, 8
        %s1499 = scalar_lea.vmem %s1, %s1498
        %p1500 = pneg %p145
        %p1501 = pneg %p142
        %p1502 = pneg %p166
        %p1503 = pneg %p163
        %p1504 = pneg %p187
        %p1505 = pneg %p184
        %p1506 = pneg %p208
        %p1507 = pneg %p205
        %p1508 = pneg %p229
        %p1509 = pneg %p226
        %p1510 = pneg %p250
        %p1511 = pneg %p247
        %p1512 = pneg %p271
        %p1513 = pneg %p268
        %p1514 = pneg %p292
        %p1515 = pneg %p289
        %p1516 = pneg %p313
        %p1517 = pneg %p310
        %p1518 = pneg %p334
        %p1519 = pneg %p331
        %p1520 = pneg %p355
        %p1521 = pneg %p352
        %p1522 = pneg %p376
        %p1523 = pneg %p373
        %p1524 = pneg %p397
        %p1525 = pneg %p394
        %p1526 = pneg %p418
        %p1527 = pneg %p415
        %p1528 = pneg %p439
        %p1529 = pneg %p436
        %p1530 = pneg %p460
        %p1531 = pneg %p457
        %p1532 = pneg %p481
        %p1533 = pneg %p478
        %p1534 = pneg %p502
        %p1535 = pneg %p499
        %p1536 = pneg %p523
        %p1537 = pneg %p520
        %p1538 = pneg %p544
        %p1539 = pneg %p541
        %p1540 = pneg %p565
        %p1541 = pneg %p562
        %p1542 = pneg %p586
        %p1543 = pneg %p583
        %p1544 = pneg %p607
        %p1545 = pneg %p604
        %p1546 = pneg %p628
        %p1547 = pneg %p625
        %p1548 = pneg %p649
        %p1549 = pneg %p646
        %p1550 = pneg %p670
        %p1551 = pneg %p667
        %p1552 = pneg %p691
        %p1553 = pneg %p688
        %p1554 = pneg %p712
        %p1555 = pneg %p709
        %p1556 = pneg %p733
        %p1557 = pneg %p730
        %p1558 = pneg %p754
        %p1559 = pneg %p751
        %p1560 = pneg %p775
        %p1561 = pneg %p772
        %p1562 = pneg %p796
        %p1563 = pneg %p793
        %p1564 = pneg %p817
        %p1565 = pneg %p814
        %p1566 = pneg %p838
        %p1567 = pneg %p835
        %p1568 = pneg %p859
        %p1569 = pneg %p856
        %p1570 = pneg %p880
        %p1571 = pneg %p877
        %p1572 = pneg %p901
        %p1573 = pneg %p898
        %p1574 = pneg %p922
        %p1575 = pneg %p919
        %p1576 = pneg %p943
        %p1577 = pneg %p940
        %p1578 = pneg %p964
        %p1579 = pneg %p961
        %p1580 = pneg %p985
        %p1581 = pneg %p982
        %p1582 = pneg %p1006
        %p1583 = pneg %p1003
        %p1584 = pneg %p1027
        %p1585 = pneg %p1024
        %p1586 = pneg %p1048
        %p1587 = pneg %p1045
        %p1588 = pneg %p1069
        %p1589 = pneg %p1066
        %p1590 = pneg %p1090
        %p1591 = pneg %p1087
        %p1592 = pneg %p1111
        %p1593 = pneg %p1108
        %p1594 = pneg %p1132
        %p1595 = pneg %p1129
        %p1596 = pneg %p1153
        %p1597 = pneg %p1150
        %p1598 = pneg %p1179
        %p1599 = pneg %p1176
        %s1600 = sand.u32 %s1166, 1
        %s1601 = scalar_lea.sflag [#allocation4], %s1600
        %s1602 = sand.u32 %s1166, 1
        %s1603 = scalar_lea.vmem [#allocation16], %s1602
        %p1604 = pneg %p1205
        %p1605 = pneg %p1202
        %s1606 = sand.u32 %s1192, 1
        %s1607 = scalar_lea.sflag [#allocation18], %s1606
        %s1608 = sand.u32 %s1192, 1
        %s1609 = scalar_lea.vmem [#allocation17], %s1608
        %p1610 = scmp.lt.s32.totalorder %s124, 1
        %s1611 = scalar_select %p1610, %s124, 1
        %s1612 = smul.addr %s1611, 2
        %s1613 = smul.addr %s1612, 8
        %s1614 = scalar_lea.vmem %s1, %s1613
        %v1616 = vld [vmem:[%s1614] sm:$0xff]
        %v1617 = vld [vmem:[%s1614 + $0x8] sm:$0xff]
        %v1618 = vpack.c.bf16 %v1617, %v1616
        %v1619 = vld [vmem:[%s3] sm:$0xff]
        %v1620 = vld [vmem:[%s3 + $0x8] sm:$0xff]
        %v1621 = vld [vmem:[%s3 + $0x10] sm:$0xff]
        %v1622 = vld [vmem:[%s3 + $0x18] sm:$0xff]
        %v1623 = vld [vmem:[%s3 + $0x20] sm:$0xff]
        %v1624 = vld [vmem:[%s3 + $0x28] sm:$0xff]
        %v1625 = vpack.c.bf16 %v1620, %v1619
        %v1626 = vpack.c.bf16 %v1622, %v1621
        %v1627 = vpack.c.bf16 %v1624, %v1623
        %v1628 = vld [vmem:[%s5] sm:$0x1]
        %v1630 = vperm.slane %v1628, 0
        %vm1632 = vcmask 392192
        %v1634 = vsel %vm1632, %v1618, 0
        %1636 = vmatpush.bf16.msra.mxu0 0
        %1637 = vmatpush.bf16.msra.mxu0 0
        %1638 = vmatpush.bf16.msra.mxu0 0
        %1639 = vmatpush.bf16.msra.mxu0 0
        %1640 = vmatpush.bf16.msra.mxu0 0
        %1641 = vmatpush.bf16.msra.mxu0 %v1627
        %1642 = vmatpush.bf16.msra.mxu0 %v1626
        %1643 = vmatpush.bf16.msra.mxu0 %v1625
        %1644 = vmatmul.bf16.gmra.mxu0 %v1634
        %v1645 = vpop.f32.mrf.mxu0
        %v1646 = vadd.f32 %v1630, %v1645
        %v1647 = vpop.f32.mrf.mxu0
        %v1648 = vadd.f32 %v1630, %v1647
        %1649 = vdwg.mxu0
        %v1650 = vld [vmem:[%s7] sm:$0xff]
        %v1651 = vld [vmem:[%s7 + $0x8] sm:$0xff]
        %v1652 = vadd.f32 %v1646, %v1650
        %v1653 = vadd.f32 %v1648, %v1651
        %vm1654 = vcmask 261120
        %v1655 = vsel %vm1654, %v1652, 0.0
        %1656 = vadd.xlane.f32.xlu0 %v1655
        %v1657 = vpop.xlane.xlu0 %1656
        %v1658 = vsel %vm1654, %v1653, 0.0
        %1659 = vadd.xlane.f32.xlu0 %v1658
        %v1660 = vpop.xlane.xlu0 %1659
        %v1661 = vrcp.pop 32.0
        %v1662 = vmul.f32 32.0, %v1661
        %v1663 = vsub.f32 1.0, %v1662
        %v1664 = vmul.f32 %v1661, %v1663
        %v1665 = vadd.f32 %v1661, %v1664
        %vm1666 = vweird.f32 %v1661
        %v1667 = vsel %vm1666, %v1661, %v1665
        %v1668 = vmul.f32 %v1657, %v1667
        %v1669 = vmul.f32 %v1660, %v1667
        %v1670 = vsub.f32 %v1652, %v1668
        %v1671 = vsub.f32 %v1653, %v1669
        %v1672 = vmul.f32 %v1670, %v1670
        %v1673 = vmul.f32 %v1671, %v1671
        %v1674 = vsel %vm1654, %v1672, 0.0
        %1675 = vadd.xlane.f32.xlu0 %v1674
        %v1676 = vpop.xlane.xlu0 %1675
        %v1677 = vsel %vm1654, %v1673, 0.0
        %1678 = vadd.xlane.f32.xlu0 %v1677
        %v1679 = vpop.xlane.xlu0 %1678
        %v1680 = vmul.f32 %v1676, %v1667
        %v1681 = vmul.f32 %v1679, %v1667
        %v1682 = vadd.f32 %v1680, 1e-05
        %v1683 = vadd.f32 %v1681, 1e-05
        %v1684 = vrsqrt.pop %v1682
        %v1685 = vmul.f32 %v1684, %v1682
        %v1686 = vmul.f32 %v1685, %v1684
        %v1687 = vmul.f32 0.5, %v1686
        %v1688 = vsub.f32 1.5, %v1687
        %v1689 = vmul.f32 %v1684, %v1688
        %vm1690 = vweird.f32 %v1682
        %vm1691 = vweird.f32 %v1684
        %vm1692 = vmor %vm1690, %vm1691
        %v1693 = vsel %vm1692, %v1684, %v1689
        %v1694 = vrsqrt.pop %v1683
        %v1695 = vmul.f32 %v1694, %v1683
        %v1696 = vmul.f32 %v1695, %v1694
        %v1697 = vmul.f32 0.5, %v1696
        %v1698 = vsub.f32 1.5, %v1697
        %v1699 = vmul.f32 %v1694, %v1698
        %vm1700 = vweird.f32 %v1683
        %vm1701 = vweird.f32 %v1694
        %vm1702 = vmor %vm1700, %vm1701
        %v1703 = vsel %vm1702, %v1694, %v1699
        %v1704 = vmul.f32 %v1670, %v1693
        %v1705 = vmul.f32 %v1671, %v1703
        %v1706 = vld [vmem:[%s11] sm:$0x1]
        %v1708 = vperm.slane %v1706, 0
        %v1710 = vmul.f32 %v1704, %v1708
        %v1711 = vmul.f32 %v1705, %v1708
        %v1712 = vld [vmem:[%s13] sm:$0x1]
        %v1714 = vperm.slane %v1712, 0
        %v1716 = vadd.f32 %v1710, %v1714
        %v1717 = vadd.f32 %v1711, %v1714
        %v1718 = vpack.c.bf16 %v1717, %v1716
        %v1719 = vld [vmem:[%s15] sm:$0xff]
        %v1720 = vld [vmem:[%s15 + $0x8] sm:$0xff]
        %v1721 = vld [vmem:[%s15 + $0x10] sm:$0xff]
        %v1722 = vld [vmem:[%s15 + $0x18] sm:$0xff]
        %v1723 = vpack.c.bf16 %v1720, %v1719
        %v1724 = vpack.c.bf16 %v1722, %v1721
        %v1725 = vld [vmem:[%s17] sm:$0x1]
        %v1727 = vperm.slane %v1725, 0
        %v1730 = vsel %vm1654, %v1718, 0
        %1732 = vmatpush.bf16.msra.mxu0 0
        %1733 = vmatpush.bf16.msra.mxu0 0
        %1734 = vmatpush.bf16.msra.mxu0 0
        %1735 = vmatpush.bf16.msra.mxu0 0
        %1736 = vmatpush.bf16.msra.mxu0 0
        %1737 = vmatpush.bf16.msra.mxu0 0
        %1738 = vmatpush.bf16.msra.mxu0 %v1724
        %1739 = vmatpush.bf16.msra.mxu0 %v1723
        %1740 = vmatmul.bf16.gmra.mxu0 %v1730
        %v1741 = vpop.f32.mrf.mxu0
        %v1742 = vadd.f32 %v1727, %v1741
        %v1743 = vpop.f32.mrf.mxu0
        %v1744 = vadd.f32 %v1727, %v1743
        %1745 = vdwg.mxu0
        %v1746 = vpack.c.bf16 %v1744, %v1742
        %1748 = vrot.lane.b32.xlu0 %v1746, 96
        %v1749 = vpop.permute.xlu0 %1748
        %vm1750 = vcmask 64512
        %v1752 = vsel %vm1750, %v1746, 0
        %v1755 = vsel %vm1750, %v1749, 0
        %1757 = vmatpush.bf16.xpose.msra.mxu0 0
        %1758 = vmatpush.bf16.xpose.msra.mxu0 0
        %1759 = vmatpush.bf16.xpose.msra.mxu0 0
        %1760 = vmatpush.bf16.xpose.msra.mxu0 0
        %1761 = vmatpush.bf16.xpose.msra.mxu0 0
        %1762 = vmatpush.bf16.xpose.msra.mxu0 0
        %1763 = vmatpush.bf16.xpose.msra.mxu0 0
        %1764 = vmatpush.bf16.xpose.msra.mxu0 %v1755
        %1765 = vmatmul.bf16.gmra.mxu0 %v1752
        %v1766 = vpop.f32.mrf.mxu0
        %v1767 = vadd.f32 0.0, %v1766
        %v1768 = vpop.f32.mrf.mxu0
        %v1769 = vadd.f32 0.0, %v1768
        %1770 = vdwg.mxu0
        %v1771 = vmul.f32 %v1767, 0.35355338
        %v1772 = vmul.f32 %v1769, 0.35355338
        %vm1773 = vcmask 130048
        %v1774 = vsel %vm1773, %v1771, -inf
        %1775 = vmax.xlane.f32.xlu0 %v1774
        %v1776 = vpop.xlane.xlu0 %1775
        %v1777 = vsel %vm1773, %v1772, -inf
        %1778 = vmax.xlane.f32.xlu0 %v1777
        %v1779 = vpop.xlane.xlu0 %1778
        %v1780 = vsub.f32 %v1771, %v1776
        %v1781 = vsub.f32 %v1772, %v1779
        %v1782 = vmul.f32 %v1780, 1.442695
        %v1783 = vpow.pop %v1782
        %v1784 = vmul.f32 %v1781, 1.442695
        %v1785 = vpow.pop %v1784
        %v1786 = vsel %vm1773, %v1783, 0.0
        %1787 = vadd.xlane.f32.xlu0 %v1786
        %v1788 = vpop.xlane.xlu0 %1787
        %v1789 = vsel %vm1773, %v1785, 0.0
        %1790 = vadd.xlane.f32.xlu0 %v1789
        %v1791 = vpop.xlane.xlu0 %1790
        %v1792 = vrcp.pop %v1788
        %v1793 = vrcp.pop %v1791
        %v1794 = vmul.f32 %v1783, %v1792
        %v1795 = vmul.f32 %v1785, %v1793
        %v1796 = vpack.c.bf16 %v1795, %v1794
        %1797 = vrot.lane.b32.xlu0 %v1746, 64
        %v1798 = vpop.permute.xlu0 %1797
        %v1801 = vsel %vm1773, %v1796, 0
        %1803 = vmatpush.bf16.msra.mxu0 0
        %1804 = vmatpush.bf16.msra.mxu0 0
        %1805 = vmatpush.bf16.msra.mxu0 0
        %1806 = vmatpush.bf16.msra.mxu0 0
        %1807 = vmatpush.bf16.msra.mxu0 0
        %1808 = vmatpush.bf16.msra.mxu0 0
        %1809 = vmatpush.bf16.msra.mxu0 0
        %1810 = vmatpush.bf16.msra.mxu0 %v1798
        %1811 = vmatmul.bf16.gmra.mxu0 %v1801
        %v1812 = vpop.f32.mrf.mxu0
        %v1813 = vadd.f32 0.0, %v1812
        %v1814 = vpop.f32.mrf.mxu0
        %v1815 = vadd.f32 0.0, %v1814
        %1816 = vdwg.mxu0
        %v1817 = vld [vmem:[%s19] sm:$0xff]
        %v1818 = vpack.c.bf16 %v1815, %v1813
        %v1819 = vpack.c.bf16 %v1817, %v1817
        %1820 = vrot.lane.b32.xlu0 %v1746, 120
        %v1821 = vpop.permute.xlu0 %1820
        %1822 = vrot.lane.b32.xlu0 %v1746, 88
        %v1823 = vpop.permute.xlu0 %1822
        %v1825 = vsel %vm1750, %v1821, 0
        %v1828 = vsel %vm1750, %v1823, 0
        %1830 = vmatpush.bf16.xpose.msra.mxu0 0
        %1831 = vmatpush.bf16.xpose.msra.mxu0 0
        %1832 = vmatpush.bf16.xpose.msra.mxu0 0
        %1833 = vmatpush.bf16.xpose.msra.mxu0 0
        %1834 = vmatpush.bf16.xpose.msra.mxu0 0
        %1835 = vmatpush.bf16.xpose.msra.mxu0 0
        %1836 = vmatpush.bf16.xpose.msra.mxu0 0
        %1837 = vmatpush.bf16.xpose.msra.mxu0 %v1828
        %1838 = vmatmul.bf16.gmra.mxu0 %v1825
        %v1839 = vpop.f32.mrf.mxu0
        %v1840 = vadd.f32 0.0, %v1839
        %v1841 = vpop.f32.mrf.mxu0
        %v1842 = vadd.f32 0.0, %v1841
        %1843 = vdwg.mxu0
        %v1844 = vmul.f32 %v1840, 0.35355338
        %v1845 = vmul.f32 %v1842, 0.35355338
        %v1846 = vsel %vm1773, %v1844, -inf
        %1847 = vmax.xlane.f32.xlu0 %v1846
        %v1848 = vpop.xlane.xlu0 %1847
        %v1849 = vsel %vm1773, %v1845, -inf
        %1850 = vmax.xlane.f32.xlu0 %v1849
        %v1851 = vpop.xlane.xlu0 %1850
        %v1852 = vsub.f32 %v1844, %v1848
        %v1853 = vsub.f32 %v1845, %v1851
        %v1854 = vmul.f32 %v1852, 1.442695
        %v1855 = vpow.pop %v1854
        %v1856 = vmul.f32 %v1853, 1.442695
        %v1857 = vpow.pop %v1856
        %v1858 = vsel %vm1773, %v1855, 0.0
        %1859 = vadd.xlane.f32.xlu0 %v1858
        %v1860 = vpop.xlane.xlu0 %1859
        %v1861 = vsel %vm1773, %v1857, 0.0
        %1862 = vadd.xlane.f32.xlu0 %v1861
        %v1863 = vpop.xlane.xlu0 %1862
        %v1864 = vrcp.pop %v1860
        %v1865 = vrcp.pop %v1863
        %v1866 = vmul.f32 %v1855, %v1864
        %v1867 = vmul.f32 %v1857, %v1865
        %v1868 = vpack.c.bf16 %v1867, %v1866
        %1869 = vrot.lane.b32.xlu0 %v1746, 56
        %v1870 = vpop.permute.xlu0 %1869
        %v1873 = vsel %vm1773, %v1868, 0
        %1875 = vmatpush.bf16.msra.mxu0 0
        %1876 = vmatpush.bf16.msra.mxu0 0
        %1877 = vmatpush.bf16.msra.mxu0 0
        %1878 = vmatpush.bf16.msra.mxu0 0
        %1879 = vmatpush.bf16.msra.mxu0 0
        %1880 = vmatpush.bf16.msra.mxu0 0
        %1881 = vmatpush.bf16.msra.mxu0 0
        %1882 = vmatpush.bf16.msra.mxu0 %v1870
        %1883 = vmatmul.bf16.gmra.mxu0 %v1873
        %v1884 = vpop.f32.mrf.mxu0
        %v1885 = vadd.f32 0.0, %v1884
        %v1886 = vpop.f32.mrf.mxu0
        %v1887 = vadd.f32 0.0, %v1886
        %1888 = vdwg.mxu0
        %v1889 = vld [vmem:[%s19 + $0x8] sm:$0xff]
        %v1890 = vpack.c.bf16 %v1887, %v1885
        %v1891 = vpack.c.bf16 %v1889, %v1889
        %v1893 = vsel %vm1750, %v1890, 0
        %vm1895 = vcmask 1043456
        %v1897 = vsel %vm1895, %v1891, 0
        %1899 = vmatpush.bf16.msra.mxu0 0
        %1900 = vmatpush.bf16.msra.mxu0 0
        %1901 = vmatpush.bf16.msra.mxu0 0
        %1902 = vmatpush.bf16.msra.mxu0 0
        %1903 = vmatpush.bf16.msra.mxu0 0
        %1904 = vmatpush.bf16.msra.mxu0 0
        %1905 = vmatpush.bf16.msra.mxu0 0
        %1906 = vmatpush.bf16.msra.mxu0 %v1897
        %1907 = vmatmul.bf16.gmra.mxu0 %v1893
        %v1908 = vpop.f32.mrf.mxu0
        %v1909 = vadd.f32 0.0, %v1908
        %v1910 = vpop.f32.mrf.mxu0
        %v1911 = vadd.f32 0.0, %v1910
        %1912 = vdwg.mxu0
        %v1914 = vsel %vm1750, %v1818, 0
        %v1917 = vsel %vm1895, %v1819, 0
        %1919 = vmatpush.bf16.msra.mxu0 0
        %1920 = vmatpush.bf16.msra.mxu0 0
        %1921 = vmatpush.bf16.msra.mxu0 0
        %1922 = vmatpush.bf16.msra.mxu0 0
        %1923 = vmatpush.bf16.msra.mxu0 0
        %1924 = vmatpush.bf16.msra.mxu0 0
        %1925 = vmatpush.bf16.msra.mxu0 0
        %1926 = vmatpush.bf16.msra.mxu0 %v1917
        %1927 = vmatmul.bf16.gmra.mxu0 %v1914
        %v1928 = vpop.f32.mrf.mxu0
        %v1929 = vadd.f32 %v1909, %v1928
        %v1930 = vpop.f32.mrf.mxu0
        %v1931 = vadd.f32 %v1911, %v1930
        %1932 = vdwg.mxu0
        %1933 = vrot.lane.b32.xlu0 %v1746, 112
        %v1934 = vpop.permute.xlu0 %1933
        %1935 = vrot.lane.b32.xlu0 %v1746, 80
        %v1936 = vpop.permute.xlu0 %1935
        %v1938 = vsel %vm1750, %v1934, 0
        %v1941 = vsel %vm1750, %v1936, 0
        %1943 = vmatpush.bf16.xpose.msra.mxu0 0
        %1944 = vmatpush.bf16.xpose.msra.mxu0 0
        %1945 = vmatpush.bf16.xpose.msra.mxu0 0
        %1946 = vmatpush.bf16.xpose.msra.mxu0 0
        %1947 = vmatpush.bf16.xpose.msra.mxu0 0
        %1948 = vmatpush.bf16.xpose.msra.mxu0 0
        %1949 = vmatpush.bf16.xpose.msra.mxu0 0
        %1950 = vmatpush.bf16.xpose.msra.mxu0 %v1941
        %1951 = vmatmul.bf16.gmra.mxu0 %v1938
        %v1952 = vpop.f32.mrf.mxu0
        %v1953 = vadd.f32 0.0, %v1952
        %v1954 = vpop.f32.mrf.mxu0
        %v1955 = vadd.f32 0.0, %v1954
        %1956 = vdwg.mxu0
        %v1957 = vmul.f32 %v1953, 0.35355338
        %v1958 = vmul.f32 %v1955, 0.35355338
        %v1959 = vsel %vm1773, %v1957, -inf
        %1960 = vmax.xlane.f32.xlu0 %v1959
        %v1961 = vpop.xlane.xlu0 %1960
        %v1962 = vsel %vm1773, %v1958, -inf
        %1963 = vmax.xlane.f32.xlu0 %v1962
        %v1964 = vpop.xlane.xlu0 %1963
        %v1965 = vsub.f32 %v1957, %v1961
        %v1966 = vsub.f32 %v1958, %v1964
        %v1967 = vmul.f32 %v1965, 1.442695
        %v1968 = vpow.pop %v1967
        %v1969 = vmul.f32 %v1966, 1.442695
        %v1970 = vpow.pop %v1969
        %v1971 = vsel %vm1773, %v1968, 0.0
        %1972 = vadd.xlane.f32.xlu0 %v1971
        %v1973 = vpop.xlane.xlu0 %1972
        %v1974 = vsel %vm1773, %v1970, 0.0
        %1975 = vadd.xlane.f32.xlu0 %v1974
        %v1976 = vpop.xlane.xlu0 %1975
        %v1977 = vrcp.pop %v1973
        %v1978 = vrcp.pop %v1976
        %v1979 = vmul.f32 %v1968, %v1977
        %v1980 = vmul.f32 %v1970, %v1978
        %v1981 = vpack.c.bf16 %v1980, %v1979
        %1982 = vrot.lane.b32.xlu0 %v1746, 48
        %v1983 = vpop.permute.xlu0 %1982
        %v1986 = vsel %vm1773, %v1981, 0
        %1988 = vmatpush.bf16.msra.mxu0 0
        %1989 = vmatpush.bf16.msra.mxu0 0
        %1990 = vmatpush.bf16.msra.mxu0 0
        %1991 = vmatpush.bf16.msra.mxu0 0
        %1992 = vmatpush.bf16.msra.mxu0 0
        %1993 = vmatpush.bf16.msra.mxu0 0
        %1994 = vmatpush.bf16.msra.mxu0 0
        %1995 = vmatpush.bf16.msra.mxu0 %v1983
        %1996 = vmatmul.bf16.gmra.mxu0 %v1986
        %v1997 = vpop.f32.mrf.mxu0
        %v1998 = vadd.f32 0.0, %v1997
        %v1999 = vpop.f32.mrf.mxu0
        %v2000 = vadd.f32 0.0, %v1999
        %2001 = vdwg.mxu0
        %v2002 = vld [vmem:[%s19 + $0x10] sm:$0xff]
        %v2003 = vpack.c.bf16 %v2000, %v1998
        %v2004 = vpack.c.bf16 %v2002, %v2002
        %v2006 = vsel %vm1750, %v2003, 0
        %v2009 = vsel %vm1895, %v2004, 0
        %2011 = vmatpush.bf16.msra.mxu0 0
        %2012 = vmatpush.bf16.msra.mxu0 0
        %2013 = vmatpush.bf16.msra.mxu0 0
        %2014 = vmatpush.bf16.msra.mxu0 0
        %2015 = vmatpush.bf16.msra.mxu0 0
        %2016 = vmatpush.bf16.msra.mxu0 0
        %2017 = vmatpush.bf16.msra.mxu0 0
        %2018 = vmatpush.bf16.msra.mxu0 %v2009
        %2019 = vmatmul.bf16.gmra.mxu0 %v2006
        %v2020 = vpop.f32.mrf.mxu0
        %v2021 = vadd.f32 0.0, %v2020
        %v2022 = vpop.f32.mrf.mxu0
        %v2023 = vadd.f32 0.0, %v2022
        %2024 = vdwg.mxu0
        %v2025 = vadd.f32 %v1929, %v2021
        %v2026 = vadd.f32 %v1931, %v2023
        %2027 = vrot.lane.b32.xlu0 %v1746, 104
        %v2028 = vpop.permute.xlu0 %2027
        %2029 = vrot.lane.b32.xlu0 %v1746, 72
        %v2030 = vpop.permute.xlu0 %2029
        %v2032 = vsel %vm1750, %v2028, 0
        %v2035 = vsel %vm1750, %v2030, 0
        %2037 = vmatpush.bf16.xpose.msra.mxu0 0
        %2038 = vmatpush.bf16.xpose.msra.mxu0 0
        %2039 = vmatpush.bf16.xpose.msra.mxu0 0
        %2040 = vmatpush.bf16.xpose.msra.mxu0 0
        %2041 = vmatpush.bf16.xpose.msra.mxu0 0
        %2042 = vmatpush.bf16.xpose.msra.mxu0 0
        %2043 = vmatpush.bf16.xpose.msra.mxu0 0
        %2044 = vmatpush.bf16.xpose.msra.mxu0 %v2035
        %2045 = vmatmul.bf16.gmra.mxu0 %v2032
        %v2046 = vpop.f32.mrf.mxu0
        %v2047 = vadd.f32 0.0, %v2046
        %v2048 = vpop.f32.mrf.mxu0
        %v2049 = vadd.f32 0.0, %v2048
        %2050 = vdwg.mxu0
        %v2051 = vmul.f32 %v2047, 0.35355338
        %v2052 = vmul.f32 %v2049, 0.35355338
        %v2053 = vsel %vm1773, %v2051, -inf
        %2054 = vmax.xlane.f32.xlu0 %v2053
        %v2055 = vpop.xlane.xlu0 %2054
        %v2056 = vsel %vm1773, %v2052, -inf
        %2057 = vmax.xlane.f32.xlu0 %v2056
        %v2058 = vpop.xlane.xlu0 %2057
        %v2059 = vsub.f32 %v2051, %v2055
        %v2060 = vsub.f32 %v2052, %v2058
        %v2061 = vmul.f32 %v2059, 1.442695
        %v2062 = vpow.pop %v2061
        %v2063 = vmul.f32 %v2060, 1.442695
        %v2064 = vpow.pop %v2063
        %v2065 = vsel %vm1773, %v2062, 0.0
        %2066 = vadd.xlane.f32.xlu0 %v2065
        %v2067 = vpop.xlane.xlu0 %2066
        %v2068 = vsel %vm1773, %v2064, 0.0
        %2069 = vadd.xlane.f32.xlu0 %v2068
        %v2070 = vpop.xlane.xlu0 %2069
        %v2071 = vrcp.pop %v2067
        %v2072 = vrcp.pop %v2070
        %v2073 = vmul.f32 %v2062, %v2071
        %v2074 = vmul.f32 %v2064, %v2072
        %v2075 = vpack.c.bf16 %v2074, %v2073
        %2076 = vrot.lane.b32.xlu0 %v1746, 40
        %v2077 = vpop.permute.xlu0 %2076
        %v2080 = vsel %vm1773, %v2075, 0
        %2082 = vmatpush.bf16.msra.mxu0 0
        %2083 = vmatpush.bf16.msra.mxu0 0
        %2084 = vmatpush.bf16.msra.mxu0 0
        %2085 = vmatpush.bf16.msra.mxu0 0
        %2086 = vmatpush.bf16.msra.mxu0 0
        %2087 = vmatpush.bf16.msra.mxu0 0
        %2088 = vmatpush.bf16.msra.mxu0 0
        %2089 = vmatpush.bf16.msra.mxu0 %v2077
        %2090 = vmatmul.bf16.gmra.mxu0 %v2080
        %v2091 = vpop.f32.mrf.mxu0
        %v2092 = vadd.f32 0.0, %v2091
        %v2093 = vpop.f32.mrf.mxu0
        %v2094 = vadd.f32 0.0, %v2093
        %2095 = vdwg.mxu0
        %v2096 = vld [vmem:[%s19 + $0x18] sm:$0xff]
        %v2097 = vpack.c.bf16 %v2094, %v2092
        %v2098 = vpack.c.bf16 %v2096, %v2096
        %v2100 = vsel %vm1750, %v2097, 0
        %v2103 = vsel %vm1895, %v2098, 0
        %2105 = vmatpush.bf16.msra.mxu0 0
        %2106 = vmatpush.bf16.msra.mxu0 0
        %2107 = vmatpush.bf16.msra.mxu0 0
        %2108 = vmatpush.bf16.msra.mxu0 0
        %2109 = vmatpush.bf16.msra.mxu0 0
        %2110 = vmatpush.bf16.msra.mxu0 0
        %2111 = vmatpush.bf16.msra.mxu0 0
        %2112 = vmatpush.bf16.msra.mxu0 %v2103
        %2113 = vmatmul.bf16.gmra.mxu0 %v2100
        %v2114 = vpop.f32.mrf.mxu0
        %v2115 = vadd.f32 0.0, %v2114
        %v2116 = vpop.f32.mrf.mxu0
        %v2117 = vadd.f32 0.0, %v2116
        %2118 = vdwg.mxu0
        %v2119 = vadd.f32 %v2025, %v2115
        %v2120 = vadd.f32 %v2026, %v2117
        %v2121 = vld [vmem:[%s21] sm:$0x1]
        %v2123 = vperm.slane %v2121, 0
        %v2125 = vadd.f32 %v2119, %v2123
        %v2126 = vadd.f32 %v2120, %v2123
        %v2127 = vadd.f32 %v1652, %v2125
        %v2128 = vadd.f32 %v1653, %v2126
        %v2129 = vsel %vm1654, %v2127, 0.0
        %2130 = vadd.xlane.f32.xlu0 %v2129
        %v2131 = vpop.xlane.xlu0 %2130
        %v2132 = vsel %vm1654, %v2128, 0.0
        %2133 = vadd.xlane.f32.xlu0 %v2132
        %v2134 = vpop.xlane.xlu0 %2133
        %v2135 = vmul.f32 %v2131, %v1667
        %v2136 = vmul.f32 %v2134, %v1667
        %v2137 = vsub.f32 %v2127, %v2135
        %v2138 = vsub.f32 %v2128, %v2136
        %v2139 = vmul.f32 %v2137, %v2137
        %v2140 = vmul.f32 %v2138, %v2138
        %v2141 = vsel %vm1654, %v2139, 0.0
        %2142 = vadd.xlane.f32.xlu0 %v2141
        %v2143 = vpop.xlane.xlu0 %2142
        %v2144 = vsel %vm1654, %v2140, 0.0
        %2145 = vadd.xlane.f32.xlu0 %v2144
        %v2146 = vpop.xlane.xlu0 %2145
        %v2147 = vmul.f32 %v2143, %v1667
        %v2148 = vmul.f32 %v2146, %v1667
        %v2149 = vadd.f32 %v2147, 1e-05
        %v2150 = vadd.f32 %v2148, 1e-05
        %v2151 = vrsqrt.pop %v2149
        %v2152 = vmul.f32 %v2151, %v2149
        %v2153 = vmul.f32 %v2152, %v2151
        %v2154 = vmul.f32 0.5, %v2153
        %v2155 = vsub.f32 1.5, %v2154
        %v2156 = vmul.f32 %v2151, %v2155
        %vm2157 = vweird.f32 %v2149
        %vm2158 = vweird.f32 %v2151
        %vm2159 = vmor %vm2157, %vm2158
        %v2160 = vsel %vm2159, %v2151, %v2156
        %v2161 = vrsqrt.pop %v2150
        %v2162 = vmul.f32 %v2161, %v2150
        %v2163 = vmul.f32 %v2162, %v2161
        %v2164 = vmul.f32 0.5, %v2163
        %v2165 = vsub.f32 1.5, %v2164
        %v2166 = vmul.f32 %v2161, %v2165
        %vm2167 = vweird.f32 %v2150
        %vm2168 = vweird.f32 %v2161
        %vm2169 = vmor %vm2167, %vm2168
        %v2170 = vsel %vm2169, %v2161, %v2166
        %v2171 = vmul.f32 %v2137, %v2160
        %v2172 = vmul.f32 %v2138, %v2170
        %v2173 = vld [vmem:[%s23] sm:$0x1]
        %v2175 = vperm.slane %v2173, 0
        %v2177 = vmul.f32 %v2171, %v2175
        %v2178 = vmul.f32 %v2172, %v2175
        %v2179 = vld [vmem:[%s25] sm:$0x1]
        %v2181 = vperm.slane %v2179, 0
        %v2183 = vadd.f32 %v2177, %v2181
        %v2184 = vadd.f32 %v2178, %v2181
        %v2185 = vpack.c.bf16 %v2184, %v2183
        %v2186 = vld [vmem:[%s27] sm:$0xff]
        %v2187 = vld [vmem:[%s27 + $0x8] sm:$0xff]
        %v2188 = vld [vmem:[%s27 + $0x10] sm:$0xff]
        %v2189 = vld [vmem:[%s27 + $0x18] sm:$0xff]
        %v2190 = vpack.c.bf16 %v2187, %v2186
        %v2191 = vpack.c.bf16 %v2189, %v2188
        %v2192 = vld [vmem:[%s29] sm:$0x1]
        %v2194 = vperm.slane %v2192, 0
        %v2197 = vsel %vm1654, %v2185, 0
        %2199 = vmatpush.bf16.msra.mxu0 0
        %2200 = vmatpush.bf16.msra.mxu0 0
        %2201 = vmatpush.bf16.msra.mxu0 0
        %2202 = vmatpush.bf16.msra.mxu0 0
        %2203 = vmatpush.bf16.msra.mxu0 0
        %2204 = vmatpush.bf16.msra.mxu0 0
        %2205 = vmatpush.bf16.msra.mxu0 %v2191
        %2206 = vmatpush.bf16.msra.mxu0 %v2190
        %2207 = vmatmul.bf16.gmra.mxu0 %v2197
        %v2208 = vpop.f32.mrf.mxu0
        %v2209 = vadd.f32 %v2194, %v2208
        %v2210 = vpop.f32.mrf.mxu0
        %v2211 = vadd.f32 %v2194, %v2210
        %2212 = vdwg.mxu0
        %v2213 = vmul.f32 %v2209, 0.5
        %v2214 = vmul.f32 %v2211, 0.5
        %v2215 = vmul.f32 %v2209, 0.044715
        %v2216 = vmul.f32 %v2211, 0.044715
        %v2217 = vmul.f32 %v2215, %v2209
        %v2218 = vmul.f32 %v2216, %v2211
        %v2219 = vmul.f32 %v2217, %v2209
        %v2220 = vmul.f32 %v2218, %v2211
        %v2221 = vadd.f32 %v2209, %v2219
        %v2222 = vadd.f32 %v2211, %v2220
        %v2223 = vmul.f32 %v2221, 0.7978846
        %v2224 = vmul.f32 %v2222, 0.7978846
        %v2225 = vtanh.pop %v2223
        %v2226 = vtanh.pop %v2224
        %v2227 = vadd.f32 %v2225, 1.0
        %v2228 = vadd.f32 %v2226, 1.0
        %v2229 = vmul.f32 %v2213, %v2227
        %v2230 = vmul.f32 %v2214, %v2228
        %v2231 = vpack.c.bf16 %v2230, %v2229
        %v2232 = vld [vmem:[%s31] sm:$0xff]
        %v2233 = vld [vmem:[%s31 + $0x8] sm:$0xff]
        %v2234 = vld [vmem:[%s31 + $0x10] sm:$0xff]
        %v2235 = vld [vmem:[%s31 + $0x18] sm:$0xff]
        %v2236 = vld [vmem:[%s31 + $0x20] sm:$0xff]
        %v2237 = vld [vmem:[%s31 + $0x28] sm:$0xff]
        %v2238 = vld [vmem:[%s31 + $0x30] sm:$0xff]
        %v2239 = vld [vmem:[%s31 + $0x38] sm:$0xff]
        %v2240 = vld [vmem:[%s31 + $0x40] sm:$0xff]
        %v2241 = vld [vmem:[%s31 + $0x48] sm:$0xff]
        %v2242 = vld [vmem:[%s31 + $0x50] sm:$0xff]
        %v2243 = vld [vmem:[%s31 + $0x58] sm:$0xff]
        %v2244 = vld [vmem:[%s31 + $0x60] sm:$0xff]
        %v2245 = vld [vmem:[%s31 + $0x68] sm:$0xff]
        %v2246 = vld [vmem:[%s31 + $0x70] sm:$0xff]
        %v2247 = vld [vmem:[%s31 + $0x78] sm:$0xff]
        %v2248 = vpack.c.bf16 %v2233, %v2232
        %v2249 = vpack.c.bf16 %v2235, %v2234
        %v2250 = vpack.c.bf16 %v2237, %v2236
        %v2251 = vpack.c.bf16 %v2239, %v2238
        %v2252 = vpack.c.bf16 %v2241, %v2240
        %v2253 = vpack.c.bf16 %v2243, %v2242
        %v2254 = vpack.c.bf16 %v2245, %v2244
        %v2255 = vpack.c.bf16 %v2247, %v2246
        %v2256 = vld [vmem:[%s33] sm:$0x1]
        %v2258 = vperm.slane %v2256, 0
        %2260 = vmatpush.bf16.msra.mxu0 %v2255
        %2261 = vmatpush.bf16.msra.mxu0 %v2254
        %2262 = vmatpush.bf16.msra.mxu0 %v2253
        %2263 = vmatpush.bf16.msra.mxu0 %v2252
        %2264 = vmatpush.bf16.msra.mxu0 %v2251
        %2265 = vmatpush.bf16.msra.mxu0 %v2250
        %2266 = vmatpush.bf16.msra.mxu0 %v2249
        %2267 = vmatpush.bf16.msra.mxu0 %v2248
        %2268 = vmatmul.bf16.gmra.mxu0 %v2231
        %v2269 = vpop.f32.mrf.mxu0
        %v2270 = vadd.f32 %v2258, %v2269
        %v2271 = vpop.f32.mrf.mxu0
        %v2272 = vadd.f32 %v2258, %v2271
        %2273 = vdwg.mxu0
        %v2274 = vadd.f32 %v2127, %v2270
        %v2275 = vadd.f32 %v2128, %v2272
        %v2276 = vsel %vm1654, %v2274, 0.0
        %2277 = vadd.xlane.f32.xlu0 %v2276
        %v2278 = vpop.xlane.xlu0 %2277
        %v2279 = vsel %vm1654, %v2275, 0.0
        %2280 = vadd.xlane.f32.xlu0 %v2279
        %v2281 = vpop.xlane.xlu0 %2280
        %v2282 = vmul.f32 %v2278, %v1667
        %v2283 = vmul.f32 %v2281, %v1667
        %v2284 = vsub.f32 %v2274, %v2282
        %v2285 = vsub.f32 %v2275, %v2283
        %v2286 = vmul.f32 %v2284, %v2284
        %v2287 = vmul.f32 %v2285, %v2285
        %v2288 = vsel %vm1654, %v2286, 0.0
        %2289 = vadd.xlane.f32.xlu0 %v2288
        %v2290 = vpop.xlane.xlu0 %2289
        %v2291 = vsel %vm1654, %v2287, 0.0
        %2292 = vadd.xlane.f32.xlu0 %v2291
        %v2293 = vpop.xlane.xlu0 %2292
        %v2294 = vmul.f32 %v2290, %v1667
        %v2295 = vmul.f32 %v2293, %v1667
        %v2296 = vadd.f32 %v2294, 1e-05
        %v2297 = vadd.f32 %v2295, 1e-05
        %v2298 = vrsqrt.pop %v2296
        %v2299 = vmul.f32 %v2298, %v2296
        %v2300 = vmul.f32 %v2299, %v2298
        %v2301 = vmul.f32 0.5, %v2300
        %v2302 = vsub.f32 1.5, %v2301
        %v2303 = vmul.f32 %v2298, %v2302
        %vm2304 = vweird.f32 %v2296
        %vm2305 = vweird.f32 %v2298
        %vm2306 = vmor %vm2304, %vm2305
        %v2307 = vsel %vm2306, %v2298, %v2303
        %v2308 = vrsqrt.pop %v2297
        %v2309 = vmul.f32 %v2308, %v2297
        %v2310 = vmul.f32 %v2309, %v2308
        %v2311 = vmul.f32 0.5, %v2310
        %v2312 = vsub.f32 1.5, %v2311
        %v2313 = vmul.f32 %v2308, %v2312
        %vm2314 = vweird.f32 %v2297
        %vm2315 = vweird.f32 %v2308
        %vm2316 = vmor %vm2314, %vm2315
        %v2317 = vsel %vm2316, %v2308, %v2313
        %v2318 = vmul.f32 %v2284, %v2307
        %v2319 = vmul.f32 %v2285, %v2317
        %v2320 = vld [vmem:[%s35] sm:$0x1]
        %v2322 = vperm.slane %v2320, 0
        %v2324 = vmul.f32 %v2318, %v2322
        %v2325 = vmul.f32 %v2319, %v2322
        %v2326 = vld [vmem:[%s37] sm:$0x1]
        %v2328 = vperm.slane %v2326, 0
        %v2330 = vadd.f32 %v2324, %v2328
        %v2331 = vadd.f32 %v2325, %v2328
        %v2332 = vpack.c.bf16 %v2331, %v2330
        %v2333 = vld [vmem:[%s39] sm:$0xff]
        %v2334 = vld [vmem:[%s39 + $0x8] sm:$0xff]
        %v2335 = vld [vmem:[%s39 + $0x10] sm:$0xff]
        %v2336 = vld [vmem:[%s39 + $0x18] sm:$0xff]
        %v2337 = vpack.c.bf16 %v2334, %v2333
        %v2338 = vpack.c.bf16 %v2336, %v2335
        %v2339 = vld [vmem:[%s41] sm:$0x1]
        %v2341 = vperm.slane %v2339, 0
        %v2344 = vsel %vm1654, %v2332, 0
        %2346 = vmatpush.bf16.msra.mxu0 0
        %2347 = vmatpush.bf16.msra.mxu0 0
        %2348 = vmatpush.bf16.msra.mxu0 0
        %2349 = vmatpush.bf16.msra.mxu0 0
        %2350 = vmatpush.bf16.msra.mxu0 0
        %2351 = vmatpush.bf16.msra.mxu0 0
        %2352 = vmatpush.bf16.msra.mxu0 %v2338
        %2353 = vmatpush.bf16.msra.mxu0 %v2337
        %2354 = vmatmul.bf16.gmra.mxu0 %v2344
        %v2355 = vpop.f32.mrf.mxu0
        %v2356 = vadd.f32 %v2341, %v2355
        %v2357 = vpop.f32.mrf.mxu0
        %v2358 = vadd.f32 %v2341, %v2357
        %2359 = vdwg.mxu0
        %v2360 = vpack.c.bf16 %v2358, %v2356
        %2362 = vrot.lane.b32.xlu0 %v2360, 96
        %v2363 = vpop.permute.xlu0 %2362
        %v2365 = vsel %vm1750, %v2360, 0
        %v2368 = vsel %vm1750, %v2363, 0
        %2370 = vmatpush.bf16.xpose.msra.mxu0 0
        %2371 = vmatpush.bf16.xpose.msra.mxu0 0
        %2372 = vmatpush.bf16.xpose.msra.mxu0 0
        %2373 = vmatpush.bf16.xpose.msra.mxu0 0
        %2374 = vmatpush.bf16.xpose.msra.mxu0 0
        %2375 = vmatpush.bf16.xpose.msra.mxu0 0
        %2376 = vmatpush.bf16.xpose.msra.mxu0 0
        %2377 = vmatpush.bf16.xpose.msra.mxu0 %v2368
        %2378 = vmatmul.bf16.gmra.mxu0 %v2365
        %v2379 = vpop.f32.mrf.mxu0
        %v2380 = vadd.f32 0.0, %v2379
        %v2381 = vpop.f32.mrf.mxu0
        %v2382 = vadd.f32 0.0, %v2381
        %2383 = vdwg.mxu0
        %v2384 = vmul.f32 %v2380, 0.35355338
        %v2385 = vmul.f32 %v2382, 0.35355338
        %v2386 = vsel %vm1773, %v2384, -inf
        %2387 = vmax.xlane.f32.xlu0 %v2386
        %v2388 = vpop.xlane.xlu0 %2387
        %v2389 = vsel %vm1773, %v2385, -inf
        %2390 = vmax.xlane.f32.xlu0 %v2389
        %v2391 = vpop.xlane.xlu0 %2390
        %v2392 = vsub.f32 %v2384, %v2388
        %v2393 = vsub.f32 %v2385, %v2391
        %v2394 = vmul.f32 %v2392, 1.442695
        %v2395 = vpow.pop %v2394
        %v2396 = vmul.f32 %v2393, 1.442695
        %v2397 = vpow.pop %v2396
        %v2398 = vsel %vm1773, %v2395, 0.0
        %2399 = vadd.xlane.f32.xlu0 %v2398
        %v2400 = vpop.xlane.xlu0 %2399
        %v2401 = vsel %vm1773, %v2397, 0.0
        %2402 = vadd.xlane.f32.xlu0 %v2401
        %v2403 = vpop.xlane.xlu0 %2402
        %v2404 = vrcp.pop %v2400
        %v2405 = vrcp.pop %v2403
        %v2406 = vmul.f32 %v2395, %v2404
        %v2407 = vmul.f32 %v2397, %v2405
        %v2408 = vpack.c.bf16 %v2407, %v2406
        %2409 = vrot.lane.b32.xlu0 %v2360, 64
        %v2410 = vpop.permute.xlu0 %2409
        %v2413 = vsel %vm1773, %v2408, 0
        %2415 = vmatpush.bf16.msra.mxu0 0
        %2416 = vmatpush.bf16.msra.mxu0 0
        %2417 = vmatpush.bf16.msra.mxu0 0
        %2418 = vmatpush.bf16.msra.mxu0 0
        %2419 = vmatpush.bf16.msra.mxu0 0
        %2420 = vmatpush.bf16.msra.mxu0 0
        %2421 = vmatpush.bf16.msra.mxu0 0
        %2422 = vmatpush.bf16.msra.mxu0 %v2410
        %2423 = vmatmul.bf16.gmra.mxu0 %v2413
        %v2424 = vpop.f32.mrf.mxu0
        %v2425 = vadd.f32 0.0, %v2424
        %v2426 = vpop.f32.mrf.mxu0
        %v2427 = vadd.f32 0.0, %v2426
        %2428 = vdwg.mxu0
        %v2429 = vld [vmem:[%s43] sm:$0xff]
        %v2430 = vpack.c.bf16 %v2427, %v2425
        %v2431 = vpack.c.bf16 %v2429, %v2429
        %2432 = vrot.lane.b32.xlu0 %v2360, 120
        %v2433 = vpop.permute.xlu0 %2432
        %2434 = vrot.lane.b32.xlu0 %v2360, 88
        %v2435 = vpop.permute.xlu0 %2434
        %v2437 = vsel %vm1750, %v2433, 0
        %v2440 = vsel %vm1750, %v2435, 0
        %2442 = vmatpush.bf16.xpose.msra.mxu0 0
        %2443 = vmatpush.bf16.xpose.msra.mxu0 0
        %2444 = vmatpush.bf16.xpose.msra.mxu0 0
        %2445 = vmatpush.bf16.xpose.msra.mxu0 0
        %2446 = vmatpush.bf16.xpose.msra.mxu0 0
        %2447 = vmatpush.bf16.xpose.msra.mxu0 0
        %2448 = vmatpush.bf16.xpose.msra.mxu0 0
        %2449 = vmatpush.bf16.xpose.msra.mxu0 %v2440
        %2450 = vmatmul.bf16.gmra.mxu0 %v2437
        %v2451 = vpop.f32.mrf.mxu0
        %v2452 = vadd.f32 0.0, %v2451
        %v2453 = vpop.f32.mrf.mxu0
        %v2454 = vadd.f32 0.0, %v2453
        %2455 = vdwg.mxu0
        %v2456 = vmul.f32 %v2452, 0.35355338
        %v2457 = vmul.f32 %v2454, 0.35355338
        %v2458 = vsel %vm1773, %v2456, -inf
        %2459 = vmax.xlane.f32.xlu0 %v2458
        %v2460 = vpop.xlane.xlu0 %2459
        %v2461 = vsel %vm1773, %v2457, -inf
        %2462 = vmax.xlane.f32.xlu0 %v2461
        %v2463 = vpop.xlane.xlu0 %2462
        %v2464 = vsub.f32 %v2456, %v2460
        %v2465 = vsub.f32 %v2457, %v2463
        %v2466 = vmul.f32 %v2464, 1.442695
        %v2467 = vpow.pop %v2466
        %v2468 = vmul.f32 %v2465, 1.442695
        %v2469 = vpow.pop %v2468
        %v2470 = vsel %vm1773, %v2467, 0.0
        %2471 = vadd.xlane.f32.xlu0 %v2470
        %v2472 = vpop.xlane.xlu0 %2471
        %v2473 = vsel %vm1773, %v2469, 0.0
        %2474 = vadd.xlane.f32.xlu0 %v2473
        %v2475 = vpop.xlane.xlu0 %2474
        %v2476 = vrcp.pop %v2472
        %v2477 = vrcp.pop %v2475
        %v2478 = vmul.f32 %v2467, %v2476
        %v2479 = vmul.f32 %v2469, %v2477
        %v2480 = vpack.c.bf16 %v2479, %v2478
        %2481 = vrot.lane.b32.xlu0 %v2360, 56
        %v2482 = vpop.permute.xlu0 %2481
        %v2485 = vsel %vm1773, %v2480, 0
        %2487 = vmatpush.bf16.msra.mxu0 0
        %2488 = vmatpush.bf16.msra.mxu0 0
        %2489 = vmatpush.bf16.msra.mxu0 0
        %2490 = vmatpush.bf16.msra.mxu0 0
        %2491 = vmatpush.bf16.msra.mxu0 0
        %2492 = vmatpush.bf16.msra.mxu0 0
        %2493 = vmatpush.bf16.msra.mxu0 0
        %2494 = vmatpush.bf16.msra.mxu0 %v2482
        %2495 = vmatmul.bf16.gmra.mxu0 %v2485
        %v2496 = vpop.f32.mrf.mxu0
        %v2497 = vadd.f32 0.0, %v2496
        %v2498 = vpop.f32.mrf.mxu0
        %v2499 = vadd.f32 0.0, %v2498
        %2500 = vdwg.mxu0
        %v2501 = vld [vmem:[%s43 + $0x8] sm:$0xff]
        %v2502 = vpack.c.bf16 %v2499, %v2497
        %v2503 = vpack.c.bf16 %v2501, %v2501
        %v2505 = vsel %vm1750, %v2502, 0
        %v2508 = vsel %vm1895, %v2503, 0
        %2510 = vmatpush.bf16.msra.mxu0 0
        %2511 = vmatpush.bf16.msra.mxu0 0
        %2512 = vmatpush.bf16.msra.mxu0 0
        %2513 = vmatpush.bf16.msra.mxu0 0
        %2514 = vmatpush.bf16.msra.mxu0 0
        %2515 = vmatpush.bf16.msra.mxu0 0
        %2516 = vmatpush.bf16.msra.mxu0 0
        %2517 = vmatpush.bf16.msra.mxu0 %v2508
        %2518 = vmatmul.bf16.gmra.mxu0 %v2505
        %v2519 = vpop.f32.mrf.mxu0
        %v2520 = vadd.f32 0.0, %v2519
        %v2521 = vpop.f32.mrf.mxu0
        %v2522 = vadd.f32 0.0, %v2521
        %2523 = vdwg.mxu0
        %v2525 = vsel %vm1750, %v2430, 0
        %v2528 = vsel %vm1895, %v2431, 0
        %2530 = vmatpush.bf16.msra.mxu0 0
        %2531 = vmatpush.bf16.msra.mxu0 0
        %2532 = vmatpush.bf16.msra.mxu0 0
        %2533 = vmatpush.bf16.msra.mxu0 0
        %2534 = vmatpush.bf16.msra.mxu0 0
        %2535 = vmatpush.bf16.msra.mxu0 0
        %2536 = vmatpush.bf16.msra.mxu0 0
        %2537 = vmatpush.bf16.msra.mxu0 %v2528
        %2538 = vmatmul.bf16.gmra.mxu0 %v2525
        %v2539 = vpop.f32.mrf.mxu0
        %v2540 = vadd.f32 %v2520, %v2539
        %v2541 = vpop.f32.mrf.mxu0
        %v2542 = vadd.f32 %v2522, %v2541
        %2543 = vdwg.mxu0
        %2544 = vrot.lane.b32.xlu0 %v2360, 112
        %v2545 = vpop.permute.xlu0 %2544
        %2546 = vrot.lane.b32.xlu0 %v2360, 80
        %v2547 = vpop.permute.xlu0 %2546
        %v2549 = vsel %vm1750, %v2545, 0
        %v2552 = vsel %vm1750, %v2547, 0
        %2554 = vmatpush.bf16.xpose.msra.mxu0 0
        %2555 = vmatpush.bf16.xpose.msra.mxu0 0
        %2556 = vmatpush.bf16.xpose.msra.mxu0 0
        %2557 = vmatpush.bf16.xpose.msra.mxu0 0
        %2558 = vmatpush.bf16.xpose.msra.mxu0 0
        %2559 = vmatpush.bf16.xpose.msra.mxu0 0
        %2560 = vmatpush.bf16.xpose.msra.mxu0 0
        %2561 = vmatpush.bf16.xpose.msra.mxu0 %v2552
        %2562 = vmatmul.bf16.gmra.mxu0 %v2549
        %v2563 = vpop.f32.mrf.mxu0
        %v2564 = vadd.f32 0.0, %v2563
        %v2565 = vpop.f32.mrf.mxu0
        %v2566 = vadd.f32 0.0, %v2565
        %2567 = vdwg.mxu0
        %v2568 = vmul.f32 %v2564, 0.35355338
        %v2569 = vmul.f32 %v2566, 0.35355338
        %v2570 = vsel %vm1773, %v2568, -inf
        %2571 = vmax.xlane.f32.xlu0 %v2570
        %v2572 = vpop.xlane.xlu0 %2571
        %v2573 = vsel %vm1773, %v2569, -inf
        %2574 = vmax.xlane.f32.xlu0 %v2573
        %v2575 = vpop.xlane.xlu0 %2574
        %v2576 = vsub.f32 %v2568, %v2572
        %v2577 = vsub.f32 %v2569, %v2575
        %v2578 = vmul.f32 %v2576, 1.442695
        %v2579 = vpow.pop %v2578
        %v2580 = vmul.f32 %v2577, 1.442695
        %v2581 = vpow.pop %v2580
        %v2582 = vsel %vm1773, %v2579, 0.0
        %2583 = vadd.xlane.f32.xlu0 %v2582
        %v2584 = vpop.xlane.xlu0 %2583
        %v2585 = vsel %vm1773, %v2581, 0.0
        %2586 = vadd.xlane.f32.xlu0 %v2585
        %v2587 = vpop.xlane.xlu0 %2586
        %v2588 = vrcp.pop %v2584
        %v2589 = vrcp.pop %v2587
        %v2590 = vmul.f32 %v2579, %v2588
        %v2591 = vmul.f32 %v2581, %v2589
        %v2592 = vpack.c.bf16 %v2591, %v2590
        %2593 = vrot.lane.b32.xlu0 %v2360, 48
        %v2594 = vpop.permute.xlu0 %2593
        %v2597 = vsel %vm1773, %v2592, 0
        %2599 = vmatpush.bf16.msra.mxu0 0
        %2600 = vmatpush.bf16.msra.mxu0 0
        %2601 = vmatpush.bf16.msra.mxu0 0
        %2602 = vmatpush.bf16.msra.mxu0 0
        %2603 = vmatpush.bf16.msra.mxu0 0
        %2604 = vmatpush.bf16.msra.mxu0 0
        %2605 = vmatpush.bf16.msra.mxu0 0
        %2606 = vmatpush.bf16.msra.mxu0 %v2594
        %2607 = vmatmul.bf16.gmra.mxu0 %v2597
        %v2608 = vpop.f32.mrf.mxu0
        %v2609 = vadd.f32 0.0, %v2608
        %v2610 = vpop.f32.mrf.mxu0
        %v2611 = vadd.f32 0.0, %v2610
        %2612 = vdwg.mxu0
        %v2613 = vld [vmem:[%s43 + $0x10] sm:$0xff]
        %v2614 = vpack.c.bf16 %v2611, %v2609
        %v2615 = vpack.c.bf16 %v2613, %v2613
        %v2617 = vsel %vm1750, %v2614, 0
        %v2620 = vsel %vm1895, %v2615, 0
        %2622 = vmatpush.bf16.msra.mxu0 0
        %2623 = vmatpush.bf16.msra.mxu0 0
        %2624 = vmatpush.bf16.msra.mxu0 0
        %2625 = vmatpush.bf16.msra.mxu0 0
        %2626 = vmatpush.bf16.msra.mxu0 0
        %2627 = vmatpush.bf16.msra.mxu0 0
        %2628 = vmatpush.bf16.msra.mxu0 0
        %2629 = vmatpush.bf16.msra.mxu0 %v2620
        %2630 = vmatmul.bf16.gmra.mxu0 %v2617
        %v2631 = vpop.f32.mrf.mxu0
        %v2632 = vadd.f32 0.0, %v2631
        %v2633 = vpop.f32.mrf.mxu0
        %v2634 = vadd.f32 0.0, %v2633
        %2635 = vdwg.mxu0
        %v2636 = vadd.f32 %v2540, %v2632
        %v2637 = vadd.f32 %v2542, %v2634
        %2638 = vrot.lane.b32.xlu0 %v2360, 104
        %v2639 = vpop.permute.xlu0 %2638
        %2640 = vrot.lane.b32.xlu0 %v2360, 72
        %v2641 = vpop.permute.xlu0 %2640
        %v2643 = vsel %vm1750, %v2639, 0
        %v2646 = vsel %vm1750, %v2641, 0
        %2648 = vmatpush.bf16.xpose.msra.mxu0 0
        %2649 = vmatpush.bf16.xpose.msra.mxu0 0
        %2650 = vmatpush.bf16.xpose.msra.mxu0 0
        %2651 = vmatpush.bf16.xpose.msra.mxu0 0
        %2652 = vmatpush.bf16.xpose.msra.mxu0 0
        %2653 = vmatpush.bf16.xpose.msra.mxu0 0
        %2654 = vmatpush.bf16.xpose.msra.mxu0 0
        %2655 = vmatpush.bf16.xpose.msra.mxu0 %v2646
        %2656 = vmatmul.bf16.gmra.mxu0 %v2643
        %v2657 = vpop.f32.mrf.mxu0
        %v2658 = vadd.f32 0.0, %v2657
        %v2659 = vpop.f32.mrf.mxu0
        %v2660 = vadd.f32 0.0, %v2659
        %2661 = vdwg.mxu0
        %v2662 = vmul.f32 %v2658, 0.35355338
        %v2663 = vmul.f32 %v2660, 0.35355338
        %v2664 = vsel %vm1773, %v2662, -inf
        %2665 = vmax.xlane.f32.xlu0 %v2664
        %v2666 = vpop.xlane.xlu0 %2665
        %v2667 = vsel %vm1773, %v2663, -inf
        %2668 = vmax.xlane.f32.xlu0 %v2667
        %v2669 = vpop.xlane.xlu0 %2668
        %v2670 = vsub.f32 %v2662, %v2666
        %v2671 = vsub.f32 %v2663, %v2669
        %v2672 = vmul.f32 %v2670, 1.442695
        %v2673 = vpow.pop %v2672
        %v2674 = vmul.f32 %v2671, 1.442695
        %v2675 = vpow.pop %v2674
        %v2676 = vsel %vm1773, %v2673, 0.0
        %2677 = vadd.xlane.f32.xlu0 %v2676
        %v2678 = vpop.xlane.xlu0 %2677
        %v2679 = vsel %vm1773, %v2675, 0.0
        %2680 = vadd.xlane.f32.xlu0 %v2679
        %v2681 = vpop.xlane.xlu0 %2680
        %v2682 = vrcp.pop %v2678
        %v2683 = vrcp.pop %v2681
        %v2684 = vmul.f32 %v2673, %v2682
        %v2685 = vmul.f32 %v2675, %v2683
        %v2686 = vpack.c.bf16 %v2685, %v2684
        %2687 = vrot.lane.b32.xlu0 %v2360, 40
        %v2688 = vpop.permute.xlu0 %2687
        %v2691 = vsel %vm1773, %v2686, 0
        %2693 = vmatpush.bf16.msra.mxu0 0
        %2694 = vmatpush.bf16.msra.mxu0 0
        %2695 = vmatpush.bf16.msra.mxu0 0
        %2696 = vmatpush.bf16.msra.mxu0 0
        %2697 = vmatpush.bf16.msra.mxu0 0
        %2698 = vmatpush.bf16.msra.mxu0 0
        %2699 = vmatpush.bf16.msra.mxu0 0
        %2700 = vmatpush.bf16.msra.mxu0 %v2688
        %2701 = vmatmul.bf16.gmra.mxu0 %v2691
        %v2702 = vpop.f32.mrf.mxu0
        %v2703 = vadd.f32 0.0, %v2702
        %v2704 = vpop.f32.mrf.mxu0
        %v2705 = vadd.f32 0.0, %v2704
        %2706 = vdwg.mxu0
        %v2707 = vld [vmem:[%s43 + $0x18] sm:$0xff]
        %v2708 = vpack.c.bf16 %v2705, %v2703
        %v2709 = vpack.c.bf16 %v2707, %v2707
        %v2711 = vsel %vm1750, %v2708, 0
        %v2714 = vsel %vm1895, %v2709, 0
        %2716 = vmatpush.bf16.msra.mxu0 0
        %2717 = vmatpush.bf16.msra.mxu0 0
        %2718 = vmatpush.bf16.msra.mxu0 0
        %2719 = vmatpush.bf16.msra.mxu0 0
        %2720 = vmatpush.bf16.msra.mxu0 0
        %2721 = vmatpush.bf16.msra.mxu0 0
        %2722 = vmatpush.bf16.msra.mxu0 0
        %2723 = vmatpush.bf16.msra.mxu0 %v2714
        %2724 = vmatmul.bf16.gmra.mxu0 %v2711
        %v2725 = vpop.f32.mrf.mxu0
        %v2726 = vadd.f32 0.0, %v2725
        %v2727 = vpop.f32.mrf.mxu0
        %v2728 = vadd.f32 0.0, %v2727
        %2729 = vdwg.mxu0
        %v2730 = vadd.f32 %v2636, %v2726
        %v2731 = vadd.f32 %v2637, %v2728
        %v2732 = vld [vmem:[%s45] sm:$0x1]
        %v2734 = vperm.slane %v2732, 0
        %v2736 = vadd.f32 %v2730, %v2734
        %v2737 = vadd.f32 %v2731, %v2734
        %v2738 = vadd.f32 %v2274, %v2736
        %v2739 = vadd.f32 %v2275, %v2737
        %v2740 = vsel %vm1654, %v2738, 0.0
        %2741 = vadd.xlane.f32.xlu0 %v2740
        %v2742 = vpop.xlane.xlu0 %2741
        %v2743 = vsel %vm1654, %v2739, 0.0
        %2744 = vadd.xlane.f32.xlu0 %v2743
        %v2745 = vpop.xlane.xlu0 %2744
        %v2746 = vmul.f32 %v2742, %v1667
        %v2747 = vmul.f32 %v2745, %v1667
        %v2748 = vsub.f32 %v2738, %v2746
        %v2749 = vsub.f32 %v2739, %v2747
        %v2750 = vmul.f32 %v2748, %v2748
        %v2751 = vmul.f32 %v2749, %v2749
        %v2752 = vsel %vm1654, %v2750, 0.0
        %2753 = vadd.xlane.f32.xlu0 %v2752
        %v2754 = vpop.xlane.xlu0 %2753
        %v2755 = vsel %vm1654, %v2751, 0.0
        %2756 = vadd.xlane.f32.xlu0 %v2755
        %v2757 = vpop.xlane.xlu0 %2756
        %v2758 = vmul.f32 %v2754, %v1667
        %v2759 = vmul.f32 %v2757, %v1667
        %v2760 = vadd.f32 %v2758, 1e-05
        %v2761 = vadd.f32 %v2759, 1e-05
        %v2762 = vrsqrt.pop %v2760
        %v2763 = vmul.f32 %v2762, %v2760
        %v2764 = vmul.f32 %v2763, %v2762
        %v2765 = vmul.f32 0.5, %v2764
        %v2766 = vsub.f32 1.5, %v2765
        %v2767 = vmul.f32 %v2762, %v2766
        %vm2768 = vweird.f32 %v2760
        %vm2769 = vweird.f32 %v2762
        %vm2770 = vmor %vm2768, %vm2769
        %v2771 = vsel %vm2770, %v2762, %v2767
        %v2772 = vrsqrt.pop %v2761
        %v2773 = vmul.f32 %v2772, %v2761
        %v2774 = vmul.f32 %v2773, %v2772
        %v2775 = vmul.f32 0.5, %v2774
        %v2776 = vsub.f32 1.5, %v2775
        %v2777 = vmul.f32 %v2772, %v2776
        %vm2778 = vweird.f32 %v2761
        %vm2779 = vweird.f32 %v2772
        %vm2780 = vmor %vm2778, %vm2779
        %v2781 = vsel %vm2780, %v2772, %v2777
        %v2782 = vmul.f32 %v2748, %v2771
        %v2783 = vmul.f32 %v2749, %v2781
        %v2784 = vld [vmem:[%s47] sm:$0x1]
        %v2786 = vperm.slane %v2784, 0
        %v2788 = vmul.f32 %v2782, %v2786
        %v2789 = vmul.f32 %v2783, %v2786
        %v2790 = vld [vmem:[%s49] sm:$0x1]
        %v2792 = vperm.slane %v2790, 0
        %v2794 = vadd.f32 %v2788, %v2792
        %v2795 = vadd.f32 %v2789, %v2792
        %v2796 = vpack.c.bf16 %v2795, %v2794
        %v2797 = vld [vmem:[%s51] sm:$0xff]
        %v2798 = vld [vmem:[%s51 + $0x8] sm:$0xff]
        %v2799 = vld [vmem:[%s51 + $0x10] sm:$0xff]
        %v2800 = vld [vmem:[%s51 + $0x18] sm:$0xff]
        %v2801 = vpack.c.bf16 %v2798, %v2797
        %v2802 = vpack.c.bf16 %v2800, %v2799
        %v2803 = vld [vmem:[%s53] sm:$0x1]
        %v2805 = vperm.slane %v2803, 0
        %v2808 = vsel %vm1654, %v2796, 0
        %2810 = vmatpush.bf16.msra.mxu0 0
        %2811 = vmatpush.bf16.msra.mxu0 0
        %2812 = vmatpush.bf16.msra.mxu0 0
        %2813 = vmatpush.bf16.msra.mxu0 0
        %2814 = vmatpush.bf16.msra.mxu0 0
        %2815 = vmatpush.bf16.msra.mxu0 0
        %2816 = vmatpush.bf16.msra.mxu0 %v2802
        %2817 = vmatpush.bf16.msra.mxu0 %v2801
        %2818 = vmatmul.bf16.gmra.mxu0 %v2808
        %v2819 = vpop.f32.mrf.mxu0
        %v2820 = vadd.f32 %v2805, %v2819
        %v2821 = vpop.f32.mrf.mxu0
        %v2822 = vadd.f32 %v2805, %v2821
        %2823 = vdwg.mxu0
        %v2824 = vmul.f32 %v2820, 0.5
        %v2825 = vmul.f32 %v2822, 0.5
        %v2826 = vmul.f32 %v2820, 0.044715
        %v2827 = vmul.f32 %v2822, 0.044715
        %v2828 = vmul.f32 %v2826, %v2820
        %v2829 = vmul.f32 %v2827, %v2822
        %v2830 = vmul.f32 %v2828, %v2820
        %v2831 = vmul.f32 %v2829, %v2822
        %v2832 = vadd.f32 %v2820, %v2830
        %v2833 = vadd.f32 %v2822, %v2831
        %v2834 = vmul.f32 %v2832, 0.7978846
        %v2835 = vmul.f32 %v2833, 0.7978846
        %v2836 = vtanh.pop %v2834
        %v2837 = vtanh.pop %v2835
        %v2838 = vadd.f32 %v2836, 1.0
        %v2839 = vadd.f32 %v2837, 1.0
        %v2840 = vmul.f32 %v2824, %v2838
        %v2841 = vmul.f32 %v2825, %v2839
        %v2842 = vpack.c.bf16 %v2841, %v2840
        %v2843 = vld [vmem:[%s55] sm:$0xff]
        %v2844 = vld [vmem:[%s55 + $0x8] sm:$0xff]
        %v2845 = vld [vmem:[%s55 + $0x10] sm:$0xff]
        %v2846 = vld [vmem:[%s55 + $0x18] sm:$0xff]
        %v2847 = vld [vmem:[%s55 + $0x20] sm:$0xff]
        %v2848 = vld [vmem:[%s55 + $0x28] sm:$0xff]
        %v2849 = vld [vmem:[%s55 + $0x30] sm:$0xff]
        %v2850 = vld [vmem:[%s55 + $0x38] sm:$0xff]
        %v2851 = vld [vmem:[%s55 + $0x40] sm:$0xff]
        %v2852 = vld [vmem:[%s55 + $0x48] sm:$0xff]
        %v2853 = vld [vmem:[%s55 + $0x50] sm:$0xff]
        %v2854 = vld [vmem:[%s55 + $0x58] sm:$0xff]
        %v2855 = vld [vmem:[%s55 + $0x60] sm:$0xff]
        %v2856 = vld [vmem:[%s55 + $0x68] sm:$0xff]
        %v2857 = vld [vmem:[%s55 + $0x70] sm:$0xff]
        %v2858 = vld [vmem:[%s55 + $0x78] sm:$0xff]
        %v2859 = vpack.c.bf16 %v2844, %v2843
        %v2860 = vpack.c.bf16 %v2846, %v2845
        %v2861 = vpack.c.bf16 %v2848, %v2847
        %v2862 = vpack.c.bf16 %v2850, %v2849
        %v2863 = vpack.c.bf16 %v2852, %v2851
        %v2864 = vpack.c.bf16 %v2854, %v2853
        %v2865 = vpack.c.bf16 %v2856, %v2855
        %v2866 = vpack.c.bf16 %v2858, %v2857
        %v2867 = vld [vmem:[%s57] sm:$0x1]
        %v2869 = vperm.slane %v2867, 0
        %2871 = vmatpush.bf16.msra.mxu0 %v2866
        %2872 = vmatpush.bf16.msra.mxu0 %v2865
        %2873 = vmatpush.bf16.msra.mxu0 %v2864
        %2874 = vmatpush.bf16.msra.mxu0 %v2863
        %2875 = vmatpush.bf16.msra.mxu0 %v2862
        %2876 = vmatpush.bf16.msra.mxu0 %v2861
        %2877 = vmatpush.bf16.msra.mxu0 %v2860
        %2878 = vmatpush.bf16.msra.mxu0 %v2859
        %2879 = vmatmul.bf16.gmra.mxu0 %v2842
        %v2880 = vpop.f32.mrf.mxu0
        %v2881 = vadd.f32 %v2869, %v2880
        %v2882 = vpop.f32.mrf.mxu0
        %v2883 = vadd.f32 %v2869, %v2882
        %2884 = vdwg.mxu0
        %v2885 = vadd.f32 %v2738, %v2881
        %v2886 = vadd.f32 %v2739, %v2883
        %v2887 = vld [vmem:[%s9] sm:$0x1]
        %vm2888 = vcmask 253952
        %v2889 = vsel %vm2888, %v2887, 0.0
        %2890 = vadd.xlane.f32.xlu0 %v2889
        %v2891 = vpop.xlane.xlu0 %2890
        %v2892 = vmul.f32 %v2891, %v1667
        %v2893 = vsub.f32 %v2887, %v2892
        %v2894 = vmul.f32 %v2893, %v2893
        %v2895 = vsel %vm2888, %v2894, 0.0
        %2896 = vadd.xlane.f32.xlu0 %v2895
        %v2897 = vpop.xlane.xlu0 %2896
        %v2898 = vmul.f32 %v2897, %v1667
        %v2899 = vadd.f32 %v2898, 1e-05
        %v2900 = vrsqrt.pop %v2899
        %v2901 = vmul.f32 %v2900, %v2899
        %v2902 = vmul.f32 %v2901, %v2900
        %v2903 = vmul.f32 0.5, %v2902
        %v2904 = vsub.f32 1.5, %v2903
        %v2905 = vmul.f32 %v2900, %v2904
        %vm2906 = vweird.f32 %v2899
        %vm2907 = vweird.f32 %v2900
        %vm2908 = vmor %vm2906, %vm2907
        %v2909 = vsel %vm2908, %v2900, %v2905
        %v2910 = vmul.f32 %v2893, %v2909
        %v2911 = vld [vmem:[%s59] sm:$0x1]
        %v2912 = vmul.f32 %v2910, %v2911
        %v2913 = vld [vmem:[%s61] sm:$0x1]
        %v2914 = vadd.f32 %v2912, %v2913
        %v2915 = vsel %vm1654, %v2885, 0.0
        %2916 = vadd.xlane.f32.xlu0 %v2915
        %v2917 = vpop.xlane.xlu0 %2916
        %v2918 = vsel %vm1654, %v2886, 0.0
        %2919 = vadd.xlane.f32.xlu0 %v2918
        %v2920 = vpop.xlane.xlu0 %2919
        %v2921 = vmul.f32 %v2917, %v1667
        %v2922 = vmul.f32 %v2920, %v1667
        %v2923 = vsub.f32 %v2885, %v2921
        %v2924 = vsub.f32 %v2886, %v2922
        %v2925 = vmul.f32 %v2923, %v2923
        %v2926 = vmul.f32 %v2924, %v2924
        %v2927 = vsel %vm1654, %v2925, 0.0
        %2928 = vadd.xlane.f32.xlu0 %v2927
        %v2929 = vpop.xlane.xlu0 %2928
        %v2930 = vsel %vm1654, %v2926, 0.0
        %2931 = vadd.xlane.f32.xlu0 %v2930
        %v2932 = vpop.xlane.xlu0 %2931
        %v2933 = vmul.f32 %v2929, %v1667
        %v2934 = vmul.f32 %v2932, %v1667
        %v2935 = vadd.f32 %v2933, 1e-05
        %v2936 = vadd.f32 %v2934, 1e-05
        %v2937 = vrsqrt.pop %v2935
        %v2938 = vmul.f32 %v2937, %v2935
        %v2939 = vmul.f32 %v2938, %v2937
        %v2940 = vmul.f32 0.5, %v2939
        %v2941 = vsub.f32 1.5, %v2940
        %v2942 = vmul.f32 %v2937, %v2941
        %vm2943 = vweird.f32 %v2935
        %vm2944 = vweird.f32 %v2937
        %vm2945 = vmor %vm2943, %vm2944
        %v2946 = vsel %vm2945, %v2937, %v2942
        %v2947 = vrsqrt.pop %v2936
        %v2948 = vmul.f32 %v2947, %v2936
        %v2949 = vmul.f32 %v2948, %v2947
        %v2950 = vmul.f32 0.5, %v2949
        %v2951 = vsub.f32 1.5, %v2950
        %v2952 = vmul.f32 %v2947, %v2951
        %vm2953 = vweird.f32 %v2936
        %vm2954 = vweird.f32 %v2947
        %vm2955 = vmor %vm2953, %vm2954
        %v2956 = vsel %vm2955, %v2947, %v2952
        %v2957 = vmul.f32 %v2923, %v2946
        %v2958 = vmul.f32 %v2924, %v2956
        %v2960 = vperm.slane %v2911, 0
        %v2962 = vmul.f32 %v2957, %v2960
        %v2963 = vmul.f32 %v2958, %v2960
        %v2965 = vperm.slane %v2913, 0
        %v2967 = vadd.f32 %v2962, %v2965
        %v2968 = vadd.f32 %v2963, %v2965
        %v2969 = vpack.c.bf16 %v2914, %v2914
        %v2970 = vld [vmem:[%s63] sm:$0xff]
        %v2971 = vld [vmem:[%s63 + $0x8] sm:$0xff]
        %v2972 = vld [vmem:[%s63 + $0x10] sm:$0xff]
        %v2973 = vld [vmem:[%s63 + $0x18] sm:$0xff]
        %v2974 = vpack.c.bf16 %v2971, %v2970
        %v2975 = vpack.c.bf16 %v2973, %v2972
        %v2976 = vld [vmem:[%s65] sm:$0x1]
        %v2978 = vsel %vm1654, %v2969, 0
        %2980 = vmatpush.bf16.msra.mxu0 0
        %2981 = vmatpush.bf16.msra.mxu0 0
        %2982 = vmatpush.bf16.msra.mxu0 0
        %2983 = vmatpush.bf16.msra.mxu0 0
        %2984 = vmatpush.bf16.msra.mxu0 0
        %2985 = vmatpush.bf16.msra.mxu0 0
        %2986 = vmatpush.bf16.msra.mxu0 %v2975
        %2987 = vmatpush.bf16.msra.mxu0 %v2974
        %2988 = vmatmul.bf16.gmra.mxu0 %v2978
        %v2989 = vpop.f32.mrf.mxu0
        %v2990 = vadd.f32 %v2976, %v2989
        %v2991 = vpop.f32.mrf.mxu0
        %2992 = vdwg.mxu0
        %v2993 = vld [vmem:[%s67] sm:$0xff]
        %v2994 = vld [vmem:[%s67 + $0x8] sm:$0xff]
        %v2995 = vld [vmem:[%s67 + $0x10] sm:$0xff]
        %v2996 = vld [vmem:[%s67 + $0x18] sm:$0xff]
        %v2997 = vpack.c.bf16 %v2994, %v2993
        %v2998 = vpack.c.bf16 %v2996, %v2995
        %v2999 = vld [vmem:[%s69] sm:$0x1]
        %3000 = vmatpush.bf16.msra.mxu0 0
        %3001 = vmatpush.bf16.msra.mxu0 0
        %3002 = vmatpush.bf16.msra.mxu0 0
        %3003 = vmatpush.bf16.msra.mxu0 0
        %3004 = vmatpush.bf16.msra.mxu0 0
        %3005 = vmatpush.bf16.msra.mxu0 0
        %3006 = vmatpush.bf16.msra.mxu0 %v2998
        %3007 = vmatpush.bf16.msra.mxu0 %v2997
        %3008 = vmatmul.bf16.gmra.mxu0 %v2978
        %v3009 = vpop.f32.mrf.mxu0
        %v3010 = vadd.f32 %v2999, %v3009
        %v3011 = vpop.f32.mrf.mxu0
        %3012 = vdwg.mxu0
        %v3013 = vpack.c.bf16 %v2968, %v2967
        %v3015 = vperm.slane %v2999, 0
        %v3018 = vsel %vm1654, %v3013, 0
        %3020 = vmatpush.bf16.msra.mxu0 0
        %3021 = vmatpush.bf16.msra.mxu0 0
        %3022 = vmatpush.bf16.msra.mxu0 0
        %3023 = vmatpush.bf16.msra.mxu0 0
        %3024 = vmatpush.bf16.msra.mxu0 0
        %3025 = vmatpush.bf16.msra.mxu0 0
        %3026 = vmatpush.bf16.msra.mxu0 %v2998
        %3027 = vmatpush.bf16.msra.mxu0 %v2997
        %3028 = vmatmul.bf16.gmra.mxu0 %v3018
        %v3029 = vpop.f32.mrf.mxu0
        %v3030 = vadd.f32 %v3015, %v3029
        %v3031 = vpop.f32.mrf.mxu0
        %v3032 = vadd.f32 %v3015, %v3031
        %3033 = vdwg.mxu0
        %v3034 = vld [vmem:[%s71] sm:$0xff]
        %v3035 = vld [vmem:[%s71 + $0x8] sm:$0xff]
        %v3036 = vld [vmem:[%s71 + $0x10] sm:$0xff]
        %v3037 = vld [vmem:[%s71 + $0x18] sm:$0xff]
        %v3038 = vpack.c.bf16 %v3035, %v3034
        %v3039 = vpack.c.bf16 %v3037, %v3036
        %v3040 = vld [vmem:[%s73] sm:$0x1]
        %3041 = vmatpush.bf16.msra.mxu0 0
        %3042 = vmatpush.bf16.msra.mxu0 0
        %3043 = vmatpush.bf16.msra.mxu0 0
        %3044 = vmatpush.bf16.msra.mxu0 0
        %3045 = vmatpush.bf16.msra.mxu0 0
        %3046 = vmatpush.bf16.msra.mxu0 0
        %3047 = vmatpush.bf16.msra.mxu0 %v3039
        %3048 = vmatpush.bf16.msra.mxu0 %v3038
        %3049 = vmatmul.bf16.gmra.mxu0 %v2978
        %v3050 = vpop.f32.mrf.mxu0
        %v3051 = vadd.f32 %v3040, %v3050
        %v3052 = vpop.f32.mrf.mxu0
        %3053 = vdwg.mxu0
        %v3055 = vperm.slane %v3040, 0
        %3057 = vmatpush.bf16.msra.mxu0 0
        %3058 = vmatpush.bf16.msra.mxu0 0
        %3059 = vmatpush.bf16.msra.mxu0 0
        %3060 = vmatpush.bf16.msra.mxu0 0
        %3061 = vmatpush.bf16.msra.mxu0 0
        %3062 = vmatpush.bf16.msra.mxu0 0
        %3063 = vmatpush.bf16.msra.mxu0 %v3039
        %3064 = vmatpush.bf16.msra.mxu0 %v3038
        %3065 = vmatmul.bf16.gmra.mxu0 %v3018
        %v3066 = vpop.f32.mrf.mxu0
        %v3067 = vadd.f32 %v3055, %v3066
        %v3068 = vpop.f32.mrf.mxu0
        %v3069 = vadd.f32 %v3055, %v3068
        %3070 = vdwg.mxu0
        %v3071 = vpack.c.bf16 %v2990, %v2990
        %v3072 = vpack.c.bf16 %v3010, %v3010
        %v3073 = vunpack.c.l.bf16 %v3071
        %v3074 = vunpack.c.l.bf16 %v3072
        %v3075 = vmul.f32 %v3073, %v3074
        %vm3076 = vcmask 57344
        %v3077 = vsel %vm3076, %v3075, 0.0
        %3078 = vadd.xlane.f32.xlu0 %v3077
        %v3079 = vpop.xlane.xlu0 %3078
        %v3080 = vmul.f32 %v3079, 0.35355338
        %v3081 = vpack.c.bf16 %v3032, %v3030
        %v3083 = vsel %vm1750, %v3071, 0
        %v3086 = vsel %vm1750, %v3081, 0
        %3088 = vmatpush.bf16.xpose.msra.mxu0 0
        %3089 = vmatpush.bf16.xpose.msra.mxu0 0
        %3090 = vmatpush.bf16.xpose.msra.mxu0 0
        %3091 = vmatpush.bf16.xpose.msra.mxu0 0
        %3092 = vmatpush.bf16.xpose.msra.mxu0 0
        %3093 = vmatpush.bf16.xpose.msra.mxu0 0
        %3094 = vmatpush.bf16.xpose.msra.mxu0 0
        %3095 = vmatpush.bf16.xpose.msra.mxu0 %v3086
        %3096 = vmatmul.bf16.gmra.mxu0 %v3083
        %v3097 = vpop.f32.mrf.mxu0
        %v3098 = vadd.f32 0.0, %v3097
        %v3099 = vpop.f32.mrf.mxu0
        %3100 = vdwg.mxu0
        %v3101 = vmul.f32 %v3098, 0.35355338
        %vm3102 = vcmask 122880
        %v3103 = vsel %vm3102, %v3101, -inf
        %3104 = vmax.xlane.f32.xlu0 %v3103
        %v3105 = vpop.xlane.xlu0 %3104
        %v3106 = vmax.f32 %v3105, %v3080
        %v3107 = vsub.f32 %v3080, %v3106
        %v3108 = vmul.f32 %v3107, 1.442695
        %v3109 = vpow.pop %v3108
        %v3110 = vsub.f32 %v3101, %v3106
        %v3111 = vmul.f32 %v3110, 1.442695
        %v3112 = vpow.pop %v3111
        %v3113 = vsel %vm3102, %v3112, 0.0
        %3114 = vadd.xlane.f32.xlu0 %v3113
        %v3115 = vpop.xlane.xlu0 %3114
        %v3116 = vadd.f32 %v3109, %v3115
        %v3117 = vrcp.pop %v3116
        %v3118 = vmul.f32 %v3109, %v3051
        %v3119 = vpack.c.bf16 %v3112, %v3112
        %v3120 = vpack.c.bf16 %v3069, %v3067
        %v3122 = vsel %vm1773, %v3119, 0
        %3124 = vmatpush.bf16.msra.mxu0 0
        %3125 = vmatpush.bf16.msra.mxu0 0
        %3126 = vmatpush.bf16.msra.mxu0 0
        %3127 = vmatpush.bf16.msra.mxu0 0
        %3128 = vmatpush.bf16.msra.mxu0 0
        %3129 = vmatpush.bf16.msra.mxu0 0
        %3130 = vmatpush.bf16.msra.mxu0 0
        %3131 = vmatpush.bf16.msra.mxu0 %v3120
        %3132 = vmatmul.bf16.gmra.mxu0 %v3122
        %v3133 = vpop.f32.mrf.mxu0
        %v3134 = vadd.f32 0.0, %v3133
        %v3135 = vpop.f32.mrf.mxu0
        %3136 = vdwg.mxu0
        %v3137 = vadd.f32 %v3118, %v3134
        %v3138 = vmul.f32 %v3137, %v3117
        %v3139 = vld [vmem:[%s75] sm:$0xff]
        %v3140 = vpack.c.bf16 %v3138, %v3138
        %v3141 = vpack.c.bf16 %v3139, %v3139
        %3143 = vrot.lane.b32.xlu0 %v3075, 120
        %v3144 = vpop.permute.xlu0 %3143
        %v3146 = vsel %vm3076, %v3144, 0.0
        %3147 = vadd.xlane.f32.xlu0 %v3146
        %v3148 = vpop.xlane.xlu0 %3147
        %v3149 = vmul.f32 %v3148, 0.35355338
        %v3151 = vunpack.c.l.b16 %v3071
        %v3152 = vpack.c.b16 %v3151, %v3151
        %3153 = vrot.lane.b32.xlu0 %v3152, 120
        %v3154 = vpop.permute.xlu0 %3153
        %3156 = vrot.lane.b32.xlu0 %v3081, 120
        %v3157 = vpop.permute.xlu0 %3156
        %v3159 = vsel %vm1750, %v3154, 0
        %v3162 = vsel %vm1750, %v3157, 0
        %3164 = vmatpush.bf16.xpose.msra.mxu0 0
        %3165 = vmatpush.bf16.xpose.msra.mxu0 0
        %3166 = vmatpush.bf16.xpose.msra.mxu0 0
        %3167 = vmatpush.bf16.xpose.msra.mxu0 0
        %3168 = vmatpush.bf16.xpose.msra.mxu0 0
        %3169 = vmatpush.bf16.xpose.msra.mxu0 0
        %3170 = vmatpush.bf16.xpose.msra.mxu0 0
        %3171 = vmatpush.bf16.xpose.msra.mxu0 %v3162
        %3172 = vmatmul.bf16.gmra.mxu0 %v3159
        %v3173 = vpop.f32.mrf.mxu0
        %v3174 = vadd.f32 0.0, %v3173
        %v3175 = vpop.f32.mrf.mxu0
        %3176 = vdwg.mxu0
        %v3177 = vmul.f32 %v3174, 0.35355338
        %v3178 = vsel %vm3102, %v3177, -inf
        %3179 = vmax.xlane.f32.xlu0 %v3178
        %v3180 = vpop.xlane.xlu0 %3179
        %v3181 = vmax.f32 %v3180, %v3149
        %v3182 = vsub.f32 %v3149, %v3181
        %v3183 = vmul.f32 %v3182, 1.442695
        %v3184 = vpow.pop %v3183
        %v3185 = vsub.f32 %v3177, %v3181
        %v3186 = vmul.f32 %v3185, 1.442695
        %v3187 = vpow.pop %v3186
        %v3188 = vsel %vm3102, %v3187, 0.0
        %3189 = vadd.xlane.f32.xlu0 %v3188
        %v3190 = vpop.xlane.xlu0 %3189
        %v3191 = vadd.f32 %v3184, %v3190
        %v3192 = vrcp.pop %v3191
        %v3193 = vmul.f32 %v3184, %v3051
        %v3194 = vpack.c.bf16 %v3187, %v3187
        %3196 = vrot.lane.b32.xlu0 %v3120, 120
        %v3197 = vpop.permute.xlu0 %3196
        %v3200 = vsel %vm1773, %v3194, 0
        %3202 = vmatpush.bf16.msra.mxu0 0
        %3203 = vmatpush.bf16.msra.mxu0 0
        %3204 = vmatpush.bf16.msra.mxu0 0
        %3205 = vmatpush.bf16.msra.mxu0 0
        %3206 = vmatpush.bf16.msra.mxu0 0
        %3207 = vmatpush.bf16.msra.mxu0 0
        %3208 = vmatpush.bf16.msra.mxu0 0
        %3209 = vmatpush.bf16.msra.mxu0 %v3197
        %3210 = vmatmul.bf16.gmra.mxu0 %v3200
        %v3211 = vpop.f32.mrf.mxu0
        %v3212 = vadd.f32 0.0, %v3211
        %v3213 = vpop.f32.mrf.mxu0
        %3214 = vdwg.mxu0
        %3216 = vrot.lane.b32.xlu0 %v3212, 8
        %v3217 = vpop.permute.xlu0 %3216
        %v3219 = vadd.f32 %v3193, %v3217
        %v3220 = vmul.f32 %v3219, %v3192
        %v3221 = vld [vmem:[%s75 + $0x8] sm:$0xff]
        %v3222 = vpack.c.bf16 %v3220, %v3220
        %v3223 = vpack.c.bf16 %v3221, %v3221
        %3225 = vrot.lane.b32.xlu0 %v3222, 120
        %v3226 = vpop.permute.xlu0 %3225
        %v3228 = vsel %vm1750, %v3226, 0
        %v3231 = vsel %vm1895, %v3223, 0
        %3233 = vmatpush.bf16.msra.mxu0 0
        %3234 = vmatpush.bf16.msra.mxu0 0
        %3235 = vmatpush.bf16.msra.mxu0 0
        %3236 = vmatpush.bf16.msra.mxu0 0
        %3237 = vmatpush.bf16.msra.mxu0 0
        %3238 = vmatpush.bf16.msra.mxu0 0
        %3239 = vmatpush.bf16.msra.mxu0 0
        %3240 = vmatpush.bf16.msra.mxu0 %v3231
        %3241 = vmatmul.bf16.gmra.mxu0 %v3228
        %v3242 = vpop.f32.mrf.mxu0
        %v3243 = vadd.f32 0.0, %v3242
        %v3244 = vpop.f32.mrf.mxu0
        %3245 = vdwg.mxu0
        %v3247 = vsel %vm1750, %v3140, 0
        %v3250 = vsel %vm1895, %v3141, 0
        %3252 = vmatpush.bf16.msra.mxu0 0
        %3253 = vmatpush.bf16.msra.mxu0 0
        %3254 = vmatpush.bf16.msra.mxu0 0
        %3255 = vmatpush.bf16.msra.mxu0 0
        %3256 = vmatpush.bf16.msra.mxu0 0
        %3257 = vmatpush.bf16.msra.mxu0 0
        %3258 = vmatpush.bf16.msra.mxu0 0
        %3259 = vmatpush.bf16.msra.mxu0 %v3250
        %3260 = vmatmul.bf16.gmra.mxu0 %v3247
        %v3261 = vpop.f32.mrf.mxu0
        %v3262 = vadd.f32 %v3243, %v3261
        %v3263 = vpop.f32.mrf.mxu0
        %3264 = vdwg.mxu0
        %3265 = vrot.lane.b32.xlu0 %v3075, 112
        %v3266 = vpop.permute.xlu0 %3265
        %v3268 = vsel %vm3076, %v3266, 0.0
        %3269 = vadd.xlane.f32.xlu0 %v3268
        %v3270 = vpop.xlane.xlu0 %3269
        %v3271 = vmul.f32 %v3270, 0.35355338
        %3272 = vrot.lane.b32.xlu0 %v3152, 112
        %v3273 = vpop.permute.xlu0 %3272
        %3274 = vrot.lane.b32.xlu0 %v3081, 112
        %v3275 = vpop.permute.xlu0 %3274
        %v3277 = vsel %vm1750, %v3273, 0
        %v3280 = vsel %vm1750, %v3275, 0
        %3282 = vmatpush.bf16.xpose.msra.mxu0 0
        %3283 = vmatpush.bf16.xpose.msra.mxu0 0
        %3284 = vmatpush.bf16.xpose.msra.mxu0 0
        %3285 = vmatpush.bf16.xpose.msra.mxu0 0
        %3286 = vmatpush.bf16.xpose.msra.mxu0 0
        %3287 = vmatpush.bf16.xpose.msra.mxu0 0
        %3288 = vmatpush.bf16.xpose.msra.mxu0 0
        %3289 = vmatpush.bf16.xpose.msra.mxu0 %v3280
        %3290 = vmatmul.bf16.gmra.mxu0 %v3277
        %v3291 = vpop.f32.mrf.mxu0
        %v3292 = vadd.f32 0.0, %v3291
        %v3293 = vpop.f32.mrf.mxu0
        %3294 = vdwg.mxu0
        %v3295 = vmul.f32 %v3292, 0.35355338
        %v3296 = vsel %vm3102, %v3295, -inf
        %3297 = vmax.xlane.f32.xlu0 %v3296
        %v3298 = vpop.xlane.xlu0 %3297
        %v3299 = vmax.f32 %v3298, %v3271
        %v3300 = vsub.f32 %v3271, %v3299
        %v3301 = vmul.f32 %v3300, 1.442695
        %v3302 = vpow.pop %v3301
        %v3303 = vsub.f32 %v3295, %v3299
        %v3304 = vmul.f32 %v3303, 1.442695
        %v3305 = vpow.pop %v3304
        %v3306 = vsel %vm3102, %v3305, 0.0
        %3307 = vadd.xlane.f32.xlu0 %v3306
        %v3308 = vpop.xlane.xlu0 %3307
        %v3309 = vadd.f32 %v3302, %v3308
        %v3310 = vrcp.pop %v3309
        %v3311 = vmul.f32 %v3302, %v3051
        %v3312 = vpack.c.bf16 %v3305, %v3305
        %3313 = vrot.lane.b32.xlu0 %v3120, 112
        %v3314 = vpop.permute.xlu0 %3313
        %v3317 = vsel %vm1773, %v3312, 0
        %3319 = vmatpush.bf16.msra.mxu0 0
        %3320 = vmatpush.bf16.msra.mxu0 0
        %3321 = vmatpush.bf16.msra.mxu0 0
        %3322 = vmatpush.bf16.msra.mxu0 0
        %3323 = vmatpush.bf16.msra.mxu0 0
        %3324 = vmatpush.bf16.msra.mxu0 0
        %3325 = vmatpush.bf16.msra.mxu0 0
        %3326 = vmatpush.bf16.msra.mxu0 %v3314
        %3327 = vmatmul.bf16.gmra.mxu0 %v3317
        %v3328 = vpop.f32.mrf.mxu0
        %v3329 = vadd.f32 0.0, %v3328
        %v3330 = vpop.f32.mrf.mxu0
        %3331 = vdwg.mxu0
        %3333 = vrot.lane.b32.xlu0 %v3329, 16
        %v3334 = vpop.permute.xlu0 %3333
        %v3336 = vadd.f32 %v3311, %v3334
        %v3337 = vmul.f32 %v3336, %v3310
        %v3338 = vld [vmem:[%s75 + $0x10] sm:$0xff]
        %v3339 = vpack.c.bf16 %v3337, %v3337
        %v3340 = vpack.c.bf16 %v3338, %v3338
        %3342 = vrot.lane.b32.xlu0 %v3339, 112
        %v3343 = vpop.permute.xlu0 %3342
        %v3345 = vsel %vm1750, %v3343, 0
        %v3348 = vsel %vm1895, %v3340, 0
        %3350 = vmatpush.bf16.msra.mxu0 0
        %3351 = vmatpush.bf16.msra.mxu0 0
        %3352 = vmatpush.bf16.msra.mxu0 0
        %3353 = vmatpush.bf16.msra.mxu0 0
        %3354 = vmatpush.bf16.msra.mxu0 0
        %3355 = vmatpush.bf16.msra.mxu0 0
        %3356 = vmatpush.bf16.msra.mxu0 0
        %3357 = vmatpush.bf16.msra.mxu0 %v3348
        %3358 = vmatmul.bf16.gmra.mxu0 %v3345
        %v3359 = vpop.f32.mrf.mxu0
        %v3360 = vadd.f32 0.0, %v3359
        %v3361 = vpop.f32.mrf.mxu0
        %3362 = vdwg.mxu0
        %v3363 = vadd.f32 %v3262, %v3360
        %3364 = vrot.lane.b32.xlu0 %v3075, 104
        %v3365 = vpop.permute.xlu0 %3364
        %v3367 = vsel %vm3076, %v3365, 0.0
        %3368 = vadd.xlane.f32.xlu0 %v3367
        %v3369 = vpop.xlane.xlu0 %3368
        %v3370 = vmul.f32 %v3369, 0.35355338
        %3371 = vrot.lane.b32.xlu0 %v3152, 104
        %v3372 = vpop.permute.xlu0 %3371
        %3373 = vrot.lane.b32.xlu0 %v3081, 104
        %v3374 = vpop.permute.xlu0 %3373
        %v3376 = vsel %vm1750, %v3372, 0
        %v3379 = vsel %vm1750, %v3374, 0
        %3381 = vmatpush.bf16.xpose.msra.mxu0 0
        %3382 = vmatpush.bf16.xpose.msra.mxu0 0
        %3383 = vmatpush.bf16.xpose.msra.mxu0 0
        %3384 = vmatpush.bf16.xpose.msra.mxu0 0
        %3385 = vmatpush.bf16.xpose.msra.mxu0 0
        %3386 = vmatpush.bf16.xpose.msra.mxu0 0
        %3387 = vmatpush.bf16.xpose.msra.mxu0 0
        %3388 = vmatpush.bf16.xpose.msra.mxu0 %v3379
        %3389 = vmatmul.bf16.gmra.mxu0 %v3376
        %v3390 = vpop.f32.mrf.mxu0
        %v3391 = vadd.f32 0.0, %v3390
        %v3392 = vpop.f32.mrf.mxu0
        %3393 = vdwg.mxu0
        %v3394 = vmul.f32 %v3391, 0.35355338
        %v3395 = vsel %vm3102, %v3394, -inf
        %3396 = vmax.xlane.f32.xlu0 %v3395
        %v3397 = vpop.xlane.xlu0 %3396
        %v3398 = vmax.f32 %v3397, %v3370
        %v3399 = vsub.f32 %v3370, %v3398
        %v3400 = vmul.f32 %v3399, 1.442695
        %v3401 = vpow.pop %v3400
        %v3402 = vsub.f32 %v3394, %v3398
        %v3403 = vmul.f32 %v3402, 1.442695
        %v3404 = vpow.pop %v3403
        %v3405 = vsel %vm3102, %v3404, 0.0
        %3406 = vadd.xlane.f32.xlu0 %v3405
        %v3407 = vpop.xlane.xlu0 %3406
        %v3408 = vadd.f32 %v3401, %v3407
        %v3409 = vrcp.pop %v3408
        %v3410 = vmul.f32 %v3401, %v3051
        %v3411 = vpack.c.bf16 %v3404, %v3404
        %3412 = vrot.lane.b32.xlu0 %v3120, 104
        %v3413 = vpop.permute.xlu0 %3412
        %v3416 = vsel %vm1773, %v3411, 0
        %3418 = vmatpush.bf16.msra.mxu0 0
        %3419 = vmatpush.bf16.msra.mxu0 0
        %3420 = vmatpush.bf16.msra.mxu0 0
        %3421 = vmatpush.bf16.msra.mxu0 0
        %3422 = vmatpush.bf16.msra.mxu0 0
        %3423 = vmatpush.bf16.msra.mxu0 0
        %3424 = vmatpush.bf16.msra.mxu0 0
        %3425 = vmatpush.bf16.msra.mxu0 %v3413
        %3426 = vmatmul.bf16.gmra.mxu0 %v3416
        %v3427 = vpop.f32.mrf.mxu0
        %v3428 = vadd.f32 0.0, %v3427
        %v3429 = vpop.f32.mrf.mxu0
        %3430 = vdwg.mxu0
        %3432 = vrot.lane.b32.xlu0 %v3428, 24
        %v3433 = vpop.permute.xlu0 %3432
        %v3435 = vadd.f32 %v3410, %v3433
        %v3436 = vmul.f32 %v3435, %v3409
        %v3437 = vld [vmem:[%s75 + $0x18] sm:$0xff]
        %v3438 = vpack.c.bf16 %v3436, %v3436
        %v3439 = vpack.c.bf16 %v3437, %v3437
        %3441 = vrot.lane.b32.xlu0 %v3438, 104
        %v3442 = vpop.permute.xlu0 %3441
        %v3444 = vsel %vm1750, %v3442, 0
        %v3447 = vsel %vm1895, %v3439, 0
        %3449 = vmatpush.bf16.msra.mxu0 0
        %3450 = vmatpush.bf16.msra.mxu0 0
        %3451 = vmatpush.bf16.msra.mxu0 0
        %3452 = vmatpush.bf16.msra.mxu0 0
        %3453 = vmatpush.bf16.msra.mxu0 0
        %3454 = vmatpush.bf16.msra.mxu0 0
        %3455 = vmatpush.bf16.msra.mxu0 0
        %3456 = vmatpush.bf16.msra.mxu0 %v3447
        %3457 = vmatmul.bf16.gmra.mxu0 %v3444
        %v3458 = vpop.f32.mrf.mxu0
        %v3459 = vadd.f32 0.0, %v3458
        %v3460 = vpop.f32.mrf.mxu0
        %3461 = vdwg.mxu0
        %v3462 = vadd.f32 %v3363, %v3459
        %v3463 = vld [vmem:[#allocation2] sm:$0x1]
        %v3464 = vadd.f32 %v3462, %v3463
        %v3465 = vadd.f32 %v2887, %v3464
        %v3466 = vsel %vm2888, %v3465, 0.0
        %3467 = vadd.xlane.f32.xlu0 %v3466
        %v3468 = vpop.xlane.xlu0 %3467
        %v3469 = vmul.f32 %v3468, %v1667
        %v3470 = vsub.f32 %v3465, %v3469
        %v3471 = vmul.f32 %v3470, %v3470
        %v3472 = vsel %vm2888, %v3471, 0.0
        %3473 = vadd.xlane.f32.xlu0 %v3472
        %v3474 = vpop.xlane.xlu0 %3473
        %v3475 = vmul.f32 %v3474, %v1667
        %v3476 = vadd.f32 %v3475, 1e-05
        %v3477 = vrsqrt.pop %v3476
        %v3478 = vmul.f32 %v3477, %v3476
        %v3479 = vmul.f32 %v3478, %v3477
        %v3480 = vmul.f32 0.5, %v3479
        %v3481 = vsub.f32 1.5, %v3480
        %v3482 = vmul.f32 %v3477, %v3481
        %vm3483 = vweird.f32 %v3476
        %vm3484 = vweird.f32 %v3477
        %vm3485 = vmor %vm3483, %vm3484
        %v3486 = vsel %vm3485, %v3477, %v3482
        %v3487 = vmul.f32 %v3470, %v3486
        %v3488 = vld [vmem:[#allocation5] sm:$0x1]
        %v3489 = vmul.f32 %v3487, %v3488
        %v3490 = vld [vmem:[#allocation7] sm:$0x1]
        %v3491 = vadd.f32 %v3489, %v3490
        %v3492 = vpack.c.bf16 %v3491, %v3491
        %v3493 = vld [vmem:[%s83] sm:$0xff]
        %v3494 = vld [vmem:[%s83 + $0x8] sm:$0xff]
        %v3495 = vld [vmem:[%s83 + $0x10] sm:$0xff]
        %v3496 = vld [vmem:[%s83 + $0x18] sm:$0xff]
        %v3497 = vpack.c.bf16 %v3494, %v3493
        %v3498 = vpack.c.bf16 %v3496, %v3495
        %v3499 = vld [vmem:[#allocation8] sm:$0x1]
        %v3501 = vsel %vm1654, %v3492, 0
        %3503 = vmatpush.bf16.msra.mxu0 0
        %3504 = vmatpush.bf16.msra.mxu0 0
        %3505 = vmatpush.bf16.msra.mxu0 0
        %3506 = vmatpush.bf16.msra.mxu0 0
        %3507 = vmatpush.bf16.msra.mxu0 0
        %3508 = vmatpush.bf16.msra.mxu0 0
        %3509 = vmatpush.bf16.msra.mxu0 %v3498
        %3510 = vmatpush.bf16.msra.mxu0 %v3497
        %3511 = vmatmul.bf16.gmra.mxu0 %v3501
        %v3512 = vpop.f32.mrf.mxu0
        %v3513 = vadd.f32 %v3499, %v3512
        %v3514 = vpop.f32.mrf.mxu0
        %3515 = vdwg.mxu0
        %v3516 = vmul.f32 %v3513, 0.5
        %v3517 = vmul.f32 %v3513, 0.044715
        %v3518 = vmul.f32 %v3517, %v3513
        %v3519 = vmul.f32 %v3518, %v3513
        %v3520 = vadd.f32 %v3513, %v3519
        %v3521 = vmul.f32 %v3520, 0.7978846
        %v3522 = vtanh.pop %v3521
        %v3523 = vadd.f32 %v3522, 1.0
        %v3524 = vmul.f32 %v3516, %v3523
        %v3525 = vpack.c.bf16 %v3524, %v3524
        %v3526 = vld [vmem:[%s87] sm:$0xff]
        %v3527 = vld [vmem:[%s87 + $0x8] sm:$0xff]
        %v3528 = vld [vmem:[%s87 + $0x10] sm:$0xff]
        %v3529 = vld [vmem:[%s87 + $0x18] sm:$0xff]
        %v3530 = vld [vmem:[%s87 + $0x20] sm:$0xff]
        %v3531 = vld [vmem:[%s87 + $0x28] sm:$0xff]
        %v3532 = vld [vmem:[%s87 + $0x30] sm:$0xff]
        %v3533 = vld [vmem:[%s87 + $0x38] sm:$0xff]
        %v3534 = vld [vmem:[%s87 + $0x40] sm:$0xff]
        %v3535 = vld [vmem:[%s87 + $0x48] sm:$0xff]
        %v3536 = vld [vmem:[%s87 + $0x50] sm:$0xff]
        %v3537 = vld [vmem:[%s87 + $0x58] sm:$0xff]
        %v3538 = vld [vmem:[%s87 + $0x60] sm:$0xff]
        %v3539 = vld [vmem:[%s87 + $0x68] sm:$0xff]
        %v3540 = vld [vmem:[%s87 + $0x70] sm:$0xff]
        %v3541 = vld [vmem:[%s87 + $0x78] sm:$0xff]
        %v3542 = vpack.c.bf16 %v3527, %v3526
        %v3543 = vpack.c.bf16 %v3529, %v3528
        %v3544 = vpack.c.bf16 %v3531, %v3530
        %v3545 = vpack.c.bf16 %v3533, %v3532
        %v3546 = vpack.c.bf16 %v3535, %v3534
        %v3547 = vpack.c.bf16 %v3537, %v3536
        %v3548 = vpack.c.bf16 %v3539, %v3538
        %v3549 = vpack.c.bf16 %v3541, %v3540
        %v3550 = vld [vmem:[#allocation10] sm:$0x1]
        %3551 = vmatpush.bf16.msra.mxu0 %v3549
        %3552 = vmatpush.bf16.msra.mxu0 %v3548
        %3553 = vmatpush.bf16.msra.mxu0 %v3547
        %3554 = vmatpush.bf16.msra.mxu0 %v3546
        %3555 = vmatpush.bf16.msra.mxu0 %v3545
        %3556 = vmatpush.bf16.msra.mxu0 %v3544
        %3557 = vmatpush.bf16.msra.mxu0 %v3543
        %3558 = vmatpush.bf16.msra.mxu0 %v3542
        %3559 = vmatmul.bf16.gmra.mxu0 %v3525
        %v3560 = vpop.f32.mrf.mxu0
        %v3561 = vadd.f32 %v3550, %v3560
        %v3562 = vpop.f32.mrf.mxu0
        %3563 = vdwg.mxu0
        %v3564 = vadd.f32 %v3465, %v3561
        %v3565 = vsel %vm2888, %v3564, 0.0
        %3566 = vadd.xlane.f32.xlu0 %v3565
        %v3567 = vpop.xlane.xlu0 %3566
        %v3568 = vmul.f32 %v3567, %v1667
        %v3569 = vsub.f32 %v3564, %v3568
        %v3570 = vmul.f32 %v3569, %v3569
        %v3571 = vsel %vm2888, %v3570, 0.0
        %3572 = vadd.xlane.f32.xlu0 %v3571
        %v3573 = vpop.xlane.xlu0 %3572
        %v3574 = vmul.f32 %v3573, %v1667
        %v3575 = vadd.f32 %v3574, 1e-05
        %v3576 = vrsqrt.pop %v3575
        %v3577 = vmul.f32 %v3576, %v3575
        %v3578 = vmul.f32 %v3577, %v3576
        %v3579 = vmul.f32 0.5, %v3578
        %v3580 = vsub.f32 1.5, %v3579
        %v3581 = vmul.f32 %v3576, %v3580
        %vm3582 = vweird.f32 %v3575
        %vm3583 = vweird.f32 %v3576
        %vm3584 = vmor %vm3582, %vm3583
        %v3585 = vsel %vm3584, %v3576, %v3581
        %v3586 = vmul.f32 %v3569, %v3585
        %v3587 = vld [vmem:[#allocation11] sm:$0x1]
        %v3588 = vmul.f32 %v3586, %v3587
        %v3589 = vld [vmem:[#allocation13] sm:$0x1]
        %v3590 = vadd.f32 %v3588, %v3589
        %v3591 = vpack.c.bf16 %v3590, %v3590
        %v3592 = vld [vmem:[%s95] sm:$0xff]
        %v3593 = vld [vmem:[%s95 + $0x8] sm:$0xff]
        %v3594 = vld [vmem:[%s95 + $0x10] sm:$0xff]
        %v3595 = vld [vmem:[%s95 + $0x18] sm:$0xff]
        %v3596 = vpack.c.bf16 %v3593, %v3592
        %v3597 = vpack.c.bf16 %v3595, %v3594
        %v3598 = vld [vmem:[#allocation14] sm:$0x1]
        %v3600 = vsel %vm1654, %v3591, 0
        %3602 = vmatpush.bf16.msra.mxu0 0
        %3603 = vmatpush.bf16.msra.mxu0 0
        %3604 = vmatpush.bf16.msra.mxu0 0
        %3605 = vmatpush.bf16.msra.mxu0 0
        %3606 = vmatpush.bf16.msra.mxu0 0
        %3607 = vmatpush.bf16.msra.mxu0 0
        %3608 = vmatpush.bf16.msra.mxu0 %v3597
        %3609 = vmatpush.bf16.msra.mxu0 %v3596
        %3610 = vmatmul.bf16.gmra.mxu0 %v3600
        %v3611 = vpop.f32.mrf.mxu0
        %v3612 = vadd.f32 %v3598, %v3611
        %v3613 = vpop.f32.mrf.mxu0
        %3614 = vdwg.mxu0
        %vm3615 = vcmask 73728
        %3616 = vst.msk [vmem:[%s1603] sm:$0x1] %vm3615, %v3612
        %3617 = vst.msk [vmem:[%s1609] sm:$0x1] %vm2888, %v3564
        %s3618 = sand.u32 %s1166, 1
        %s3619 = scalar_lea.sflag [#allocation4], %s3618
        %s3620 = sand.u32 %s1166, 1
        %s3621 = scalar_lea.vmem [#allocation16], %s3620
        %s3622 = sand.u32 %s1192, 1
        %s3623 = scalar_lea.sflag [#allocation18], %s3622
        %s3624 = sand.u32 %s1192, 1
        %s3625 = scalar_lea.vmem [#allocation17], %s3624
        // Predicated region
        $region249: #{dytox_forward.1} parent=215 // pred_check
          %p3626 = pneg %p1176
        $region250: #{dytox_forward.1} parent=215 // pred_check_branch
          %3628 = sbr.rel (%p3626) target = $region252
        $region251: #{dytox_forward.1} parent=215 // pred_region
          %3630 = vsyncadd %s3619, 0
          %s3631 = scalar_lea.hbm %s99, %s124
          %s3633 = sshll.u32 %s3621, 4
          %s3634 = int_to_ptr.vmem [resolvable:$true] %s3633
          %s3635 = sshll.u32 %s3631, 4
          %s3636 = int_to_ptr.hbm [resolvable:$true] %s3635
          %3638 = dma.vmem_to_hbm [thread:$0]  %s3634, 16, %s3636, %s3619
        $region252: #{dytox_forward.1} parent=215 // pred_fallthru
          _
        // Predicated region
        $region253: #{dytox_forward.1} parent=215 // pred_check
          %p3639 = pneg %p1202
        $region254: #{dytox_forward.1} parent=215 // pred_check_branch
          %3641 = sbr.rel (%p3639) target = $region256
        $region255: #{dytox_forward.1} parent=215 // pred_region
          %3643 = vsyncadd %s3623, 0
          %s3644 = scalar_lea.hbm %s101, %s124
          %s3646 = sshll.u32 %s3625, 4
          %s3647 = int_to_ptr.vmem [resolvable:$true] %s3646
          %s3648 = sshll.u32 %s3644, 4
          %s3649 = int_to_ptr.hbm [resolvable:$true] %s3648
          %3651 = dma.vmem_to_hbm [thread:$0]  %s3647, 16, %s3649, %s3623
        $region256: #{dytox_forward.1} parent=215 // pred_fallthru
          _
      $region216: #{dytox_forward.1} parent=5 // pred_fallthru
        _
      %p3652 = scmp.le.s32.totalorder 2, %s119
      // Predicated region
      $region257: #{dytox_forward.1} parent=5 // pred_check
        %p3653 = pneg %p3652
      $region258: #{dytox_forward.1} parent=5 // pred_check_branch
        %3655 = sbr.rel (%p3653) target = $region260
      $region259: #{dytox_forward.1} parent=5 // pred_region
        %s3656 = ssub.s32 %s119, 2
        // Predicated region
        $region261: #{dytox_forward.1} parent=259 // pred_check
          %p3657 = pneg %p1182
        $region262: #{dytox_forward.1} parent=259 // pred_check_branch
          %3659 = sbr.rel (%p3657) target = $region264
        $region263: #{dytox_forward.1} parent=259 // pred_region
          %s3660 = sand.u32 %s1167, 1
          %s3661 = scalar_lea.sflag [#allocation4], %s3660
          %s3662 = sand.u32 %s1167, 1
          %s3663 = scalar_lea.vmem [#allocation16], %s3662
          %3665 = dma.done %s3661, 16
        $region264: #{dytox_forward.1} parent=259 // pred_fallthru
          _
        // Predicated region
        $region265: #{dytox_forward.1} parent=259 // pred_check
          %p3666 = pneg %p1208
        $region266: #{dytox_forward.1} parent=259 // pred_check_branch
          %3668 = sbr.rel (%p3666) target = $region268
        $region267: #{dytox_forward.1} parent=259 // pred_region
          %s3669 = sand.u32 %s1193, 1
          %s3670 = scalar_lea.sflag [#allocation18], %s3669
          %s3671 = sand.u32 %s1193, 1
          %s3672 = scalar_lea.vmem [#allocation17], %s3671
          %3674 = dma.done %s3670, 16
        $region268: #{dytox_forward.1} parent=259 // pred_fallthru
          _
      $region260: #{dytox_forward.1} parent=5 // pred_fallthru
        _
    $region6: #{dytox_forward.1} parent=1 // loop_footer
      %s123 = sadd.s32 1, %s119
    $region7: #{dytox_forward.1} parent=1 // loop_footer_branch
      %118 = sbr.rel target = $region3
    $region8: #{dytox_forward.1} parent=1 // loop_exit
      _
    %3675 = vsyncpa [#allocation3], 1
    %s3676 = scalar_lea.sflag [#allocation3], 1
    %3677 = vsyncpa %s3676, 1
    %3678 = vsyncpa [#allocation6], 1
    %3679 = vsyncpa [#allocation9], 1
    %3680 = vsyncpa [#allocation12], 1
    %3681 = vsyncpa [#allocation15], 1
    %3682 = vsyncpa [#allocation4], 1
    %s3683 = scalar_lea.sflag [#allocation4], 1
    %3684 = vsyncpa %s3683, 1
    %3685 = vsyncpa [#allocation18], 1
    %s3686 = scalar_lea.sflag [#allocation18], 1
    %3687 = vsyncpa %s3686, 1

</llo_original>
